<compile_context>
chip_gen: v7x
topology: tpu7x:2x2x1
jax: 0.10.0
libtpu: 0.0.40
codegen_flags: <defaults>
</compile_context>

<pallas_src>
import functools
import math

import jax
import jax.numpy as jnp
from jax.experimental import pallas as pl
from jax.experimental.pallas import tpu as pltpu


# ----------------------------- tiling helper -----------------------------

def _pick_tile(dim, target, align):
    """Largest tile <= target that divides dim and is a multiple of align,
    else the full dimension (full dims are always legal block extents)."""
    if dim <= target:
        return dim
    t = (target // align) * align
    while t >= align:
        if dim % t == 0:
            return t
        t -= align
    return dim


_VMEM_LIMIT = 32 * 1024 * 1024  # safe scoped-VMEM default across v5e/v6e/v7x


# ----------------------------- Pallas kernels -----------------------------

def _input_pe_kernel(src_ref, w_ref, b_ref, pe_ref, o_ref):
    # src block [1, S, 1]; w [1, D]; b [1, D]; pe [S, D] -> o [1, S, D]
    # Linear(in_features=1) is a broadcast multiply; fuse the PE add.
    o_ref[0] = src_ref[0] * w_ref[...] + b_ref[...] + pe_ref[...]


def _qkv_kernel(x_ref, w_ref, b_ref, q_ref, k_ref, v_ref, *, d_model):
    # Fused Q/K/V projection: x [tm, D] @ Wqkv [D, 3D] (bf16 in / f32 acc).
    x = x_ref[...].astype(jnp.bfloat16)
    y = jnp.dot(x, w_ref[...], preferred_element_type=jnp.float32) + b_ref[...]
    q_ref[...] = y[:, :d_model]
    k_ref[...] = y[:, d_model:2 * d_model]
    v_ref[...] = y[:, 2 * d_model:]


def _attention_kernel(q_ref, k_ref, v_ref, o_ref, *, n_head, scale):
    # Blocks are [1, S, D] per batch item; all heads handled here (no HBM
    # transposes, a single lane-dense [S, D] output store).  Softmax in f32.
    q = q_ref[0] * scale          # fold 1/sqrt(dh) into Q once ([S,D] not [S,S])
    k = k_ref[0]
    v = v_ref[0]
    d_model = q.shape[-1]
    dh = d_model // n_head
    outs = []
    for h in range(n_head):
        qh = q[:, h * dh:(h + 1) * dh]
        kh = k[:, h * dh:(h + 1) * dh]
        vh = v[:, h * dh:(h + 1) * dh]
        # q @ k^T via contraction dims (no materialized transpose).
        s = jax.lax.dot_general(qh, kh, (((1,), (1,)), ((), ())),
                                preferred_element_type=jnp.float32)
        m = jnp.max(s, axis=-1, keepdims=True)
        p = jnp.exp(s - m)
        denom = jnp.sum(p, axis=-1, keepdims=True)
        p = p * pl.reciprocal(denom, approx=True)
        outs.append(jnp.dot(p, vh, preferred_element_type=jnp.float32))
    o_ref[0] = jnp.concatenate(outs, axis=-1)


def _proj_add_ln_kernel(x_ref, res_ref, w_ref, b_ref, g_ref, beta_ref, o_ref):
    # attention-output projection + residual add + LayerNorm (eps=1e-5) fused.
    y = jnp.dot(x_ref[...].astype(jnp.bfloat16), w_ref[...],
                preferred_element_type=jnp.float32) + b_ref[...]
    y = y + res_ref[...]
    mean = jnp.mean(y, axis=-1, keepdims=True)
    var = jnp.mean((y - mean) ** 2, axis=-1, keepdims=True)
    o_ref[...] = (y - mean) * jax.lax.rsqrt(var + 1e-5) * g_ref[...] + beta_ref[...]


def _ffn_add_ln_kernel(x_ref, w1_ref, b1_ref, w2_ref, b2_ref, g_ref, beta_ref,
                       o_ref):
    # FFN1 + ReLU + FFN2 + residual add + LayerNorm fused; the [tm, F]
    # intermediate `h` never leaves VMEM.
    x = x_ref[...]
    h = jnp.dot(x.astype(jnp.bfloat16), w1_ref[...],
                preferred_element_type=jnp.float32) + b1_ref[...]
    h = jnp.maximum(h, 0.0)
    y = jnp.dot(h.astype(jnp.bfloat16), w2_ref[...],
                preferred_element_type=jnp.float32) + b2_ref[...]
    y = y + x
    mean = jnp.mean(y, axis=-1, keepdims=True)
    var = jnp.mean((y - mean) ** 2, axis=-1, keepdims=True)
    o_ref[...] = (y - mean) * jax.lax.rsqrt(var + 1e-5) * g_ref[...] + beta_ref[...]


def _layernorm_kernel(x_ref, g_ref, b_ref, o_ref):
    x = x_ref[...]
    mean = jnp.mean(x, axis=-1, keepdims=True)
    var = jnp.mean((x - mean) ** 2, axis=-1, keepdims=True)
    o_ref[...] = (x - mean) * jax.lax.rsqrt(var + 1e-5) * g_ref[...] + b_ref[...]


def _tiled_linear_kernel(x_ref, w_ref, b_ref, o_ref, acc_ref, *, activation):
    # Tiled matmul with K-accumulation in an f32 VMEM scratch.
    @pl.when(pl.program_id(2) == 0)
    def _():
        acc_ref[...] = jnp.zeros_like(acc_ref)

    acc_ref[...] += jnp.dot(x_ref[...].astype(jnp.bfloat16), w_ref[...],
                            preferred_element_type=jnp.float32)

    @pl.when(pl.program_id(2) == pl.num_programs(2) - 1)
    def _():
        y = acc_ref[...] + b_ref[...]
        if activation == "relu":
            y = jnp.maximum(y, 0.0)
        o_ref[...] = y


# ----------------------------- Pallas wrappers -----------------------------

def pallas_input_pe(src, w, b, pe):
    B, S, _ = src.shape
    D = w.shape[1]
    return pl.pallas_call(
        _input_pe_kernel,
        out_shape=jax.ShapeDtypeStruct((B, S, D), jnp.float32),
        grid=(B,),
        in_specs=[
            pl.BlockSpec((1, S, 1), lambda i: (i, 0, 0)),
            pl.BlockSpec((1, D), lambda i: (0, 0)),
            pl.BlockSpec((1, D), lambda i: (0, 0)),
            pl.BlockSpec((S, D), lambda i: (0, 0)),
        ],
        out_specs=pl.BlockSpec((1, S, D), lambda i: (i, 0, 0)),
        compiler_params=pltpu.CompilerParams(
            dimension_semantics=("parallel",),
            vmem_limit_bytes=_VMEM_LIMIT),
    )(src, w, b.reshape(1, D), pe)


def pallas_qkv_proj(x2d, w, b):
    M, D = x2d.shape
    tm = _pick_tile(M, 512, 8)
    rowspec = pl.BlockSpec((tm, D), lambda i: (i, 0))
    full2 = lambda i: (0, 0)
    out_sd = jax.ShapeDtypeStruct((M, D), jnp.float32)
    return pl.pallas_call(
        functools.partial(_qkv_kernel, d_model=D),
        out_shape=(out_sd, out_sd, out_sd),
        grid=(M // tm,),
        in_specs=[
            rowspec,
            pl.BlockSpec((D, 3 * D), full2),
            pl.BlockSpec((1, 3 * D), full2),
        ],
        out_specs=(rowspec, rowspec, rowspec),
        compiler_params=pltpu.CompilerParams(
            dimension_semantics=("parallel",),
            vmem_limit_bytes=_VMEM_LIMIT),
    )(x2d, w, b.reshape(1, 3 * D))


def pallas_attention(q, k, v, n_head, scale):
    # TODO(synk): for production seq_len (~2000) a flash-style KV-tiled variant
    # would reduce the [S, S] score footprint; full-S blocks are used here.
    B, S, D = q.shape
    spec = pl.BlockSpec((1, S, D), lambda i: (i, 0, 0))
    return pl.pallas_call(
        functools.partial(_attention_kernel, n_head=n_head, scale=scale),
        out_shape=jax.ShapeDtypeStruct((B, S, D), jnp.float32),
        grid=(B,),
        in_specs=[spec, spec, spec],
        out_specs=spec,
        compiler_params=pltpu.CompilerParams(
            dimension_semantics=("parallel",),
            vmem_limit_bytes=_VMEM_LIMIT),
    )(q, k, v)


def pallas_out_proj_add_ln(attn2d, res2d, w, b, gamma, beta):
    M, D = attn2d.shape
    tm = _pick_tile(M, 512, 8)
    rowspec = pl.BlockSpec((tm, D), lambda i: (i, 0))
    full2 = lambda i: (0, 0)
    return pl.pallas_call(
        _proj_add_ln_kernel,
        out_shape=jax.ShapeDtypeStruct((M, D), jnp.float32),
        grid=(M // tm,),
        in_specs=[
            rowspec,
            rowspec,
            pl.BlockSpec((D, D), full2),
            pl.BlockSpec((1, D), full2),
            pl.BlockSpec((1, D), full2),
            pl.BlockSpec((1, D), full2),
        ],
        out_specs=rowspec,
        compiler_params=pltpu.CompilerParams(
            dimension_semantics=("parallel",),
            vmem_limit_bytes=_VMEM_LIMIT),
    )(attn2d, res2d, w, b.reshape(1, D), gamma.reshape(1, D), beta.reshape(1, D))


def pallas_ffn_add_ln(x2d, w1, b1, w2, b2, gamma, beta):
    M, D = x2d.shape
    F = w1.shape[1]
    tm = _pick_tile(M, 512, 8)
    rowspec = pl.BlockSpec((tm, D), lambda i: (i, 0))
    full2 = lambda i: (0, 0)
    return pl.pallas_call(
        _ffn_add_ln_kernel,
        out_shape=jax.ShapeDtypeStruct((M, D), jnp.float32),
        grid=(M // tm,),
        in_specs=[
            rowspec,
            pl.BlockSpec((D, F), full2),
            pl.BlockSpec((1, F), full2),
            pl.BlockSpec((F, D), full2),
            pl.BlockSpec((1, D), full2),
            pl.BlockSpec((1, D), full2),
            pl.BlockSpec((1, D), full2),
        ],
        out_specs=rowspec,
        compiler_params=pltpu.CompilerParams(
            dimension_semantics=("parallel",),
            vmem_limit_bytes=_VMEM_LIMIT),
    )(x2d, w1, b1.reshape(1, F), w2, b2.reshape(1, D),
      gamma.reshape(1, D), beta.reshape(1, D))


def pallas_layernorm(x2d, gamma, beta):
    M, D = x2d.shape
    tm = _pick_tile(M, 512, 8)
    rowspec = pl.BlockSpec((tm, D), lambda i: (i, 0))
    full2 = lambda i: (0, 0)
    return pl.pallas_call(
        _layernorm_kernel,
        out_shape=jax.ShapeDtypeStruct((M, D), jnp.float32),
        grid=(M // tm,),
        in_specs=[rowspec, pl.BlockSpec((1, D), full2), pl.BlockSpec((1, D), full2)],
        out_specs=rowspec,
        compiler_params=pltpu.CompilerParams(
            dimension_semantics=("parallel",),
            vmem_limit_bytes=_VMEM_LIMIT),
    )(x2d, gamma.reshape(1, D), beta.reshape(1, D))


def pallas_linear(x2d, w, b, activation=None):
    # General tiled linear (used for the classification head, where the fc1
    # weight can be too large for a single VMEM block at production shapes).
    M, K = x2d.shape
    N = w.shape[1]
    tm = _pick_tile(M, 256, 8)
    tn = _pick_tile(N, 512, 128)
    tk = _pick_tile(K, 512, 128)
    grid = (M // tm, N // tn, K // tk)
    return pl.pallas_call(
        functools.partial(_tiled_linear_kernel, activation=activation),
        out_shape=jax.ShapeDtypeStruct((M, N), jnp.float32),
        grid=grid,
        in_specs=[
            pl.BlockSpec((tm, tk), lambda i, j, k: (i, k)),
            pl.BlockSpec((tk, tn), lambda i, j, k: (k, j)),
            pl.BlockSpec((1, tn), lambda i, j, k: (0, j)),
        ],
        out_specs=pl.BlockSpec((tm, tn), lambda i, j, k: (i, j)),
        scratch_shapes=[pltpu.VMEM((tm, tn), jnp.float32)],
        compiler_params=pltpu.CompilerParams(
            dimension_semantics=("parallel", "parallel", "arbitrary"),
            vmem_limit_bytes=_VMEM_LIMIT),
    )(x2d, w, b.reshape(1, N))


# ----------------------------- model glue -----------------------------

def encoder_layer(x, p, n_head):
    # TODO(synk): dropout layers are identity (inference mode); training-mode
    # dropout not implemented.
    B, S, D = x.shape
    M = B * S
    x2d = x.reshape(M, D)

    q, k, v = pallas_qkv_proj(x2d, p["wqkv"][0], p["wqkv"][1])
    attn = pallas_attention(q.reshape(B, S, D), k.reshape(B, S, D),
                            v.reshape(B, S, D), n_head,
                            scale=1.0 / math.sqrt(D // n_head))

    # out-projection + residual + LayerNorm (post-LN), fused.
    x2 = pallas_out_proj_add_ln(attn.reshape(M, D), x2d,
                                p["wo"][0], p["wo"][1], p["ln1_g"], p["ln1_b"])
    # FFN + residual + LayerNorm, fused.
    x3 = pallas_ffn_add_ln(x2, p["ffn1"][0], p["ffn1"][1],
                           p["ffn2"][0], p["ffn2"][1], p["ln2_g"], p["ln2_b"])
    return x3.reshape(B, S, D)


def transformer_forward(src, params, n_head):
    # src: [B, S, 1]
    B, S, _ = src.shape
    w_in, b_in = params["input"]
    x = pallas_input_pe(src, w_in, b_in, params["pe"][:S])   # fused proj + PE
    D = x.shape[-1]

    for lp in params["layers"]:
        x = encoder_layer(x, lp, n_head)

    # classification head: LayerNorm -> Flatten -> Linear -> ReLU -> Linear
    x2 = pallas_layernorm(x.reshape(B * S, D), params["cls_ln_g"], params["cls_ln_b"])
    flat = x2.reshape(B, S * D)
    h = pallas_linear(flat, *params["cls_fc1"], activation="relu")
    out = pallas_linear(h, *params["cls_fc2"])
    return out


# ----------------------------- params -----------------------------

def make_positional_encoding(max_len, d_model):
    pos = jnp.arange(max_len, dtype=jnp.float32)[:, None]
    div = jnp.exp(jnp.arange(0, d_model, 2, dtype=jnp.float32)
                  * (-math.log(10000.0) / d_model))
    pe = jnp.zeros((max_len, d_model), dtype=jnp.float32)
    pe = pe.at[:, 0::2].set(jnp.sin(pos * div))
    pe = pe.at[:, 1::2].set(jnp.cos(pos * div))
    return pe


def init_params(key, *, d_model, n_head, ffn_hidden, n_layers, seq_len,
                max_len, n_classes, cls_hidden):
    keys = iter(jax.random.split(key, 8 + 8 * n_layers))

    def linear(fan_in, fan_out, dtype=jnp.bfloat16):
        # matmul weights stored in bf16 (f32 accumulation in kernels);
        # biases / LN params stay f32.
        w = (jax.random.normal(next(keys), (fan_in, fan_out), jnp.float32)
             * 0.02).astype(dtype)
        b = jnp.zeros((fan_out,), jnp.float32)
        return (w, b)

    params = {
        "input": linear(1, d_model, dtype=jnp.float32),   # elementwise; keep f32
        "pe": make_positional_encoding(max_len, d_model),
        "layers": [],
        "cls_ln_g": jnp.ones((d_model,), jnp.float32),
        "cls_ln_b": jnp.zeros((d_model,), jnp.float32),
        "cls_fc1": linear(seq_len * d_model, cls_hidden),
        "cls_fc2": linear(cls_hidden, n_classes),
    }
    for _ in range(n_layers):
        params["layers"].append({
            "wqkv": linear(d_model, 3 * d_model),   # Wq|Wk|Wv fused
            "wo": linear(d_model, d_model),
            "ln1_g": jnp.ones((d_model,), jnp.float32),
            "ln1_b": jnp.zeros((d_model,), jnp.float32),
            "ffn1": linear(d_model, ffn_hidden),
            "ffn2": linear(ffn_hidden, d_model),
            "ln2_g": jnp.ones((d_model,), jnp.float32),
            "ln2_b": jnp.zeros((d_model,), jnp.float32),
        })
    return params


# ----------------------------- main -----------------------------

if __name__ == "__main__":
    # Small shapes consistent with the module's forward (scaled down).
    B, S = 2, 8
    d_model, n_head, ffn_hidden, n_layers = 32, 4, 64, 2
    max_len, n_classes, cls_hidden = 16, 2, 64

    key = jax.random.PRNGKey(0)
    pkey, xkey = jax.random.split(key)
    params = init_params(pkey, d_model=d_model, n_head=n_head,
                         ffn_hidden=ffn_hidden, n_layers=n_layers,
                         seq_len=S, max_len=max_len,
                         n_classes=n_classes, cls_hidden=cls_hidden)

    src = jax.random.normal(xkey, (B, S, 1), dtype=jnp.float32)

    fwd = jax.jit(functools.partial(transformer_forward, n_head=n_head))
    out = fwd(src, params)
    out = jax.block_until_ready(out)
    assert out.shape == (B, n_classes), out.shape
    print("KERNEL_OK")
</pallas_src>

<mosaic_0001>
module attributes {stable_mosaic.version = 11 : i64} {
  func.func @_input_pe_kernel(%arg0: i32, %arg1: memref<1x8x1xf32, #tpu.memory_space<vmem>>, %arg2: memref<1x32xf32, #tpu.memory_space<vmem>>, %arg3: memref<1x32xf32, #tpu.memory_space<vmem>>, %arg4: memref<8x32xf32, #tpu.memory_space<vmem>>, %arg5: memref<1x8x32xf32, #tpu.memory_space<vmem>>) attributes {dimension_semantics = [#tpu.dimension_semantics<parallel>], iteration_bounds = array<i64: 2>, scalar_prefetch = 0 : i64, scratch_operands = 0 : i64, tpu.core_type = #tpu.core_type<tc>, window_params = [{transform_indices = @transform_0, window_bounds = array<i64: 1, 8, 1>}, {pipeline_mode = #tpu.pipeline_mode<synchronous>, transform_indices = @transform_1, window_bounds = array<i64: 1, 32>}, {pipeline_mode = #tpu.pipeline_mode<synchronous>, transform_indices = @transform_2, window_bounds = array<i64: 1, 32>}, {pipeline_mode = #tpu.pipeline_mode<synchronous>, transform_indices = @transform_3, window_bounds = array<i64: 8, 32>}, {transform_indices = @transform_4, window_bounds = array<i64: 1, 8, 32>}]} {
    %c0 = arith.constant 0 : index
    %c0_0 = arith.constant 0 : index
    %c0_1 = arith.constant 0 : index
    %0 = vector.load %arg1[%c0, %c0_0, %c0_1] : memref<1x8x1xf32, #tpu.memory_space<vmem>>, vector<1x8x1xf32>
    %1 = vector.shape_cast %0 : vector<1x8x1xf32> to vector<8x1xf32>
    %c0_2 = arith.constant 0 : index
    %c0_3 = arith.constant 0 : index
    %2 = vector.load %arg2[%c0_2, %c0_3] : memref<1x32xf32, #tpu.memory_space<vmem>>, vector<1x32xf32>
    %3 = vector.broadcast %1 : vector<8x1xf32> to vector<8x32xf32>
    %4 = vector.broadcast %2 : vector<1x32xf32> to vector<8x32xf32>
    %5 = arith.mulf %3, %4 : vector<8x32xf32>
    %c0_4 = arith.constant 0 : index
    %c0_5 = arith.constant 0 : index
    %6 = vector.load %arg3[%c0_4, %c0_5] : memref<1x32xf32, #tpu.memory_space<vmem>>, vector<1x32xf32>
    %7 = vector.broadcast %6 : vector<1x32xf32> to vector<8x32xf32>
    %8 = arith.addf %5, %7 : vector<8x32xf32>
    %c0_6 = arith.constant 0 : index
    %c0_7 = arith.constant 0 : index
    %9 = vector.load %arg4[%c0_6, %c0_7] : memref<8x32xf32, #tpu.memory_space<vmem>>, vector<8x32xf32>
    %10 = arith.addf %8, %9 : vector<8x32xf32>
    %c0_8 = arith.constant 0 : index
    %c0_9 = arith.constant 0 : index
    %c0_10 = arith.constant 0 : index
    %11 = vector.load %arg5[%c0_8, %c0_9, %c0_10] : memref<1x8x32xf32, #tpu.memory_space<vmem>>, vector<1x8x32xf32>
    %12 = vector.shape_cast %11 : vector<1x8x32xf32> to vector<8x32xf32>
    %13 = vector.shape_cast %10 : vector<8x32xf32> to vector<1x8x32xf32>
    tpu.vector_store %arg5[%c0_8, %c0_9, %c0_10], %13 {strides = array<i32>} : memref<1x8x32xf32, #tpu.memory_space<vmem>>, vector<1x8x32xf32>,
    return
  }
  func.func @transform_0(%arg0: i32) -> (i32, i32, i32) {
    %c0_i32 = arith.constant 0 : i32
    %c0_i32_0 = arith.constant 0 : i32
    %c0_i32_1 = arith.constant 0 : i32
    return %arg0, %c0_i32, %c0_i32_0 : i32, i32, i32
  }
  func.func @transform_1(%arg0: i32) -> (i32, i32) {
    %c0_i32 = arith.constant 0 : i32
    %c0_i32_0 = arith.constant 0 : i32
    %c0_i32_1 = arith.constant 0 : i32
    return %c0_i32, %c0_i32_0 : i32, i32
  }
  func.func @transform_2(%arg0: i32) -> (i32, i32) {
    %c0_i32 = arith.constant 0 : i32
    %c0_i32_0 = arith.constant 0 : i32
    %c0_i32_1 = arith.constant 0 : i32
    return %c0_i32, %c0_i32_0 : i32, i32
  }
  func.func @transform_3(%arg0: i32) -> (i32, i32) {
    %c0_i32 = arith.constant 0 : i32
    %c0_i32_0 = arith.constant 0 : i32
    %c0_i32_1 = arith.constant 0 : i32
    return %c0_i32, %c0_i32_0 : i32, i32
  }
  func.func @transform_4(%arg0: i32) -> (i32, i32, i32) {
    %c0_i32 = arith.constant 0 : i32
    %c0_i32_0 = arith.constant 0 : i32
    %c0_i32_1 = arith.constant 0 : i32
    return %arg0, %c0_i32, %c0_i32_0 : i32, i32, i32
  }
}

module attributes {stable_mosaic.version = 11 : i64} {
  func.func @_qkv_kernel(%arg0: i32, %arg1: memref<16x32xf32, #tpu.memory_space<vmem>>, %arg2: memref<32x96xbf16, #tpu.memory_space<vmem>>, %arg3: memref<1x96xf32, #tpu.memory_space<vmem>>, %arg4: memref<16x32xf32, #tpu.memory_space<vmem>>, %arg5: memref<16x32xf32, #tpu.memory_space<vmem>>, %arg6: memref<16x32xf32, #tpu.memory_space<vmem>>) attributes {dimension_semantics = [#tpu.dimension_semantics<parallel>], iteration_bounds = array<i64: 1>, scalar_prefetch = 0 : i64, scratch_operands = 0 : i64, tpu.core_type = #tpu.core_type<tc>, window_params = [{transform_indices = @transform_0, window_bounds = array<i64: 16, 32>}, {pipeline_mode = #tpu.pipeline_mode<synchronous>, transform_indices = @transform_1, window_bounds = array<i64: 32, 96>}, {pipeline_mode = #tpu.pipeline_mode<synchronous>, transform_indices = @transform_2, window_bounds = array<i64: 1, 96>}, {transform_indices = @transform_3, window_bounds = array<i64: 16, 32>}, {transform_indices = @transform_4, window_bounds = array<i64: 16, 32>}, {transform_indices = @transform_5, window_bounds = array<i64: 16, 32>}]} {
    %c0 = arith.constant 0 : index
    %c0_0 = arith.constant 0 : index
    %0 = vector.load %arg1[%c0, %c0_0] : memref<16x32xf32, #tpu.memory_space<vmem>>, vector<16x32xf32>
    %1 = arith.truncf %0 : vector<16x32xf32> to vector<16x32xbf16>
    %c0_1 = arith.constant 0 : index
    %c0_2 = arith.constant 0 : index
    %2 = vector.load %arg2[%c0_1, %c0_2] : memref<32x96xbf16, #tpu.memory_space<vmem>>, vector<32x96xbf16>
    %cst = arith.constant dense<0.000000e+00> : vector<16x96xf32>
    %3 = tpu.matmul %1, %2, %cst {dimension_numbers = #tpu.dot_dimension_numbers<[1], [0], [0], [1], [0, 0, 1, 1], [], []>} : vector<16x32xbf16>, vector<32x96xbf16>, vector<16x96xf32> -> vector<16x96xf32>
    %c0_3 = arith.constant 0 : index
    %c0_4 = arith.constant 0 : index
    %4 = vector.load %arg3[%c0_3, %c0_4] : memref<1x96xf32, #tpu.memory_space<vmem>>, vector<1x96xf32>
    %5 = vector.broadcast %4 : vector<1x96xf32> to vector<16x96xf32>
    %6 = arith.addf %3, %5 : vector<16x96xf32>
    %7 = vector.extract_strided_slice %6 {offsets = [0, 0], sizes = [16, 32], strides = [1, 1]} : vector<16x96xf32> to vector<16x32xf32>
    %c0_5 = arith.constant 0 : index
    %c0_6 = arith.constant 0 : index
    %8 = vector.load %arg4[%c0_5, %c0_6] : memref<16x32xf32, #tpu.memory_space<vmem>>, vector<16x32xf32>
    tpu.vector_store %arg4[%c0_5, %c0_6], %7 {strides = array<i32>} : memref<16x32xf32, #tpu.memory_space<vmem>>, vector<16x32xf32>,
    %9 = vector.extract_strided_slice %6 {offsets = [0, 32], sizes = [16, 32], strides = [1, 1]} : vector<16x96xf32> to vector<16x32xf32>
    %c0_7 = arith.constant 0 : index
    %c0_8 = arith.constant 0 : index
    %10 = vector.load %arg5[%c0_7, %c0_8] : memref<16x32xf32, #tpu.memory_space<vmem>>, vector<16x32xf32>
    tpu.vector_store %arg5[%c0_7, %c0_8], %9 {strides = array<i32>} : memref<16x32xf32, #tpu.memory_space<vmem>>, vector<16x32xf32>,
    %11 = vector.extract_strided_slice %6 {offsets = [0, 64], sizes = [16, 32], strides = [1, 1]} : vector<16x96xf32> to vector<16x32xf32>
    %c0_9 = arith.constant 0 : index
    %c0_10 = arith.constant 0 : index
    %12 = vector.load %arg6[%c0_9, %c0_10] : memref<16x32xf32, #tpu.memory_space<vmem>>, vector<16x32xf32>
    tpu.vector_store %arg6[%c0_9, %c0_10], %11 {strides = array<i32>} : memref<16x32xf32, #tpu.memory_space<vmem>>, vector<16x32xf32>,
    return
  }
  func.func @transform_0(%arg0: i32) -> (i32, i32) {
    %c0_i32 = arith.constant 0 : i32
    %c0_i32_0 = arith.constant 0 : i32
    return %arg0, %c0_i32 : i32, i32
  }
  func.func @transform_1(%arg0: i32) -> (i32, i32) {
    %c0_i32 = arith.constant 0 : i32
    %c0_i32_0 = arith.constant 0 : i32
    %c0_i32_1 = arith.constant 0 : i32
    return %c0_i32, %c0_i32_0 : i32, i32
  }
  func.func @transform_2(%arg0: i32) -> (i32, i32) {
    %c0_i32 = arith.constant 0 : i32
    %c0_i32_0 = arith.constant 0 : i32
    %c0_i32_1 = arith.constant 0 : i32
    return %c0_i32, %c0_i32_0 : i32, i32
  }
  func.func @transform_3(%arg0: i32) -> (i32, i32) {
    %c0_i32 = arith.constant 0 : i32
    %c0_i32_0 = arith.constant 0 : i32
    return %arg0, %c0_i32 : i32, i32
  }
  func.func @transform_4(%arg0: i32) -> (i32, i32) {
    %c0_i32 = arith.constant 0 : i32
    %c0_i32_0 = arith.constant 0 : i32
    return %arg0, %c0_i32 : i32, i32
  }
  func.func @transform_5(%arg0: i32) -> (i32, i32) {
    %c0_i32 = arith.constant 0 : i32
    %c0_i32_0 = arith.constant 0 : i32
    return %arg0, %c0_i32 : i32, i32
  }
}

module attributes {stable_mosaic.version = 11 : i64} {
  func.func @_attention_kernel(%arg0: i32, %arg1: memref<1x8x32xf32, #tpu.memory_space<vmem>>, %arg2: memref<1x8x32xf32, #tpu.memory_space<vmem>>, %arg3: memref<1x8x32xf32, #tpu.memory_space<vmem>>, %arg4: memref<1x8x32xf32, #tpu.memory_space<vmem>>) attributes {dimension_semantics = [#tpu.dimension_semantics<parallel>], iteration_bounds = array<i64: 2>, scalar_prefetch = 0 : i64, scratch_operands = 0 : i64, tpu.core_type = #tpu.core_type<tc>, window_params = [{transform_indices = @transform_0, window_bounds = array<i64: 1, 8, 32>}, {transform_indices = @transform_1, window_bounds = array<i64: 1, 8, 32>}, {transform_indices = @transform_2, window_bounds = array<i64: 1, 8, 32>}, {transform_indices = @transform_3, window_bounds = array<i64: 1, 8, 32>}]} {
    %c0 = arith.constant 0 : index
    %c0_0 = arith.constant 0 : index
    %c0_1 = arith.constant 0 : index
    %0 = vector.load %arg1[%c0, %c0_0, %c0_1] : memref<1x8x32xf32, #tpu.memory_space<vmem>>, vector<1x8x32xf32>
    %1 = vector.shape_cast %0 : vector<1x8x32xf32> to vector<8x32xf32>
    %cst = arith.constant 0.353553385 : f32
    %2 = vector.broadcast %cst : f32 to vector<8x32xf32>
    %3 = arith.mulf %1, %2 : vector<8x32xf32>
    %c0_2 = arith.constant 0 : index
    %c0_3 = arith.constant 0 : index
    %c0_4 = arith.constant 0 : index
    %4 = vector.load %arg2[%c0_2, %c0_3, %c0_4] : memref<1x8x32xf32, #tpu.memory_space<vmem>>, vector<1x8x32xf32>
    %5 = vector.shape_cast %4 : vector<1x8x32xf32> to vector<8x32xf32>
    %c0_5 = arith.constant 0 : index
    %c0_6 = arith.constant 0 : index
    %c0_7 = arith.constant 0 : index
    %6 = vector.load %arg3[%c0_5, %c0_6, %c0_7] : memref<1x8x32xf32, #tpu.memory_space<vmem>>, vector<1x8x32xf32>
    %7 = vector.shape_cast %6 : vector<1x8x32xf32> to vector<8x32xf32>
    %8 = vector.extract_strided_slice %3 {offsets = [0, 0], sizes = [8, 8], strides = [1, 1]} : vector<8x32xf32> to vector<8x8xf32>
    %9 = vector.extract_strided_slice %5 {offsets = [0, 0], sizes = [8, 8], strides = [1, 1]} : vector<8x32xf32> to vector<8x8xf32>
    %10 = vector.extract_strided_slice %7 {offsets = [0, 0], sizes = [8, 8], strides = [1, 1]} : vector<8x32xf32> to vector<8x8xf32>
    %cst_8 = arith.constant dense<0.000000e+00> : vector<8x8xf32>
    %11 = tpu.matmul %8, %9, %cst_8 {dimension_numbers = #tpu.dot_dimension_numbers<[1], [1], [0], [0], [0, 0, 1, 0], [], []>} : vector<8x8xf32>, vector<8x8xf32>, vector<8x8xf32> -> vector<8x8xf32>
    %cst_9 = arith.constant dense<0xFF800000> : vector<8xf32>
    %12 = vector.multi_reduction <maximumf>, %11, %cst_9 [1] : vector<8x8xf32> to vector<8xf32>
    %13 = vector.shape_cast %12 : vector<8xf32> to vector<8x1xf32>
    %14 = vector.broadcast %13 : vector<8x1xf32> to vector<8x8xf32>
    %15 = arith.subf %11, %14 : vector<8x8xf32>
    %16 = math.exp %15 : vector<8x8xf32>
    %cst_10 = arith.constant dense<0.000000e+00> : vector<8xf32>
    %17 = vector.multi_reduction <add>, %16, %cst_10 [1] : vector<8x8xf32> to vector<8xf32>
    %18 = vector.shape_cast %17 : vector<8xf32> to vector<8x1xf32>
    %19 = tpu.reciprocal %18 {approx = true} : vector<8x1xf32> -> vector<8x1xf32>
    %20 = vector.broadcast %19 : vector<8x1xf32> to vector<8x8xf32>
    %21 = arith.mulf %16, %20 : vector<8x8xf32>
    %cst_11 = arith.constant dense<0.000000e+00> : vector<8x8xf32>
    %22 = tpu.matmul %21, %10, %cst_11 {dimension_numbers = #tpu.dot_dimension_numbers<[1], [0], [0], [1], [0, 0, 1, 1], [], []>} : vector<8x8xf32>, vector<8x8xf32>, vector<8x8xf32> -> vector<8x8xf32>
    %23 = vector.extract_strided_slice %3 {offsets = [0, 8], sizes = [8, 8], strides = [1, 1]} : vector<8x32xf32> to vector<8x8xf32>
    %24 = vector.extract_strided_slice %5 {offsets = [0, 8], sizes = [8, 8], strides = [1, 1]} : vector<8x32xf32> to vector<8x8xf32>
    %25 = vector.extract_strided_slice %7 {offsets = [0, 8], sizes = [8, 8], strides = [1, 1]} : vector<8x32xf32> to vector<8x8xf32>
    %cst_12 = arith.constant dense<0.000000e+00> : vector<8x8xf32>
    %26 = tpu.matmul %23, %24, %cst_12 {dimension_numbers = #tpu.dot_dimension_numbers<[1], [1], [0], [0], [0, 0, 1, 0], [], []>} : vector<8x8xf32>, vector<8x8xf32>, vector<8x8xf32> -> vector<8x8xf32>
    %cst_13 = arith.constant dense<0xFF800000> : vector<8xf32>
    %27 = vector.multi_reduction <maximumf>, %26, %cst_13 [1] : vector<8x8xf32> to vector<8xf32>
    %28 = vector.shape_cast %27 : vector<8xf32> to vector<8x1xf32>
    %29 = vector.broadcast %28 : vector<8x1xf32> to vector<8x8xf32>
    %30 = arith.subf %26, %29 : vector<8x8xf32>
    %31 = math.exp %30 : vector<8x8xf32>
    %cst_14 = arith.constant dense<0.000000e+00> : vector<8xf32>
    %32 = vector.multi_reduction <add>, %31, %cst_14 [1] : vector<8x8xf32> to vector<8xf32>
    %33 = vector.shape_cast %32 : vector<8xf32> to vector<8x1xf32>
    %34 = tpu.reciprocal %33 {approx = true} : vector<8x1xf32> -> vector<8x1xf32>
    %35 = vector.broadcast %34 : vector<8x1xf32> to vector<8x8xf32>
    %36 = arith.mulf %31, %35 : vector<8x8xf32>
    %cst_15 = arith.constant dense<0.000000e+00> : vector<8x8xf32>
    %37 = tpu.matmul %36, %25, %cst_15 {dimension_numbers = #tpu.dot_dimension_numbers<[1], [0], [0], [1], [0, 0, 1, 1], [], []>} : vector<8x8xf32>, vector<8x8xf32>, vector<8x8xf32> -> vector<8x8xf32>
    %38 = vector.extract_strided_slice %3 {offsets = [0, 16], sizes = [8, 8], strides = [1, 1]} : vector<8x32xf32> to vector<8x8xf32>
    %39 = vector.extract_strided_slice %5 {offsets = [0, 16], sizes = [8, 8], strides = [1, 1]} : vector<8x32xf32> to vector<8x8xf32>
    %40 = vector.extract_strided_slice %7 {offsets = [0, 16], sizes = [8, 8], strides = [1, 1]} : vector<8x32xf32> to vector<8x8xf32>
    %cst_16 = arith.constant dense<0.000000e+00> : vector<8x8xf32>
    %41 = tpu.matmul %38, %39, %cst_16 {dimension_numbers = #tpu.dot_dimension_numbers<[1], [1], [0], [0], [0, 0, 1, 0], [], []>} : vector<8x8xf32>, vector<8x8xf32>, vector<8x8xf32> -> vector<8x8xf32>
    %cst_17 = arith.constant dense<0xFF800000> : vector<8xf32>
    %42 = vector.multi_reduction <maximumf>, %41, %cst_17 [1] : vector<8x8xf32> to vector<8xf32>
    %43 = vector.shape_cast %42 : vector<8xf32> to vector<8x1xf32>
    %44 = vector.broadcast %43 : vector<8x1xf32> to vector<8x8xf32>
    %45 = arith.subf %41, %44 : vector<8x8xf32>
    %46 = math.exp %45 : vector<8x8xf32>
    %cst_18 = arith.constant dense<0.000000e+00> : vector<8xf32>
    %47 = vector.multi_reduction <add>, %46, %cst_18 [1] : vector<8x8xf32> to vector<8xf32>
    %48 = vector.shape_cast %47 : vector<8xf32> to vector<8x1xf32>
    %49 = tpu.reciprocal %48 {approx = true} : vector<8x1xf32> -> vector<8x1xf32>
    %50 = vector.broadcast %49 : vector<8x1xf32> to vector<8x8xf32>
    %51 = arith.mulf %46, %50 : vector<8x8xf32>
    %cst_19 = arith.constant dense<0.000000e+00> : vector<8x8xf32>
    %52 = tpu.matmul %51, %40, %cst_19 {dimension_numbers = #tpu.dot_dimension_numbers<[1], [0], [0], [1], [0, 0, 1, 1], [], []>} : vector<8x8xf32>, vector<8x8xf32>, vector<8x8xf32> -> vector<8x8xf32>
    %53 = vector.extract_strided_slice %3 {offsets = [0, 24], sizes = [8, 8], strides = [1, 1]} : vector<8x32xf32> to vector<8x8xf32>
    %54 = vector.extract_strided_slice %5 {offsets = [0, 24], sizes = [8, 8], strides = [1, 1]} : vector<8x32xf32> to vector<8x8xf32>
    %55 = vector.extract_strided_slice %7 {offsets = [0, 24], sizes = [8, 8], strides = [1, 1]} : vector<8x32xf32> to vector<8x8xf32>
    %cst_20 = arith.constant dense<0.000000e+00> : vector<8x8xf32>
    %56 = tpu.matmul %53, %54, %cst_20 {dimension_numbers = #tpu.dot_dimension_numbers<[1], [1], [0], [0], [0, 0, 1, 0], [], []>} : vector<8x8xf32>, vector<8x8xf32>, vector<8x8xf32> -> vector<8x8xf32>
    %cst_21 = arith.constant dense<0xFF800000> : vector<8xf32>
    %57 = vector.multi_reduction <maximumf>, %56, %cst_21 [1] : vector<8x8xf32> to vector<8xf32>
    %58 = vector.shape_cast %57 : vector<8xf32> to vector<8x1xf32>
    %59 = vector.broadcast %58 : vector<8x1xf32> to vector<8x8xf32>
    %60 = arith.subf %56, %59 : vector<8x8xf32>
    %61 = math.exp %60 : vector<8x8xf32>
    %cst_22 = arith.constant dense<0.000000e+00> : vector<8xf32>
    %62 = vector.multi_reduction <add>, %61, %cst_22 [1] : vector<8x8xf32> to vector<8xf32>
    %63 = vector.shape_cast %62 : vector<8xf32> to vector<8x1xf32>
    %64 = tpu.reciprocal %63 {approx = true} : vector<8x1xf32> -> vector<8x1xf32>
    %65 = vector.broadcast %64 : vector<8x1xf32> to vector<8x8xf32>
    %66 = arith.mulf %61, %65 : vector<8x8xf32>
    %cst_23 = arith.constant dense<0.000000e+00> : vector<8x8xf32>
    %67 = tpu.matmul %66, %55, %cst_23 {dimension_numbers = #tpu.dot_dimension_numbers<[1], [0], [0], [1], [0, 0, 1, 1], [], []>} : vector<8x8xf32>, vector<8x8xf32>, vector<8x8xf32> -> vector<8x8xf32>
    %68 = tpu.concatenate %22, %37, %52, %67 in 1 : vector<8x8xf32>, vector<8x8xf32>, vector<8x8xf32>, vector<8x8xf32> -> vector<8x32xf32>
    %c0_24 = arith.constant 0 : index
    %c0_25 = arith.constant 0 : index
    %c0_26 = arith.constant 0 : index
    %69 = vector.load %arg4[%c0_24, %c0_25, %c0_26] : memref<1x8x32xf32, #tpu.memory_space<vmem>>, vector<1x8x32xf32>
    %70 = vector.shape_cast %69 : vector<1x8x32xf32> to vector<8x32xf32>
    %71 = vector.shape_cast %68 : vector<8x32xf32> to vector<1x8x32xf32>
    tpu.vector_store %arg4[%c0_24, %c0_25, %c0_26], %71 {strides = array<i32>} : memref<1x8x32xf32, #tpu.memory_space<vmem>>, vector<1x8x32xf32>,
    return
  }
  func.func @transform_0(%arg0: i32) -> (i32, i32, i32) {
    %c0_i32 = arith.constant 0 : i32
    %c0_i32_0 = arith.constant 0 : i32
    %c0_i32_1 = arith.constant 0 : i32
    return %arg0, %c0_i32, %c0_i32_0 : i32, i32, i32
  }
  func.func @transform_1(%arg0: i32) -> (i32, i32, i32) {
    %c0_i32 = arith.constant 0 : i32
    %c0_i32_0 = arith.constant 0 : i32
    %c0_i32_1 = arith.constant 0 : i32
    return %arg0, %c0_i32, %c0_i32_0 : i32, i32, i32
  }
  func.func @transform_2(%arg0: i32) -> (i32, i32, i32) {
    %c0_i32 = arith.constant 0 : i32
    %c0_i32_0 = arith.constant 0 : i32
    %c0_i32_1 = arith.constant 0 : i32
    return %arg0, %c0_i32, %c0_i32_0 : i32, i32, i32
  }
  func.func @transform_3(%arg0: i32) -> (i32, i32, i32) {
    %c0_i32 = arith.constant 0 : i32
    %c0_i32_0 = arith.constant 0 : i32
    %c0_i32_1 = arith.constant 0 : i32
    return %arg0, %c0_i32, %c0_i32_0 : i32, i32, i32
  }
}

module attributes {stable_mosaic.version = 11 : i64} {
  func.func @_proj_add_ln_kernel(%arg0: i32, %arg1: memref<16x32xf32, #tpu.memory_space<vmem>>, %arg2: memref<16x32xf32, #tpu.memory_space<vmem>>, %arg3: memref<32x32xbf16, #tpu.memory_space<vmem>>, %arg4: memref<1x32xf32, #tpu.memory_space<vmem>>, %arg5: memref<1x32xf32, #tpu.memory_space<vmem>>, %arg6: memref<1x32xf32, #tpu.memory_space<vmem>>, %arg7: memref<16x32xf32, #tpu.memory_space<vmem>>) attributes {dimension_semantics = [#tpu.dimension_semantics<parallel>], iteration_bounds = array<i64: 1>, scalar_prefetch = 0 : i64, scratch_operands = 0 : i64, tpu.core_type = #tpu.core_type<tc>, window_params = [{transform_indices = @transform_0, window_bounds = array<i64: 16, 32>}, {transform_indices = @transform_1, window_bounds = array<i64: 16, 32>}, {pipeline_mode = #tpu.pipeline_mode<synchronous>, transform_indices = @transform_2, window_bounds = array<i64: 32, 32>}, {pipeline_mode = #tpu.pipeline_mode<synchronous>, transform_indices = @transform_3, window_bounds = array<i64: 1, 32>}, {pipeline_mode = #tpu.pipeline_mode<synchronous>, transform_indices = @transform_4, window_bounds = array<i64: 1, 32>}, {pipeline_mode = #tpu.pipeline_mode<synchronous>, transform_indices = @transform_5, window_bounds = array<i64: 1, 32>}, {transform_indices = @transform_6, window_bounds = array<i64: 16, 32>}]} {
    %c0 = arith.constant 0 : index
    %c0_0 = arith.constant 0 : index
    %0 = vector.load %arg1[%c0, %c0_0] : memref<16x32xf32, #tpu.memory_space<vmem>>, vector<16x32xf32>
    %1 = arith.truncf %0 : vector<16x32xf32> to vector<16x32xbf16>
    %c0_1 = arith.constant 0 : index
    %c0_2 = arith.constant 0 : index
    %2 = vector.load %arg3[%c0_1, %c0_2] : memref<32x32xbf16, #tpu.memory_space<vmem>>, vector<32x32xbf16>
    %cst = arith.constant dense<0.000000e+00> : vector<16x32xf32>
    %3 = tpu.matmul %1, %2, %cst {dimension_numbers = #tpu.dot_dimension_numbers<[1], [0], [0], [1], [0, 0, 1, 1], [], []>} : vector<16x32xbf16>, vector<32x32xbf16>, vector<16x32xf32> -> vector<16x32xf32>
    %c0_3 = arith.constant 0 : index
    %c0_4 = arith.constant 0 : index
    %4 = vector.load %arg4[%c0_3, %c0_4] : memref<1x32xf32, #tpu.memory_space<vmem>>, vector<1x32xf32>
    %5 = vector.broadcast %4 : vector<1x32xf32> to vector<16x32xf32>
    %6 = arith.addf %3, %5 : vector<16x32xf32>
    %c0_5 = arith.constant 0 : index
    %c0_6 = arith.constant 0 : index
    %7 = vector.load %arg2[%c0_5, %c0_6] : memref<16x32xf32, #tpu.memory_space<vmem>>, vector<16x32xf32>
    %8 = arith.addf %6, %7 : vector<16x32xf32>
    %cst_7 = arith.constant dense<0.000000e+00> : vector<16xf32>
    %9 = vector.multi_reduction <add>, %8, %cst_7 [1] : vector<16x32xf32> to vector<16xf32>
    %10 = vector.shape_cast %9 : vector<16xf32> to vector<16x1xf32>
    %cst_8 = arith.constant 3.200000e+01 : f32
    %11 = vector.broadcast %cst_8 : f32 to vector<16x1xf32>
    %12 = arith.divf %10, %11 : vector<16x1xf32>
    %13 = vector.broadcast %12 : vector<16x1xf32> to vector<16x32xf32>
    %14 = arith.subf %8, %13 : vector<16x32xf32>
    %15 = arith.mulf %14, %14 : vector<16x32xf32>
    %cst_9 = arith.constant dense<0.000000e+00> : vector<16xf32>
    %16 = vector.multi_reduction <add>, %15, %cst_9 [1] : vector<16x32xf32> to vector<16xf32>
    %17 = vector.shape_cast %16 : vector<16xf32> to vector<16x1xf32>
    %cst_10 = arith.constant 3.200000e+01 : f32
    %18 = vector.broadcast %cst_10 : f32 to vector<16x1xf32>
    %19 = arith.divf %17, %18 : vector<16x1xf32>
    %20 = vector.broadcast %12 : vector<16x1xf32> to vector<16x32xf32>
    %21 = arith.subf %8, %20 : vector<16x32xf32>
    %cst_11 = arith.constant 9.99999974E-6 : f32
    %22 = vector.broadcast %cst_11 : f32 to vector<16x1xf32>
    %23 = arith.addf %19, %22 : vector<16x1xf32>
    %24 = math.rsqrt %23 : vector<16x1xf32>
    %25 = vector.broadcast %24 : vector<16x1xf32> to vector<16x32xf32>
    %26 = arith.mulf %21, %25 : vector<16x32xf32>
    %c0_12 = arith.constant 0 : index
    %c0_13 = arith.constant 0 : index
    %27 = vector.load %arg5[%c0_12, %c0_13] : memref<1x32xf32, #tpu.memory_space<vmem>>, vector<1x32xf32>
    %28 = vector.broadcast %27 : vector<1x32xf32> to vector<16x32xf32>
    %29 = arith.mulf %26, %28 : vector<16x32xf32>
    %c0_14 = arith.constant 0 : index
    %c0_15 = arith.constant 0 : index
    %30 = vector.load %arg6[%c0_14, %c0_15] : memref<1x32xf32, #tpu.memory_space<vmem>>, vector<1x32xf32>
    %31 = vector.broadcast %30 : vector<1x32xf32> to vector<16x32xf32>
    %32 = arith.addf %29, %31 : vector<16x32xf32>
    %c0_16 = arith.constant 0 : index
    %c0_17 = arith.constant 0 : index
    %33 = vector.load %arg7[%c0_16, %c0_17] : memref<16x32xf32, #tpu.memory_space<vmem>>, vector<16x32xf32>
    tpu.vector_store %arg7[%c0_16, %c0_17], %32 {strides = array<i32>} : memref<16x32xf32, #tpu.memory_space<vmem>>, vector<16x32xf32>,
    return
  }
  func.func @transform_0(%arg0: i32) -> (i32, i32) {
    %c0_i32 = arith.constant 0 : i32
    %c0_i32_0 = arith.constant 0 : i32
    return %arg0, %c0_i32 : i32, i32
  }
  func.func @transform_1(%arg0: i32) -> (i32, i32) {
    %c0_i32 = arith.constant 0 : i32
    %c0_i32_0 = arith.constant 0 : i32
    return %arg0, %c0_i32 : i32, i32
  }
  func.func @transform_2(%arg0: i32) -> (i32, i32) {
    %c0_i32 = arith.constant 0 : i32
    %c0_i32_0 = arith.constant 0 : i32
    %c0_i32_1 = arith.constant 0 : i32
    return %c0_i32, %c0_i32_0 : i32, i32
  }
  func.func @transform_3(%arg0: i32) -> (i32, i32) {
    %c0_i32 = arith.constant 0 : i32
    %c0_i32_0 = arith.constant 0 : i32
    %c0_i32_1 = arith.constant 0 : i32
    return %c0_i32, %c0_i32_0 : i32, i32
  }
  func.func @transform_4(%arg0: i32) -> (i32, i32) {
    %c0_i32 = arith.constant 0 : i32
    %c0_i32_0 = arith.constant 0 : i32
    %c0_i32_1 = arith.constant 0 : i32
    return %c0_i32, %c0_i32_0 : i32, i32
  }
  func.func @transform_5(%arg0: i32) -> (i32, i32) {
    %c0_i32 = arith.constant 0 : i32
    %c0_i32_0 = arith.constant 0 : i32
    %c0_i32_1 = arith.constant 0 : i32
    return %c0_i32, %c0_i32_0 : i32, i32
  }
  func.func @transform_6(%arg0: i32) -> (i32, i32) {
    %c0_i32 = arith.constant 0 : i32
    %c0_i32_0 = arith.constant 0 : i32
    return %arg0, %c0_i32 : i32, i32
  }
}

module attributes {stable_mosaic.version = 11 : i64} {
  func.func @_ffn_add_ln_kernel(%arg0: i32, %arg1: memref<16x32xf32, #tpu.memory_space<vmem>>, %arg2: memref<32x64xbf16, #tpu.memory_space<vmem>>, %arg3: memref<1x64xf32, #tpu.memory_space<vmem>>, %arg4: memref<64x32xbf16, #tpu.memory_space<vmem>>, %arg5: memref<1x32xf32, #tpu.memory_space<vmem>>, %arg6: memref<1x32xf32, #tpu.memory_space<vmem>>, %arg7: memref<1x32xf32, #tpu.memory_space<vmem>>, %arg8: memref<16x32xf32, #tpu.memory_space<vmem>>) attributes {dimension_semantics = [#tpu.dimension_semantics<parallel>], iteration_bounds = array<i64: 1>, scalar_prefetch = 0 : i64, scratch_operands = 0 : i64, tpu.core_type = #tpu.core_type<tc>, window_params = [{transform_indices = @transform_0, window_bounds = array<i64: 16, 32>}, {pipeline_mode = #tpu.pipeline_mode<synchronous>, transform_indices = @transform_1, window_bounds = array<i64: 32, 64>}, {pipeline_mode = #tpu.pipeline_mode<synchronous>, transform_indices = @transform_2, window_bounds = array<i64: 1, 64>}, {pipeline_mode = #tpu.pipeline_mode<synchronous>, transform_indices = @transform_3, window_bounds = array<i64: 64, 32>}, {pipeline_mode = #tpu.pipeline_mode<synchronous>, transform_indices = @transform_4, window_bounds = array<i64: 1, 32>}, {pipeline_mode = #tpu.pipeline_mode<synchronous>, transform_indices = @transform_5, window_bounds = array<i64: 1, 32>}, {pipeline_mode = #tpu.pipeline_mode<synchronous>, transform_indices = @transform_6, window_bounds = array<i64: 1, 32>}, {transform_indices = @transform_7, window_bounds = array<i64: 16, 32>}]} {
    %c0 = arith.constant 0 : index
    %c0_0 = arith.constant 0 : index
    %0 = vector.load %arg1[%c0, %c0_0] : memref<16x32xf32, #tpu.memory_space<vmem>>, vector<16x32xf32>
    %1 = arith.truncf %0 : vector<16x32xf32> to vector<16x32xbf16>
    %c0_1 = arith.constant 0 : index
    %c0_2 = arith.constant 0 : index
    %2 = vector.load %arg2[%c0_1, %c0_2] : memref<32x64xbf16, #tpu.memory_space<vmem>>, vector<32x64xbf16>
    %cst = arith.constant dense<0.000000e+00> : vector<16x64xf32>
    %3 = tpu.matmul %1, %2, %cst {dimension_numbers = #tpu.dot_dimension_numbers<[1], [0], [0], [1], [0, 0, 1, 1], [], []>} : vector<16x32xbf16>, vector<32x64xbf16>, vector<16x64xf32> -> vector<16x64xf32>
    %c0_3 = arith.constant 0 : index
    %c0_4 = arith.constant 0 : index
    %4 = vector.load %arg3[%c0_3, %c0_4] : memref<1x64xf32, #tpu.memory_space<vmem>>, vector<1x64xf32>
    %5 = vector.broadcast %4 : vector<1x64xf32> to vector<16x64xf32>
    %6 = arith.addf %3, %5 : vector<16x64xf32>
    %cst_5 = arith.constant 0.000000e+00 : f32
    %7 = vector.broadcast %cst_5 : f32 to vector<16x64xf32>
    %8 = arith.maximumf %6, %7 : vector<16x64xf32>
    %9 = arith.truncf %8 : vector<16x64xf32> to vector<16x64xbf16>
    %c0_6 = arith.constant 0 : index
    %c0_7 = arith.constant 0 : index
    %10 = vector.load %arg4[%c0_6, %c0_7] : memref<64x32xbf16, #tpu.memory_space<vmem>>, vector<64x32xbf16>
    %cst_8 = arith.constant dense<0.000000e+00> : vector<16x32xf32>
    %11 = tpu.matmul %9, %10, %cst_8 {dimension_numbers = #tpu.dot_dimension_numbers<[1], [0], [0], [1], [0, 0, 1, 1], [], []>} : vector<16x64xbf16>, vector<64x32xbf16>, vector<16x32xf32> -> vector<16x32xf32>
    %c0_9 = arith.constant 0 : index
    %c0_10 = arith.constant 0 : index
    %12 = vector.load %arg5[%c0_9, %c0_10] : memref<1x32xf32, #tpu.memory_space<vmem>>, vector<1x32xf32>
    %13 = vector.broadcast %12 : vector<1x32xf32> to vector<16x32xf32>
    %14 = arith.addf %11, %13 : vector<16x32xf32>
    %15 = arith.addf %14, %0 : vector<16x32xf32>
    %cst_11 = arith.constant dense<0.000000e+00> : vector<16xf32>
    %16 = vector.multi_reduction <add>, %15, %cst_11 [1] : vector<16x32xf32> to vector<16xf32>
    %17 = vector.shape_cast %16 : vector<16xf32> to vector<16x1xf32>
    %cst_12 = arith.constant 3.200000e+01 : f32
    %18 = vector.broadcast %cst_12 : f32 to vector<16x1xf32>
    %19 = arith.divf %17, %18 : vector<16x1xf32>
    %20 = vector.broadcast %19 : vector<16x1xf32> to vector<16x32xf32>
    %21 = arith.subf %15, %20 : vector<16x32xf32>
    %22 = arith.mulf %21, %21 : vector<16x32xf32>
    %cst_13 = arith.constant dense<0.000000e+00> : vector<16xf32>
    %23 = vector.multi_reduction <add>, %22, %cst_13 [1] : vector<16x32xf32> to vector<16xf32>
    %24 = vector.shape_cast %23 : vector<16xf32> to vector<16x1xf32>
    %cst_14 = arith.constant 3.200000e+01 : f32
    %25 = vector.broadcast %cst_14 : f32 to vector<16x1xf32>
    %26 = arith.divf %24, %25 : vector<16x1xf32>
    %27 = vector.broadcast %19 : vector<16x1xf32> to vector<16x32xf32>
    %28 = arith.subf %15, %27 : vector<16x32xf32>
    %cst_15 = arith.constant 9.99999974E-6 : f32
    %29 = vector.broadcast %cst_15 : f32 to vector<16x1xf32>
    %30 = arith.addf %26, %29 : vector<16x1xf32>
    %31 = math.rsqrt %30 : vector<16x1xf32>
    %32 = vector.broadcast %31 : vector<16x1xf32> to vector<16x32xf32>
    %33 = arith.mulf %28, %32 : vector<16x32xf32>
    %c0_16 = arith.constant 0 : index
    %c0_17 = arith.constant 0 : index
    %34 = vector.load %arg6[%c0_16, %c0_17] : memref<1x32xf32, #tpu.memory_space<vmem>>, vector<1x32xf32>
    %35 = vector.broadcast %34 : vector<1x32xf32> to vector<16x32xf32>
    %36 = arith.mulf %33, %35 : vector<16x32xf32>
    %c0_18 = arith.constant 0 : index
    %c0_19 = arith.constant 0 : index
    %37 = vector.load %arg7[%c0_18, %c0_19] : memref<1x32xf32, #tpu.memory_space<vmem>>, vector<1x32xf32>
    %38 = vector.broadcast %37 : vector<1x32xf32> to vector<16x32xf32>
    %39 = arith.addf %36, %38 : vector<16x32xf32>
    %c0_20 = arith.constant 0 : index
    %c0_21 = arith.constant 0 : index
    %40 = vector.load %arg8[%c0_20, %c0_21] : memref<16x32xf32, #tpu.memory_space<vmem>>, vector<16x32xf32>
    tpu.vector_store %arg8[%c0_20, %c0_21], %39 {strides = array<i32>} : memref<16x32xf32, #tpu.memory_space<vmem>>, vector<16x32xf32>,
    return
  }
  func.func @transform_0(%arg0: i32) -> (i32, i32) {
    %c0_i32 = arith.constant 0 : i32
    %c0_i32_0 = arith.constant 0 : i32
    return %arg0, %c0_i32 : i32, i32
  }
  func.func @transform_1(%arg0: i32) -> (i32, i32) {
    %c0_i32 = arith.constant 0 : i32
    %c0_i32_0 = arith.constant 0 : i32
    %c0_i32_1 = arith.constant 0 : i32
    return %c0_i32, %c0_i32_0 : i32, i32
  }
  func.func @transform_2(%arg0: i32) -> (i32, i32) {
    %c0_i32 = arith.constant 0 : i32
    %c0_i32_0 = arith.constant 0 : i32
    %c0_i32_1 = arith.constant 0 : i32
    return %c0_i32, %c0_i32_0 : i32, i32
  }
  func.func @transform_3(%arg0: i32) -> (i32, i32) {
    %c0_i32 = arith.constant 0 : i32
    %c0_i32_0 = arith.constant 0 : i32
    %c0_i32_1 = arith.constant 0 : i32
    return %c0_i32, %c0_i32_0 : i32, i32
  }
  func.func @transform_4(%arg0: i32) -> (i32, i32) {
    %c0_i32 = arith.constant 0 : i32
    %c0_i32_0 = arith.constant 0 : i32
    %c0_i32_1 = arith.constant 0 : i32
    return %c0_i32, %c0_i32_0 : i32, i32
  }
  func.func @transform_5(%arg0: i32) -> (i32, i32) {
    %c0_i32 = arith.constant 0 : i32
    %c0_i32_0 = arith.constant 0 : i32
    %c0_i32_1 = arith.constant 0 : i32
    return %c0_i32, %c0_i32_0 : i32, i32
  }
  func.func @transform_6(%arg0: i32) -> (i32, i32) {
    %c0_i32 = arith.constant 0 : i32
    %c0_i32_0 = arith.constant 0 : i32
    %c0_i32_1 = arith.constant 0 : i32
    return %c0_i32, %c0_i32_0 : i32, i32
  }
  func.func @transform_7(%arg0: i32) -> (i32, i32) {
    %c0_i32 = arith.constant 0 : i32
    %c0_i32_0 = arith.constant 0 : i32
    return %arg0, %c0_i32 : i32, i32
  }
}

module attributes {stable_mosaic.version = 11 : i64} {
  func.func @_layernorm_kernel(%arg0: i32, %arg1: memref<16x32xf32, #tpu.memory_space<vmem>>, %arg2: memref<1x32xf32, #tpu.memory_space<vmem>>, %arg3: memref<1x32xf32, #tpu.memory_space<vmem>>, %arg4: memref<16x32xf32, #tpu.memory_space<vmem>>) attributes {dimension_semantics = [#tpu.dimension_semantics<parallel>], iteration_bounds = array<i64: 1>, scalar_prefetch = 0 : i64, scratch_operands = 0 : i64, tpu.core_type = #tpu.core_type<tc>, window_params = [{transform_indices = @transform_0, window_bounds = array<i64: 16, 32>}, {pipeline_mode = #tpu.pipeline_mode<synchronous>, transform_indices = @transform_1, window_bounds = array<i64: 1, 32>}, {pipeline_mode = #tpu.pipeline_mode<synchronous>, transform_indices = @transform_2, window_bounds = array<i64: 1, 32>}, {transform_indices = @transform_3, window_bounds = array<i64: 16, 32>}]} {
    %c0 = arith.constant 0 : index
    %c0_0 = arith.constant 0 : index
    %0 = vector.load %arg1[%c0, %c0_0] : memref<16x32xf32, #tpu.memory_space<vmem>>, vector<16x32xf32>
    %cst = arith.constant dense<0.000000e+00> : vector<16xf32>
    %1 = vector.multi_reduction <add>, %0, %cst [1] : vector<16x32xf32> to vector<16xf32>
    %2 = vector.shape_cast %1 : vector<16xf32> to vector<16x1xf32>
    %cst_1 = arith.constant 3.200000e+01 : f32
    %3 = vector.broadcast %cst_1 : f32 to vector<16x1xf32>
    %4 = arith.divf %2, %3 : vector<16x1xf32>
    %5 = vector.broadcast %4 : vector<16x1xf32> to vector<16x32xf32>
    %6 = arith.subf %0, %5 : vector<16x32xf32>
    %7 = arith.mulf %6, %6 : vector<16x32xf32>
    %cst_2 = arith.constant dense<0.000000e+00> : vector<16xf32>
    %8 = vector.multi_reduction <add>, %7, %cst_2 [1] : vector<16x32xf32> to vector<16xf32>
    %9 = vector.shape_cast %8 : vector<16xf32> to vector<16x1xf32>
    %cst_3 = arith.constant 3.200000e+01 : f32
    %10 = vector.broadcast %cst_3 : f32 to vector<16x1xf32>
    %11 = arith.divf %9, %10 : vector<16x1xf32>
    %12 = vector.broadcast %4 : vector<16x1xf32> to vector<16x32xf32>
    %13 = arith.subf %0, %12 : vector<16x32xf32>
    %cst_4 = arith.constant 9.99999974E-6 : f32
    %14 = vector.broadcast %cst_4 : f32 to vector<16x1xf32>
    %15 = arith.addf %11, %14 : vector<16x1xf32>
    %16 = math.rsqrt %15 : vector<16x1xf32>
    %17 = vector.broadcast %16 : vector<16x1xf32> to vector<16x32xf32>
    %18 = arith.mulf %13, %17 : vector<16x32xf32>
    %c0_5 = arith.constant 0 : index
    %c0_6 = arith.constant 0 : index
    %19 = vector.load %arg2[%c0_5, %c0_6] : memref<1x32xf32, #tpu.memory_space<vmem>>, vector<1x32xf32>
    %20 = vector.broadcast %19 : vector<1x32xf32> to vector<16x32xf32>
    %21 = arith.mulf %18, %20 : vector<16x32xf32>
    %c0_7 = arith.constant 0 : index
    %c0_8 = arith.constant 0 : index
    %22 = vector.load %arg3[%c0_7, %c0_8] : memref<1x32xf32, #tpu.memory_space<vmem>>, vector<1x32xf32>
    %23 = vector.broadcast %22 : vector<1x32xf32> to vector<16x32xf32>
    %24 = arith.addf %21, %23 : vector<16x32xf32>
    %c0_9 = arith.constant 0 : index
    %c0_10 = arith.constant 0 : index
    %25 = vector.load %arg4[%c0_9, %c0_10] : memref<16x32xf32, #tpu.memory_space<vmem>>, vector<16x32xf32>
    tpu.vector_store %arg4[%c0_9, %c0_10], %24 {strides = array<i32>} : memref<16x32xf32, #tpu.memory_space<vmem>>, vector<16x32xf32>,
    return
  }
  func.func @transform_0(%arg0: i32) -> (i32, i32) {
    %c0_i32 = arith.constant 0 : i32
    %c0_i32_0 = arith.constant 0 : i32
    return %arg0, %c0_i32 : i32, i32
  }
  func.func @transform_1(%arg0: i32) -> (i32, i32) {
    %c0_i32 = arith.constant 0 : i32
    %c0_i32_0 = arith.constant 0 : i32
    %c0_i32_1 = arith.constant 0 : i32
    return %c0_i32, %c0_i32_0 : i32, i32
  }
  func.func @transform_2(%arg0: i32) -> (i32, i32) {
    %c0_i32 = arith.constant 0 : i32
    %c0_i32_0 = arith.constant 0 : i32
    %c0_i32_1 = arith.constant 0 : i32
    return %c0_i32, %c0_i32_0 : i32, i32
  }
  func.func @transform_3(%arg0: i32) -> (i32, i32) {
    %c0_i32 = arith.constant 0 : i32
    %c0_i32_0 = arith.constant 0 : i32
    return %arg0, %c0_i32 : i32, i32
  }
}

module attributes {stable_mosaic.version = 11 : i64} {
  func.func @_tiled_linear_kernel(%arg0: i32, %arg1: i32, %arg2: i32, %arg3: memref<2x256xf32, #tpu.memory_space<vmem>>, %arg4: memref<256x64xbf16, #tpu.memory_space<vmem>>, %arg5: memref<1x64xf32, #tpu.memory_space<vmem>>, %arg6: memref<2x64xf32, #tpu.memory_space<vmem>>, %arg7: memref<2x64xf32, #tpu.memory_space<vmem>>) attributes {dimension_semantics = [#tpu.dimension_semantics<parallel>, #tpu.dimension_semantics<parallel>, #tpu.dimension_semantics<arbitrary>], iteration_bounds = array<i64: 1, 1, 1>, scalar_prefetch = 0 : i64, scratch_operands = 1 : i64, tpu.core_type = #tpu.core_type<tc>, window_params = [{transform_indices = @transform_0, window_bounds = array<i64: 2, 256>}, {transform_indices = @transform_1, window_bounds = array<i64: 256, 64>}, {transform_indices = @transform_2, window_bounds = array<i64: 1, 64>}, {transform_indices = @transform_3, window_bounds = array<i64: 2, 64>}]} {
    %c0_i32 = arith.constant 0 : i32
    %0 = arith.cmpi eq, %arg2, %c0_i32 : i32
    %1 = arith.extui %0 : i1 to i32
    %c0_i32_0 = arith.constant 0 : i32
    %2 = arith.cmpi ne, %1, %c0_i32_0 : i32
    scf.if %2 {
      %cst_10 = arith.constant 0.000000e+00 : f32
      %13 = vector.broadcast %cst_10 : f32 to vector<2x64xf32>
      %c0_11 = arith.constant 0 : index
      %c0_12 = arith.constant 0 : index
      %14 = vector.load %arg7[%c0_11, %c0_12] : memref<2x64xf32, #tpu.memory_space<vmem>>, vector<2x64xf32>
      tpu.vector_store %arg7[%c0_11, %c0_12], %13 {strides = array<i32>} : memref<2x64xf32, #tpu.memory_space<vmem>>, vector<2x64xf32>,
    } else {
    }
    %c0 = arith.constant 0 : index
    %c0_1 = arith.constant 0 : index
    %3 = vector.load %arg7[%c0, %c0_1] : memref<2x64xf32, #tpu.memory_space<vmem>>, vector<2x64xf32>
    %c0_2 = arith.constant 0 : index
    %c0_3 = arith.constant 0 : index
    %4 = vector.load %arg3[%c0_2, %c0_3] : memref<2x256xf32, #tpu.memory_space<vmem>>, vector<2x256xf32>
    %5 = arith.truncf %4 : vector<2x256xf32> to vector<2x256xbf16>
    %c0_4 = arith.constant 0 : index
    %c0_5 = arith.constant 0 : index
    %6 = vector.load %arg4[%c0_4, %c0_5] : memref<256x64xbf16, #tpu.memory_space<vmem>>, vector<256x64xbf16>
    %cst = arith.constant dense<0.000000e+00> : vector<2x64xf32>
    %7 = tpu.matmul %5, %6, %cst {dimension_numbers = #tpu.dot_dimension_numbers<[1], [0], [0], [1], [0, 0, 1, 1], [], []>} : vector<2x256xbf16>, vector<256x64xbf16>, vector<2x64xf32> -> vector<2x64xf32>
    %8 = arith.addf %3, %7 : vector<2x64xf32>
    %c0_6 = arith.constant 0 : index
    %c0_7 = arith.constant 0 : index
    %9 = vector.load %arg7[%c0_6, %c0_7] : memref<2x64xf32, #tpu.memory_space<vmem>>, vector<2x64xf32>
    tpu.vector_store %arg7[%c0_6, %c0_7], %8 {strides = array<i32>} : memref<2x64xf32, #tpu.memory_space<vmem>>, vector<2x64xf32>,
    %c0_i32_8 = arith.constant 0 : i32
    %10 = arith.cmpi eq, %arg2, %c0_i32_8 : i32
    %11 = arith.extui %10 : i1 to i32
    %c0_i32_9 = arith.constant 0 : i32
    %12 = arith.cmpi ne, %11, %c0_i32_9 : i32
    scf.if %12 {
      %c0_10 = arith.constant 0 : index
      %c0_11 = arith.constant 0 : index
      %13 = vector.load %arg7[%c0_10, %c0_11] : memref<2x64xf32, #tpu.memory_space<vmem>>, vector<2x64xf32>
      %c0_12 = arith.constant 0 : index
      %c0_13 = arith.constant 0 : index
      %14 = vector.load %arg5[%c0_12, %c0_13] : memref<1x64xf32, #tpu.memory_space<vmem>>, vector<1x64xf32>
      %15 = vector.broadcast %14 : vector<1x64xf32> to vector<2x64xf32>
      %16 = arith.addf %13, %15 : vector<2x64xf32>
      %cst_14 = arith.constant 0.000000e+00 : f32
      %17 = vector.broadcast %cst_14 : f32 to vector<2x64xf32>
      %18 = arith.maximumf %16, %17 : vector<2x64xf32>
      %c0_15 = arith.constant 0 : index
      %c0_16 = arith.constant 0 : index
      %19 = vector.load %arg6[%c0_15, %c0_16] : memref<2x64xf32, #tpu.memory_space<vmem>>, vector<2x64xf32>
      tpu.vector_store %arg6[%c0_15, %c0_16], %18 {strides = array<i32>} : memref<2x64xf32, #tpu.memory_space<vmem>>, vector<2x64xf32>,
    } else {
    }
    return
  }
  func.func @transform_0(%arg0: i32, %arg1: i32, %arg2: i32) -> (i32, i32) {
    %c0_i32 = arith.constant 0 : i32
    return %arg0, %arg2 : i32, i32
  }
  func.func @transform_1(%arg0: i32, %arg1: i32, %arg2: i32) -> (i32, i32) {
    %c0_i32 = arith.constant 0 : i32
    return %arg2, %arg1 : i32, i32
  }
  func.func @transform_2(%arg0: i32, %arg1: i32, %arg2: i32) -> (i32, i32) {
    %c0_i32 = arith.constant 0 : i32
    %c0_i32_0 = arith.constant 0 : i32
    return %c0_i32, %arg1 : i32, i32
  }
  func.func @transform_3(%arg0: i32, %arg1: i32, %arg2: i32) -> (i32, i32) {
    %c0_i32 = arith.constant 0 : i32
    return %arg0, %arg1 : i32, i32
  }
}

module attributes {stable_mosaic.version = 11 : i64} {
  func.func @_tiled_linear_kernel(%arg0: i32, %arg1: i32, %arg2: i32, %arg3: memref<2x64xf32, #tpu.memory_space<vmem>>, %arg4: memref<64x2xbf16, #tpu.memory_space<vmem>>, %arg5: memref<1x2xf32, #tpu.memory_space<vmem>>, %arg6: memref<2x2xf32, #tpu.memory_space<vmem>>, %arg7: memref<2x2xf32, #tpu.memory_space<vmem>>) attributes {dimension_semantics = [#tpu.dimension_semantics<parallel>, #tpu.dimension_semantics<parallel>, #tpu.dimension_semantics<arbitrary>], iteration_bounds = array<i64: 1, 1, 1>, scalar_prefetch = 0 : i64, scratch_operands = 1 : i64, tpu.core_type = #tpu.core_type<tc>, window_params = [{transform_indices = @transform_0, window_bounds = array<i64: 2, 64>}, {transform_indices = @transform_1, window_bounds = array<i64: 64, 2>}, {transform_indices = @transform_2, window_bounds = array<i64: 1, 2>}, {transform_indices = @transform_3, window_bounds = array<i64: 2, 2>}]} {
    %c0_i32 = arith.constant 0 : i32
    %0 = arith.cmpi eq, %arg2, %c0_i32 : i32
    %1 = arith.extui %0 : i1 to i32
    %c0_i32_0 = arith.constant 0 : i32
    %2 = arith.cmpi ne, %1, %c0_i32_0 : i32
    scf.if %2 {
      %cst_10 = arith.constant 0.000000e+00 : f32
      %13 = vector.broadcast %cst_10 : f32 to vector<2x2xf32>
      %c0_11 = arith.constant 0 : index
      %c0_12 = arith.constant 0 : index
      %14 = vector.load %arg7[%c0_11, %c0_12] : memref<2x2xf32, #tpu.memory_space<vmem>>, vector<2x2xf32>
      tpu.vector_store %arg7[%c0_11, %c0_12], %13 {strides = array<i32>} : memref<2x2xf32, #tpu.memory_space<vmem>>, vector<2x2xf32>,
    } else {
    }
    %c0 = arith.constant 0 : index
    %c0_1 = arith.constant 0 : index
    %3 = vector.load %arg7[%c0, %c0_1] : memref<2x2xf32, #tpu.memory_space<vmem>>, vector<2x2xf32>
    %c0_2 = arith.constant 0 : index
    %c0_3 = arith.constant 0 : index
    %4 = vector.load %arg3[%c0_2, %c0_3] : memref<2x64xf32, #tpu.memory_space<vmem>>, vector<2x64xf32>
    %5 = arith.truncf %4 : vector<2x64xf32> to vector<2x64xbf16>
    %c0_4 = arith.constant 0 : index
    %c0_5 = arith.constant 0 : index
    %6 = vector.load %arg4[%c0_4, %c0_5] : memref<64x2xbf16, #tpu.memory_space<vmem>>, vector<64x2xbf16>
    %cst = arith.constant dense<0.000000e+00> : vector<2x2xf32>
    %7 = tpu.matmul %5, %6, %cst {dimension_numbers = #tpu.dot_dimension_numbers<[1], [0], [0], [1], [0, 0, 1, 1], [], []>} : vector<2x64xbf16>, vector<64x2xbf16>, vector<2x2xf32> -> vector<2x2xf32>
    %8 = arith.addf %3, %7 : vector<2x2xf32>
    %c0_6 = arith.constant 0 : index
    %c0_7 = arith.constant 0 : index
    %9 = vector.load %arg7[%c0_6, %c0_7] : memref<2x2xf32, #tpu.memory_space<vmem>>, vector<2x2xf32>
    tpu.vector_store %arg7[%c0_6, %c0_7], %8 {strides = array<i32>} : memref<2x2xf32, #tpu.memory_space<vmem>>, vector<2x2xf32>,
    %c0_i32_8 = arith.constant 0 : i32
    %10 = arith.cmpi eq, %arg2, %c0_i32_8 : i32
    %11 = arith.extui %10 : i1 to i32
    %c0_i32_9 = arith.constant 0 : i32
    %12 = arith.cmpi ne, %11, %c0_i32_9 : i32
    scf.if %12 {
      %c0_10 = arith.constant 0 : index
      %c0_11 = arith.constant 0 : index
      %13 = vector.load %arg7[%c0_10, %c0_11] : memref<2x2xf32, #tpu.memory_space<vmem>>, vector<2x2xf32>
      %c0_12 = arith.constant 0 : index
      %c0_13 = arith.constant 0 : index
      %14 = vector.load %arg5[%c0_12, %c0_13] : memref<1x2xf32, #tpu.memory_space<vmem>>, vector<1x2xf32>
      %15 = vector.broadcast %14 : vector<1x2xf32> to vector<2x2xf32>
      %16 = arith.addf %13, %15 : vector<2x2xf32>
      %c0_14 = arith.constant 0 : index
      %c0_15 = arith.constant 0 : index
      %17 = vector.load %arg6[%c0_14, %c0_15] : memref<2x2xf32, #tpu.memory_space<vmem>>, vector<2x2xf32>
      tpu.vector_store %arg6[%c0_14, %c0_15], %16 {strides = array<i32>} : memref<2x2xf32, #tpu.memory_space<vmem>>, vector<2x2xf32>,
    } else {
    }
    return
  }
  func.func @transform_0(%arg0: i32, %arg1: i32, %arg2: i32) -> (i32, i32) {
    %c0_i32 = arith.constant 0 : i32
    return %arg0, %arg2 : i32, i32
  }
  func.func @transform_1(%arg0: i32, %arg1: i32, %arg2: i32) -> (i32, i32) {
    %c0_i32 = arith.constant 0 : i32
    return %arg2, %arg1 : i32, i32
  }
  func.func @transform_2(%arg0: i32, %arg1: i32, %arg2: i32) -> (i32, i32) {
    %c0_i32 = arith.constant 0 : i32
    %c0_i32_0 = arith.constant 0 : i32
    return %c0_i32, %arg1 : i32, i32
  }
  func.func @transform_3(%arg0: i32, %arg1: i32, %arg2: i32) -> (i32, i32) {
    %c0_i32 = arith.constant 0 : i32
    return %arg0, %arg1 : i32, i32
  }
}

</mosaic_0001>

<llo_original>
// kernel: transformer_forward.12
$region0: #{transformer_forward.12}
  #allocation0 [shape = 'u32[]', space=smem, size = 0x4, offset = 0x4, fixed_abs, tag = 'smem constant byte address 0x4 - core index']
  #allocation1 [shape = 'u32[144,128]{1,0:T(1,128)}', space=vmem, size = 0x12000, scoped, tag = 'internal scratch']
  %s0 = inlined_call_operand.vmem [shape: f32[2,8,1], index: 0, kind: input, shape index: {}]
  %s1 = inlined_call_operand.vmem [shape: f32[1,32], index: 1, kind: input, shape index: {}]
  %s2 = inlined_call_operand.vmem [shape: f32[1,32], index: 2, kind: input, shape index: {}]
  %s3 = inlined_call_operand.vmem [shape: f32[8,32], index: 3, kind: input, shape index: {}]
  %s4 = inlined_call_operand.vmem [shape: f32[2,8,32], index: 4, kind: output, shape index: {}]
  %s5 = sld [smem:[#allocation0]]
  $region49: #{transformer_forward.12} parent=0
    _
  %s7 = ssub.s32 1, %s5
  %s8 = scalar_select 0, %s7, %s5
  loop: start=0, step=1, limit=4
  $region2: #{transformer_forward.12} parent=0 // loop_pre_header
    _
  $region3: #{transformer_forward.12} parent=0 // loop_header
    %s10 = sphi 0, %s14
    %p11 = scmp.ge.s32.totalorder %s10, 4
    %s20 = sphi 0, %s22
    %s23 = sphi 0, %s20
    %s24 = sphi 0, %s23
    %s40 = sphi 0, %s24
    %s44 = sphi 0, %s44
    %s46 = sphi 0, %s44
    %s47 = sphi 0, %s46
    %s61 = sphi 0, %s47
    %s65 = sphi 0, %s65
    %s67 = sphi 0, %s65
    %s68 = sphi 0, %s67
    %s82 = sphi 0, %s68
    %s86 = sphi 0, %s86
    %s88 = sphi 0, %s86
    %s89 = sphi 0, %s88
    %s103 = sphi 0, %s89
    %s109 = sphi 0, %s111
    %s112 = sphi 0, %s109
    %s113 = sphi 0, %s112
    %s129 = sphi 0, %s113
  $region4: #{transformer_forward.12} parent=0 // loop_header_branch
    %13 = sbr.rel (%p11) target = $region8
  $region5: #{transformer_forward.12} parent=0 // loop_body
    %s15 = ssub.s32 %s10, 1
    %s16 = ssub.s32 %s10, 2
    %s17 = sadd.s32 %s10, 1
    %s18 = ssub.s32 %s10, %s17
    %p19 = scmp.eq.s32.totalorder %s18, 0
    %s21 = sadd.s32 %s20, 1
    %s22 = scalar_select %p19, %s20, %s21
    %p25 = pneg %p19
    %p26 = scmp.eq.s32.totalorder %s10, 1
    %p27 = por %p25, %p26
    %p28 = scmp.ne.s32.totalorder %s20, %s23
    %p29 = scmp.eq.s32.totalorder %s10, 0
    %p30 = por %p28, %p29
    %p31 = scmp.ne.s32.totalorder %s20, %s23
    %p32 = scmp.eq.s32.totalorder %s15, 1
    %p33 = por %p31, %p32
    %p34 = scmp.ne.s32.totalorder %s23, %s24
    %p35 = scmp.eq.s32.totalorder %s15, 0
    %p36 = por %p34, %p35
    %p37 = scmp.ne.s32.totalorder %s23, %s24
    %p38 = scmp.eq.s32.totalorder %s16, 1
    %p39 = por %p37, %p38
    %p41 = scmp.ne.s32.totalorder %s24, %s40
    %p42 = scmp.eq.s32.totalorder %s16, 0
    %p43 = por %p41, %p42
    %s45 = sadd.s32 %s44, 1
    %p48 = scmp.eq.s32.totalorder %s10, 1
    %p49 = scmp.ne.s32.totalorder %s44, %s46
    %p50 = scmp.eq.s32.totalorder %s10, 0
    %p51 = por %p49, %p50
    %p52 = scmp.ne.s32.totalorder %s44, %s46
    %p53 = scmp.eq.s32.totalorder %s15, 1
    %p54 = por %p52, %p53
    %p55 = scmp.ne.s32.totalorder %s46, %s47
    %p56 = scmp.eq.s32.totalorder %s15, 0
    %p57 = por %p55, %p56
    %p58 = scmp.ne.s32.totalorder %s46, %s47
    %p59 = scmp.eq.s32.totalorder %s16, 1
    %p60 = por %p58, %p59
    %p62 = scmp.ne.s32.totalorder %s47, %s61
    %p63 = scmp.eq.s32.totalorder %s16, 0
    %p64 = por %p62, %p63
    %s66 = sadd.s32 %s65, 1
    %p69 = scmp.eq.s32.totalorder %s10, 1
    %p70 = scmp.ne.s32.totalorder %s65, %s67
    %p71 = scmp.eq.s32.totalorder %s10, 0
    %p72 = por %p70, %p71
    %p73 = scmp.ne.s32.totalorder %s65, %s67
    %p74 = scmp.eq.s32.totalorder %s15, 1
    %p75 = por %p73, %p74
    %p76 = scmp.ne.s32.totalorder %s67, %s68
    %p77 = scmp.eq.s32.totalorder %s15, 0
    %p78 = por %p76, %p77
    %p79 = scmp.ne.s32.totalorder %s67, %s68
    %p80 = scmp.eq.s32.totalorder %s16, 1
    %p81 = por %p79, %p80
    %p83 = scmp.ne.s32.totalorder %s68, %s82
    %p84 = scmp.eq.s32.totalorder %s16, 0
    %p85 = por %p83, %p84
    %s87 = sadd.s32 %s86, 1
    %p90 = scmp.eq.s32.totalorder %s10, 1
    %p91 = scmp.ne.s32.totalorder %s86, %s88
    %p92 = scmp.eq.s32.totalorder %s10, 0
    %p93 = por %p91, %p92
    %p94 = scmp.ne.s32.totalorder %s86, %s88
    %p95 = scmp.eq.s32.totalorder %s15, 1
    %p96 = por %p94, %p95
    %p97 = scmp.ne.s32.totalorder %s88, %s89
    %p98 = scmp.eq.s32.totalorder %s15, 0
    %p99 = por %p97, %p98
    %p100 = scmp.ne.s32.totalorder %s88, %s89
    %p101 = scmp.eq.s32.totalorder %s16, 1
    %p102 = por %p100, %p101
    %p104 = scmp.ne.s32.totalorder %s89, %s103
    %p105 = scmp.eq.s32.totalorder %s16, 0
    %p106 = por %p104, %p105
    %s107 = ssub.s32 %s10, %s17
    %p108 = scmp.eq.s32.totalorder %s107, 0
    %s110 = sadd.s32 %s109, 1
    %s111 = scalar_select %p108, %s109, %s110
    %p114 = pneg %p108
    %p115 = scmp.eq.s32.totalorder %s10, 1
    %p116 = por %p114, %p115
    %p117 = scmp.ne.s32.totalorder %s109, %s112
    %p118 = scmp.eq.s32.totalorder %s10, 0
    %p119 = por %p117, %p118
    %p120 = scmp.ne.s32.totalorder %s109, %s112
    %p121 = scmp.eq.s32.totalorder %s15, 1
    %p122 = por %p120, %p121
    %p123 = scmp.ne.s32.totalorder %s112, %s113
    %p124 = scmp.eq.s32.totalorder %s15, 0
    %p125 = por %p123, %p124
    %p126 = scmp.ne.s32.totalorder %s112, %s113
    %p127 = scmp.eq.s32.totalorder %s16, 1
    %p128 = por %p126, %p127
    %p130 = scmp.ne.s32.totalorder %s113, %s129
    %p131 = scmp.eq.s32.totalorder %s16, 0
    %p132 = por %p130, %p131
    %p133 = scmp.le.s32.totalorder 1, %s10
    %p134 = scmp.lt.s32.totalorder %s10, 3
    %p135 = pnand %p133, %p134
    %p136 = pneg %p135
    // Predicated region
    $region9: #{transformer_forward.12} parent=5 // pred_check
      _
    $region10: #{transformer_forward.12} parent=5 // pred_check_branch
      %138 = sbr.rel (%p135) target = $region12
    $region11: #{transformer_forward.12} parent=5 // pred_region
      %s139 = ssub.s32 %s10, 1
      // Predicated region
      $region13: #{transformer_forward.12} parent=11 // pred_check
        %p140 = pneg %p57
      $region14: #{transformer_forward.12} parent=11 // pred_check_branch
        %142 = sbr.rel (%p140) target = $region16
      $region15: #{transformer_forward.12} parent=11 // pred_region
        _
      $region16: #{transformer_forward.12} parent=11 // pred_fallthru
        _
      // Predicated region
      $region17: #{transformer_forward.12} parent=11 // pred_check
        %p143 = pneg %p78
      $region18: #{transformer_forward.12} parent=11 // pred_check_branch
        %145 = sbr.rel (%p143) target = $region20
      $region19: #{transformer_forward.12} parent=11 // pred_region
        _
      $region20: #{transformer_forward.12} parent=11 // pred_fallthru
        _
      // Predicated region
      $region21: #{transformer_forward.12} parent=11 // pred_check
        %p146 = pneg %p99
      $region22: #{transformer_forward.12} parent=11 // pred_check_branch
        %148 = sbr.rel (%p146) target = $region24
      $region23: #{transformer_forward.12} parent=11 // pred_region
        _
      $region24: #{transformer_forward.12} parent=11 // pred_fallthru
        _
    $region12: #{transformer_forward.12} parent=5 // pred_fallthru
      _
    %p149 = scmp.lt.s32.totalorder %s10, 2
    // Predicated region
    $region25: #{transformer_forward.12} parent=5 // pred_check
      %p150 = pneg %p149
    $region26: #{transformer_forward.12} parent=5 // pred_check_branch
      %152 = sbr.rel (%p150) target = $region28
    $region27: #{transformer_forward.12} parent=5 // pred_region
      // Predicated region
      $region29: #{transformer_forward.12} parent=27 // pred_check
        %p153 = pneg %p30
      $region30: #{transformer_forward.12} parent=27 // pred_check_branch
        %155 = sbr.rel (%p153) target = $region32
      $region31: #{transformer_forward.12} parent=27 // pred_region
        %p156 = scmp.lt.s32.totalorder %s10, 1
        %s157 = scalar_select %p156, %s10, 1
        %s158 = smul.addr %s157, 8
        %s159 = scalar_lea.vmem %s0, %s158
      $region32: #{transformer_forward.12} parent=27 // pred_fallthru
        _
    $region28: #{transformer_forward.12} parent=5 // pred_fallthru
      _
    %p160 = scmp.le.s32.totalorder 1, %s10
    %p161 = scmp.lt.s32.totalorder %s10, 3
    %p162 = pnand %p160, %p161
    %p163 = pneg %p162
    // Predicated region
    $region33: #{transformer_forward.12} parent=5 // pred_check
      _
    $region34: #{transformer_forward.12} parent=5 // pred_check_branch
      %165 = sbr.rel (%p162) target = $region36
    $region35: #{transformer_forward.12} parent=5 // pred_region
      %s166 = ssub.s32 %s10, 1
      %p167 = scmp.lt.s32.totalorder %s15, 1
      %s168 = scalar_select %p167, %s15, 1
      %s169 = smul.addr %s168, 8
      %s170 = scalar_lea.vmem %s0, %s169
      %p171 = pneg %p36
      %p172 = pneg %p33
      %p173 = pneg %p57
      %p174 = pneg %p54
      %p175 = pneg %p78
      %p176 = pneg %p75
      %p177 = pneg %p99
      %p178 = pneg %p96
      %p179 = pneg %p125
      %p180 = pneg %p122
      %p181 = scmp.lt.s32.totalorder %s15, 1
      %s182 = scalar_select %p181, %s15, 1
      %s183 = smul.addr %s182, 8
      %s184 = scalar_lea.vmem %s4, %s183
      %p185 = scmp.lt.s32.totalorder %s15, 1
      %s186 = scalar_select %p185, %s15, 1
      %s187 = smul.addr %s186, 8
      %s188 = scalar_lea.vmem %s0, %s187
      %p189 = scmp.lt.s32.totalorder %s15, 1
      %s190 = scalar_select %p189, %s15, 1
      %s191 = smul.addr %s190, 8
      %s192 = scalar_lea.vmem %s4, %s191
      %v193 = vld [vmem:[%s188] sm:$0xff]
      %v194 = vld [vmem:[%s1] sm:$0x1]
      %196 = vset.pattern.permute.xlu0 0
      %197 = vperm.xlu0 %196, %v193
      %v198 = vpop.permute.xlu0 %197
      %v201 = vlaneseq
      %v202 = vshrl.u32 %v201, 7
      %v203 = vsub.s32 0, %v202
      %v204 = vrot.slane %v194, %v203
      %v206 = vmul.f32 %v198, %v204
      %v207 = vld [vmem:[%s2] sm:$0x1]
      %v209 = vlaneseq
      %v210 = vshrl.u32 %v209, 7
      %v211 = vsub.s32 0, %v210
      %v212 = vrot.slane %v207, %v211
      %v214 = vadd.f32 %v206, %v212
      %v215 = vld [vmem:[%s3] sm:$0xff]
      %v216 = vadd.f32 %v214, %v215
      %vm217 = vcmask 261120
      %218 = vst.msk [vmem:[%s192] sm:$0xff] %vm217, %v216
      %p219 = scmp.lt.s32.totalorder %s15, 1
      %s220 = scalar_select %p219, %s15, 1
      %s221 = smul.addr %s220, 8
      %s222 = scalar_lea.vmem %s4, %s221
      // Predicated region
      $region37: #{transformer_forward.12} parent=35 // pred_check
        %p223 = pneg %p122
      $region38: #{transformer_forward.12} parent=35 // pred_check_branch
        %225 = sbr.rel (%p223) target = $region40
      $region39: #{transformer_forward.12} parent=35 // pred_region
        _
      $region40: #{transformer_forward.12} parent=35 // pred_fallthru
        _
    $region36: #{transformer_forward.12} parent=5 // pred_fallthru
      _
    %p226 = scmp.le.s32.totalorder 2, %s10
    // Predicated region
    $region41: #{transformer_forward.12} parent=5 // pred_check
      %p227 = pneg %p226
    $region42: #{transformer_forward.12} parent=5 // pred_check_branch
      %229 = sbr.rel (%p227) target = $region44
    $region43: #{transformer_forward.12} parent=5 // pred_region
      %s230 = ssub.s32 %s10, 2
      // Predicated region
      $region45: #{transformer_forward.12} parent=43 // pred_check
        %p231 = pneg %p128
      $region46: #{transformer_forward.12} parent=43 // pred_check_branch
        %233 = sbr.rel (%p231) target = $region48
      $region47: #{transformer_forward.12} parent=43 // pred_region
        %p234 = scmp.lt.s32.totalorder %s16, 1
        %s235 = scalar_select %p234, %s16, 1
        %s236 = smul.addr %s235, 8
        %s237 = scalar_lea.vmem %s4, %s236
      $region48: #{transformer_forward.12} parent=43 // pred_fallthru
        _
    $region44: #{transformer_forward.12} parent=5 // pred_fallthru
      _
  $region6: #{transformer_forward.12} parent=0 // loop_footer
    %s14 = sadd.s32 1, %s10
  $region7: #{transformer_forward.12} parent=0 // loop_footer_branch
    %9 = sbr.rel target = $region3
  $region8: #{transformer_forward.12} parent=0 // loop_exit
    _

// kernel: transformer_forward.13
$region0: #{transformer_forward.13}
  #allocation0 [shape = 'u32[]', space=smem, size = 0x4, offset = 0x4, fixed_abs, tag = 'smem constant byte address 0x4 - core index']
  #allocation1 [shape = 'u32[144,128]{1,0:T(1,128)}', space=vmem, size = 0x12000, scoped, tag = 'internal scratch']
  %s0 = inlined_call_operand.vmem [shape: f32[16,32], index: 0, kind: input, shape index: {}]
  %s1 = inlined_call_operand.vmem [shape: bf16[32,96], index: 1, kind: input, shape index: {}]
  %s2 = inlined_call_operand.vmem [shape: f32[1,96], index: 2, kind: input, shape index: {}]
  %s3 = inlined_call_operand.vmem [shape: f32[16,32], index: 3, kind: output, shape index: {0}]
  %s4 = inlined_call_operand.vmem [shape: f32[16,32], index: 4, kind: output, shape index: {1}]
  %s5 = inlined_call_operand.vmem [shape: f32[16,32], index: 5, kind: output, shape index: {2}]
  %6 = xla_tuple %s3, %s4, %s5
  %s7 = sld [smem:[#allocation0]]
  $region38: #{transformer_forward.13} parent=0
    _
  %s9 = ssub.s32 1, %s7
  %s10 = scalar_select 0, %s9, %s7
  // Predicated region
  $region2: #{transformer_forward.13} parent=0 // pred_check
    _
  $region3: #{transformer_forward.13} parent=0 // pred_check_branch
    %12 = sbr.rel (0) target = $region5
  $region4: #{transformer_forward.13} parent=0 // pred_region
    _
  $region5: #{transformer_forward.13} parent=0 // pred_fallthru
    _
  // Predicated region
  $region6: #{transformer_forward.13} parent=0 // pred_check
    _
  $region7: #{transformer_forward.13} parent=0 // pred_check_branch
    %14 = sbr.rel (0) target = $region9
  $region8: #{transformer_forward.13} parent=0 // pred_region
    _
  $region9: #{transformer_forward.13} parent=0 // pred_fallthru
    _
  // Predicated region
  $region10: #{transformer_forward.13} parent=0 // pred_check
    _
  $region11: #{transformer_forward.13} parent=0 // pred_check_branch
    %16 = sbr.rel (0) target = $region13
  $region12: #{transformer_forward.13} parent=0 // pred_region
    _
  $region13: #{transformer_forward.13} parent=0 // pred_fallthru
    _
  %v18 = vld [vmem:[%s0] sm:$0xff]
  %v19 = vld [vmem:[%s0 + $0x8] sm:$0xff]
  %v20 = vpack.c.bf16 %v19, %v18
  %v21 = vld [vmem:[%s1] sm:$0xf]
  %v22 = vld [vmem:[%s1 + $0x4] sm:$0xf]
  %v23 = vld [vmem:[%s1 + $0x8] sm:$0xf]
  %v24 = vld [vmem:[%s1 + $0xc] sm:$0xf]
  %v25 = vld [vmem:[%s2] sm:$0x1]
  %v27 = vlaneseq
  %v28 = vshrl.u32 %v27, 7
  %v29 = vsub.s32 0, %v28
  %v30 = vrot.slane %v25, %v29
  %v36 = vunpack.c.l.b16 %v21
  %v37 = vunpack.c.l.b16 %v22
  %v38 = vunpack.c.l.b16 %v23
  %v39 = vunpack.c.l.b16 %v24
  %v40 = vpack.c.b16 %v37, %v36
  %v41 = vpack.c.b16 %v39, %v38
  %vm44 = vcmask 261120
  %v46 = vsel %vm44, %v20, 0
  %48 = vmatprep.subr.bf16.mxu0 0
  %49 = vmatpush1.bf16.msra.mxu0 %v40
  %50 = vmatprep.subr.bf16.mxu0 0
  %51 = vmatpush1.bf16.msra.mxu0 %v41
  %52 = vmatprep.subr.bf16.mxu0 0
  %53 = vmatpush1.bf16.msra.mxu0 0
  %54 = vmatprep.subr.bf16.mxu0 0
  %55 = vmatpush1.bf16.msra.mxu0 0
  %56 = vmatprep.subr.bf16.mxu0 0
  %57 = vmatpush1.bf16.msra.mxu0 0
  %58 = vmatprep.subr.bf16.mxu0 0
  %59 = vmatpush1.bf16.msra.mxu0 0
  %60 = vmatprep.subr.bf16.mxu0 0
  %61 = vmatpush1.bf16.msra.mxu0 0
  %62 = vmatprep.subr.bf16.mxu0 0
  %63 = vmatpush1.bf16.msra.mxu0 0
  %64 = vmatprep.subr.bf16.mxu0 0
  %65 = vmatpush1.bf16.msra.mxu0 0
  %66 = vmatprep.subr.bf16.mxu0 0
  %67 = vmatpush1.bf16.msra.mxu0 0
  %68 = vmatprep.subr.bf16.mxu0 0
  %69 = vmatpush1.bf16.msra.mxu0 0
  %70 = vmatprep.subr.bf16.mxu0 0
  %71 = vmatpush1.bf16.msra.mxu0 0
  %72 = vmatprep.subr.bf16.mxu0 0
  %73 = vmatpush1.bf16.msra.mxu0 0
  %74 = vmatprep.subr.bf16.mxu0 0
  %75 = vmatpush1.bf16.msra.mxu0 0
  %76 = vmatprep.subr.bf16.mxu0 0
  %77 = vmatpush1.bf16.msra.mxu0 0
  %78 = vmatprep.subr.bf16.mxu0 0
  %79 = vmatpush1.bf16.msra.mxu0 0
  %80 = vmatprep.mubr.bf16.mxu0 0
  %81 = vmatmul.mubr.bf16.gmra.mrb[0].mxu0 %v46
  %v82 = vpop.f32.mrb[0].mxu0
  %v83 = vadd.f32 %v30, %v82
  %v84 = vpop.f32.mrb[0].mxu0
  %v85 = vpop.f32.mrb[0].mxu0
  %v86 = vadd.f32 %v30, %v85
  %v87 = vpop.f32.mrb[0].mxu0
  %88 = vdwg.mxu0
  %89 = vst.msk [vmem:[%s3] sm:$0xff] %vm44, %v83
  %90 = vst.msk [vmem:[%s3 + $0x8] sm:$0xff] %vm44, %v86
  %93 = vrot.lane.b32.xlu0 %v83, 96
  %v94 = vpop.permute.xlu0 %93
  %95 = vrot.lane.b32.xlu0 %v86, 96
  %v96 = vpop.permute.xlu0 %95
  %99 = vst.msk [vmem:[%s4] sm:$0xff] %vm44, %v94
  %100 = vst.msk [vmem:[%s4 + $0x8] sm:$0xff] %vm44, %v96
  %101 = vrot.lane.b32.xlu0 %v83, 64
  %v102 = vpop.permute.xlu0 %101
  %103 = vrot.lane.b32.xlu0 %v86, 64
  %v104 = vpop.permute.xlu0 %103
  %107 = vst.msk [vmem:[%s5] sm:$0xff] %vm44, %v102
  %108 = vst.msk [vmem:[%s5 + $0x8] sm:$0xff] %vm44, %v104
  // Predicated region
  $region14: #{transformer_forward.13} parent=0 // pred_check
    _
  $region15: #{transformer_forward.13} parent=0 // pred_check_branch
    %110 = sbr.rel (0) target = $region17
  $region16: #{transformer_forward.13} parent=0 // pred_region
    _
  $region17: #{transformer_forward.13} parent=0 // pred_fallthru
    _
  // Predicated region
  $region18: #{transformer_forward.13} parent=0 // pred_check
    _
  $region19: #{transformer_forward.13} parent=0 // pred_check_branch
    %112 = sbr.rel (0) target = $region21
  $region20: #{transformer_forward.13} parent=0 // pred_region
    _
  $region21: #{transformer_forward.13} parent=0 // pred_fallthru
    _
  // Predicated region
  $region22: #{transformer_forward.13} parent=0 // pred_check
    _
  $region23: #{transformer_forward.13} parent=0 // pred_check_branch
    %114 = sbr.rel (0) target = $region25
  $region24: #{transformer_forward.13} parent=0 // pred_region
    _
  $region25: #{transformer_forward.13} parent=0 // pred_fallthru
    _
  // Predicated region
  $region26: #{transformer_forward.13} parent=0 // pred_check
    _
  $region27: #{transformer_forward.13} parent=0 // pred_check_branch
    %116 = sbr.rel (0) target = $region29
  $region28: #{transformer_forward.13} parent=0 // pred_region
    _
  $region29: #{transformer_forward.13} parent=0 // pred_fallthru
    _
  // Predicated region
  $region30: #{transformer_forward.13} parent=0 // pred_check
    _
  $region31: #{transformer_forward.13} parent=0 // pred_check_branch
    %118 = sbr.rel (0) target = $region33
  $region32: #{transformer_forward.13} parent=0 // pred_region
    _
  $region33: #{transformer_forward.13} parent=0 // pred_fallthru
    _
  // Predicated region
  $region34: #{transformer_forward.13} parent=0 // pred_check
    _
  $region35: #{transformer_forward.13} parent=0 // pred_check_branch
    %120 = sbr.rel (0) target = $region37
  $region36: #{transformer_forward.13} parent=0 // pred_region
    _
  $region37: #{transformer_forward.13} parent=0 // pred_fallthru
    _

// kernel: transformer_forward.14
$region0: #{transformer_forward.14}
  #allocation0 [shape = 'u32[]', space=smem, size = 0x4, offset = 0x4, fixed_abs, tag = 'smem constant byte address 0x4 - core index']
  #allocation1 [shape = 'u32[144,128]{1,0:T(1,128)}', space=vmem, size = 0x12000, scoped, tag = 'internal scratch']
  %s0 = inlined_call_operand.vmem [shape: f32[2,8,32], index: 0, kind: input, shape index: {}]
  %s1 = inlined_call_operand.vmem [shape: f32[2,8,32], index: 1, kind: input, shape index: {}]
  %s2 = inlined_call_operand.vmem [shape: f32[2,8,32], index: 2, kind: input, shape index: {}]
  %s3 = inlined_call_operand.vmem [shape: f32[2,8,32], index: 3, kind: output, shape index: {}]
  %s4 = sld [smem:[#allocation0]]
  $region45: #{transformer_forward.14} parent=0
    _
  %s6 = ssub.s32 1, %s4
  %s7 = scalar_select 0, %s6, %s4
  loop: start=0, step=1, limit=4
  $region2: #{transformer_forward.14} parent=0 // loop_pre_header
    _
  $region3: #{transformer_forward.14} parent=0 // loop_header
    %s9 = sphi 0, %s13
    %p10 = scmp.ge.s32.totalorder %s9, 4
    %s19 = sphi 0, %s21
    %s22 = sphi 0, %s19
    %s23 = sphi 0, %s22
    %s39 = sphi 0, %s23
    %s45 = sphi 0, %s47
    %s48 = sphi 0, %s45
    %s49 = sphi 0, %s48
    %s65 = sphi 0, %s49
    %s71 = sphi 0, %s73
    %s74 = sphi 0, %s71
    %s75 = sphi 0, %s74
    %s91 = sphi 0, %s75
    %s97 = sphi 0, %s99
    %s100 = sphi 0, %s97
    %s101 = sphi 0, %s100
    %s117 = sphi 0, %s101
  $region4: #{transformer_forward.14} parent=0 // loop_header_branch
    %12 = sbr.rel (%p10) target = $region8
  $region5: #{transformer_forward.14} parent=0 // loop_body
    %s14 = ssub.s32 %s9, 1
    %s15 = ssub.s32 %s9, 2
    %s16 = sadd.s32 %s9, 1
    %s17 = ssub.s32 %s9, %s16
    %p18 = scmp.eq.s32.totalorder %s17, 0
    %s20 = sadd.s32 %s19, 1
    %s21 = scalar_select %p18, %s19, %s20
    %p24 = pneg %p18
    %p25 = scmp.eq.s32.totalorder %s9, 1
    %p26 = por %p24, %p25
    %p27 = scmp.ne.s32.totalorder %s19, %s22
    %p28 = scmp.eq.s32.totalorder %s9, 0
    %p29 = por %p27, %p28
    %p30 = scmp.ne.s32.totalorder %s19, %s22
    %p31 = scmp.eq.s32.totalorder %s14, 1
    %p32 = por %p30, %p31
    %p33 = scmp.ne.s32.totalorder %s22, %s23
    %p34 = scmp.eq.s32.totalorder %s14, 0
    %p35 = por %p33, %p34
    %p36 = scmp.ne.s32.totalorder %s22, %s23
    %p37 = scmp.eq.s32.totalorder %s15, 1
    %p38 = por %p36, %p37
    %p40 = scmp.ne.s32.totalorder %s23, %s39
    %p41 = scmp.eq.s32.totalorder %s15, 0
    %p42 = por %p40, %p41
    %s43 = ssub.s32 %s9, %s16
    %p44 = scmp.eq.s32.totalorder %s43, 0
    %s46 = sadd.s32 %s45, 1
    %s47 = scalar_select %p44, %s45, %s46
    %p50 = pneg %p44
    %p51 = scmp.eq.s32.totalorder %s9, 1
    %p52 = por %p50, %p51
    %p53 = scmp.ne.s32.totalorder %s45, %s48
    %p54 = scmp.eq.s32.totalorder %s9, 0
    %p55 = por %p53, %p54
    %p56 = scmp.ne.s32.totalorder %s45, %s48
    %p57 = scmp.eq.s32.totalorder %s14, 1
    %p58 = por %p56, %p57
    %p59 = scmp.ne.s32.totalorder %s48, %s49
    %p60 = scmp.eq.s32.totalorder %s14, 0
    %p61 = por %p59, %p60
    %p62 = scmp.ne.s32.totalorder %s48, %s49
    %p63 = scmp.eq.s32.totalorder %s15, 1
    %p64 = por %p62, %p63
    %p66 = scmp.ne.s32.totalorder %s49, %s65
    %p67 = scmp.eq.s32.totalorder %s15, 0
    %p68 = por %p66, %p67
    %s69 = ssub.s32 %s9, %s16
    %p70 = scmp.eq.s32.totalorder %s69, 0
    %s72 = sadd.s32 %s71, 1
    %s73 = scalar_select %p70, %s71, %s72
    %p76 = pneg %p70
    %p77 = scmp.eq.s32.totalorder %s9, 1
    %p78 = por %p76, %p77
    %p79 = scmp.ne.s32.totalorder %s71, %s74
    %p80 = scmp.eq.s32.totalorder %s9, 0
    %p81 = por %p79, %p80
    %p82 = scmp.ne.s32.totalorder %s71, %s74
    %p83 = scmp.eq.s32.totalorder %s14, 1
    %p84 = por %p82, %p83
    %p85 = scmp.ne.s32.totalorder %s74, %s75
    %p86 = scmp.eq.s32.totalorder %s14, 0
    %p87 = por %p85, %p86
    %p88 = scmp.ne.s32.totalorder %s74, %s75
    %p89 = scmp.eq.s32.totalorder %s15, 1
    %p90 = por %p88, %p89
    %p92 = scmp.ne.s32.totalorder %s75, %s91
    %p93 = scmp.eq.s32.totalorder %s15, 0
    %p94 = por %p92, %p93
    %s95 = ssub.s32 %s9, %s16
    %p96 = scmp.eq.s32.totalorder %s95, 0
    %s98 = sadd.s32 %s97, 1
    %s99 = scalar_select %p96, %s97, %s98
    %p102 = pneg %p96
    %p103 = scmp.eq.s32.totalorder %s9, 1
    %p104 = por %p102, %p103
    %p105 = scmp.ne.s32.totalorder %s97, %s100
    %p106 = scmp.eq.s32.totalorder %s9, 0
    %p107 = por %p105, %p106
    %p108 = scmp.ne.s32.totalorder %s97, %s100
    %p109 = scmp.eq.s32.totalorder %s14, 1
    %p110 = por %p108, %p109
    %p111 = scmp.ne.s32.totalorder %s100, %s101
    %p112 = scmp.eq.s32.totalorder %s14, 0
    %p113 = por %p111, %p112
    %p114 = scmp.ne.s32.totalorder %s100, %s101
    %p115 = scmp.eq.s32.totalorder %s15, 1
    %p116 = por %p114, %p115
    %p118 = scmp.ne.s32.totalorder %s101, %s117
    %p119 = scmp.eq.s32.totalorder %s15, 0
    %p120 = por %p118, %p119
    %p121 = scmp.le.s32.totalorder 1, %s9
    %p122 = scmp.lt.s32.totalorder %s9, 3
    %p123 = pnand %p121, %p122
    %p124 = pneg %p123
    // Predicated region
    $region9: #{transformer_forward.14} parent=5 // pred_check
      _
    $region10: #{transformer_forward.14} parent=5 // pred_check_branch
      %126 = sbr.rel (%p123) target = $region12
    $region11: #{transformer_forward.14} parent=5 // pred_region
      %s127 = ssub.s32 %s9, 1
    $region12: #{transformer_forward.14} parent=5 // pred_fallthru
      _
    %p128 = scmp.lt.s32.totalorder %s9, 2
    // Predicated region
    $region13: #{transformer_forward.14} parent=5 // pred_check
      %p129 = pneg %p128
    $region14: #{transformer_forward.14} parent=5 // pred_check_branch
      %131 = sbr.rel (%p129) target = $region16
    $region15: #{transformer_forward.14} parent=5 // pred_region
      // Predicated region
      $region17: #{transformer_forward.14} parent=15 // pred_check
        %p132 = pneg %p29
      $region18: #{transformer_forward.14} parent=15 // pred_check_branch
        %134 = sbr.rel (%p132) target = $region20
      $region19: #{transformer_forward.14} parent=15 // pred_region
        %p135 = scmp.lt.s32.totalorder %s9, 1
        %s136 = scalar_select %p135, %s9, 1
        %s137 = smul.addr %s136, 8
        %s138 = scalar_lea.vmem %s0, %s137
      $region20: #{transformer_forward.14} parent=15 // pred_fallthru
        _
      // Predicated region
      $region21: #{transformer_forward.14} parent=15 // pred_check
        %p139 = pneg %p55
      $region22: #{transformer_forward.14} parent=15 // pred_check_branch
        %141 = sbr.rel (%p139) target = $region24
      $region23: #{transformer_forward.14} parent=15 // pred_region
        %p142 = scmp.lt.s32.totalorder %s9, 1
        %s143 = scalar_select %p142, %s9, 1
        %s144 = smul.addr %s143, 8
        %s145 = scalar_lea.vmem %s1, %s144
      $region24: #{transformer_forward.14} parent=15 // pred_fallthru
        _
      // Predicated region
      $region25: #{transformer_forward.14} parent=15 // pred_check
        %p146 = pneg %p81
      $region26: #{transformer_forward.14} parent=15 // pred_check_branch
        %148 = sbr.rel (%p146) target = $region28
      $region27: #{transformer_forward.14} parent=15 // pred_region
        %p149 = scmp.lt.s32.totalorder %s9, 1
        %s150 = scalar_select %p149, %s9, 1
        %s151 = smul.addr %s150, 8
        %s152 = scalar_lea.vmem %s2, %s151
      $region28: #{transformer_forward.14} parent=15 // pred_fallthru
        _
    $region16: #{transformer_forward.14} parent=5 // pred_fallthru
      _
    %p153 = scmp.le.s32.totalorder 1, %s9
    %p154 = scmp.lt.s32.totalorder %s9, 3
    %p155 = pnand %p153, %p154
    %p156 = pneg %p155
    // Predicated region
    $region29: #{transformer_forward.14} parent=5 // pred_check
      _
    $region30: #{transformer_forward.14} parent=5 // pred_check_branch
      %158 = sbr.rel (%p155) target = $region32
    $region31: #{transformer_forward.14} parent=5 // pred_region
      %s159 = ssub.s32 %s9, 1
      %p160 = scmp.lt.s32.totalorder %s14, 1
      %s161 = scalar_select %p160, %s14, 1
      %s162 = smul.addr %s161, 8
      %s163 = scalar_lea.vmem %s0, %s162
      %p164 = pneg %p35
      %p165 = pneg %p32
      %p166 = scmp.lt.s32.totalorder %s14, 1
      %s167 = scalar_select %p166, %s14, 1
      %s168 = smul.addr %s167, 8
      %s169 = scalar_lea.vmem %s1, %s168
      %p170 = pneg %p61
      %p171 = pneg %p58
      %p172 = scmp.lt.s32.totalorder %s14, 1
      %s173 = scalar_select %p172, %s14, 1
      %s174 = smul.addr %s173, 8
      %s175 = scalar_lea.vmem %s2, %s174
      %p176 = pneg %p87
      %p177 = pneg %p84
      %p178 = pneg %p113
      %p179 = pneg %p110
      %p180 = scmp.lt.s32.totalorder %s14, 1
      %s181 = scalar_select %p180, %s14, 1
      %s182 = smul.addr %s181, 8
      %s183 = scalar_lea.vmem %s3, %s182
      %p184 = scmp.lt.s32.totalorder %s14, 1
      %s185 = scalar_select %p184, %s14, 1
      %s186 = smul.addr %s185, 8
      %s187 = scalar_lea.vmem %s0, %s186
      %p188 = scmp.lt.s32.totalorder %s14, 1
      %s189 = scalar_select %p188, %s14, 1
      %s190 = smul.addr %s189, 8
      %s191 = scalar_lea.vmem %s1, %s190
      %p192 = scmp.lt.s32.totalorder %s14, 1
      %s193 = scalar_select %p192, %s14, 1
      %s194 = smul.addr %s193, 8
      %s195 = scalar_lea.vmem %s2, %s194
      %p196 = scmp.lt.s32.totalorder %s14, 1
      %s197 = scalar_select %p196, %s14, 1
      %s198 = smul.addr %s197, 8
      %s199 = scalar_lea.vmem %s3, %s198
      %v200 = vld [vmem:[%s187] sm:$0xff]
      %v201 = vmul.f32 %v200, 0.35355338
      %v202 = vld [vmem:[%s191] sm:$0xff]
      %v203 = vld [vmem:[%s195] sm:$0xff]
      %vm204 = vcmask 64512
      %v206 = vsel %vm204, %v201, 0
      %v209 = vsel %vm204, %v202, 0
      %211 = vmatprep.subr.mxu0 0.0
      %212 = vmatpush1.xpose.msra.mxu0 %v209
      %213 = vmatprep.subr.mxu0 0.0
      %214 = vmatpush1.xpose.msra.mxu0 0.0
      %215 = vmatprep.subr.mxu0 0.0
      %216 = vmatpush1.xpose.msra.mxu0 0.0
      %217 = vmatprep.subr.mxu0 0.0
      %218 = vmatpush1.xpose.msra.mxu0 0.0
      %219 = vmatprep.subr.mxu0 0.0
      %220 = vmatpush1.xpose.msra.mxu0 0.0
      %221 = vmatprep.subr.mxu0 0.0
      %222 = vmatpush1.xpose.msra.mxu0 0.0
      %223 = vmatprep.subr.mxu0 0.0
      %224 = vmatpush1.xpose.msra.mxu0 0.0
      %225 = vmatprep.subr.mxu0 0.0
      %226 = vmatpush1.xpose.msra.mxu0 0.0
      %227 = vmatprep.subr.mxu0 0.0
      %228 = vmatpush1.xpose.msra.mxu0 0.0
      %229 = vmatprep.subr.mxu0 0.0
      %230 = vmatpush1.xpose.msra.mxu0 0.0
      %231 = vmatprep.subr.mxu0 0.0
      %232 = vmatpush1.xpose.msra.mxu0 0.0
      %233 = vmatprep.subr.mxu0 0.0
      %234 = vmatpush1.xpose.msra.mxu0 0.0
      %235 = vmatprep.subr.mxu0 0.0
      %236 = vmatpush1.xpose.msra.mxu0 0.0
      %237 = vmatprep.subr.mxu0 0.0
      %238 = vmatpush1.xpose.msra.mxu0 0.0
      %239 = vmatprep.subr.mxu0 0.0
      %240 = vmatpush1.xpose.msra.mxu0 0.0
      %241 = vmatprep.subr.mxu0 0.0
      %242 = vmatpush1.xpose.msra.mxu0 0.0
      %243 = vmatprep.subr.mxu0 0.0
      %244 = vmatpush1.xpose.msra.mxu0 0.0
      %245 = vmatprep.subr.mxu0 0.0
      %246 = vmatpush1.xpose.msra.mxu0 0.0
      %247 = vmatprep.subr.mxu0 0.0
      %248 = vmatpush1.xpose.msra.mxu0 0.0
      %249 = vmatprep.subr.mxu0 0.0
      %250 = vmatpush1.xpose.msra.mxu0 0.0
      %251 = vmatprep.subr.mxu0 0.0
      %252 = vmatpush1.xpose.msra.mxu0 0.0
      %253 = vmatprep.subr.mxu0 0.0
      %254 = vmatpush1.xpose.msra.mxu0 0.0
      %255 = vmatprep.subr.mxu0 0.0
      %256 = vmatpush1.xpose.msra.mxu0 0.0
      %257 = vmatprep.subr.mxu0 0.0
      %258 = vmatpush1.xpose.msra.mxu0 0.0
      %259 = vmatprep.subr.mxu0 0.0
      %260 = vmatpush1.xpose.msra.mxu0 0.0
      %261 = vmatprep.subr.mxu0 0.0
      %262 = vmatpush1.xpose.msra.mxu0 0.0
      %263 = vmatprep.subr.mxu0 0.0
      %264 = vmatpush1.xpose.msra.mxu0 0.0
      %265 = vmatprep.subr.mxu0 0.0
      %266 = vmatpush1.xpose.msra.mxu0 0.0
      %267 = vmatprep.subr.mxu0 0.0
      %268 = vmatpush1.xpose.msra.mxu0 0.0
      %269 = vmatprep.subr.mxu0 0.0
      %270 = vmatpush1.xpose.msra.mxu0 0.0
      %271 = vmatprep.subr.mxu0 0.0
      %272 = vmatpush1.xpose.msra.mxu0 0.0
      %273 = vmatprep.subr.mxu0 0.0
      %274 = vmatpush1.xpose.msra.mxu0 0.0
      %275 = vmatprep.mubr.f32.mxu0 0.0
      %276 = vmatmul.mubr.f32.gmra.mrb[0].mxu0 %v206
      %v277 = vpop.f32.mrb[0].mxu0
      %v278 = vadd.f32 0.0, %v277
      %v279 = vpop.f32.mrb[0].mxu0
      %280 = vdwg.mxu0
      %v281 = vsel %vm204, %v278, -inf
      %282 = vmax.xlane.f32.xlu0 %v281
      %v283 = vpop.xlane.xlu0 %282
      %v284 = vsub.f32 %v278, %v283
      %v285 = vmul.f32 %v284, 1.442695
      %v286 = vpow.pop %v285
      %v287 = vsel %vm204, %v286, 0.0
      %288 = vadd.xlane.f32.xlu0 %v287
      %v289 = vpop.xlane.xlu0 %288
      %v290 = vrcp.pop %v289
      %v291 = vmul.f32 %v286, %v290
      %v293 = vsel %vm204, %v291, 0
      %295 = vmatprep.subr.mxu0 0.0
      %296 = vmatpush1.msra.mxu0 %v203
      %297 = vmatprep.subr.mxu0 0.0
      %298 = vmatpush1.msra.mxu0 0.0
      %299 = vmatprep.subr.mxu0 0.0
      %300 = vmatpush1.msra.mxu0 0.0
      %301 = vmatprep.subr.mxu0 0.0
      %302 = vmatpush1.msra.mxu0 0.0
      %303 = vmatprep.subr.mxu0 0.0
      %304 = vmatpush1.msra.mxu0 0.0
      %305 = vmatprep.subr.mxu0 0.0
      %306 = vmatpush1.msra.mxu0 0.0
      %307 = vmatprep.subr.mxu0 0.0
      %308 = vmatpush1.msra.mxu0 0.0
      %309 = vmatprep.subr.mxu0 0.0
      %310 = vmatpush1.msra.mxu0 0.0
      %311 = vmatprep.subr.mxu0 0.0
      %312 = vmatpush1.msra.mxu0 0.0
      %313 = vmatprep.subr.mxu0 0.0
      %314 = vmatpush1.msra.mxu0 0.0
      %315 = vmatprep.subr.mxu0 0.0
      %316 = vmatpush1.msra.mxu0 0.0
      %317 = vmatprep.subr.mxu0 0.0
      %318 = vmatpush1.msra.mxu0 0.0
      %319 = vmatprep.subr.mxu0 0.0
      %320 = vmatpush1.msra.mxu0 0.0
      %321 = vmatprep.subr.mxu0 0.0
      %322 = vmatpush1.msra.mxu0 0.0
      %323 = vmatprep.subr.mxu0 0.0
      %324 = vmatpush1.msra.mxu0 0.0
      %325 = vmatprep.subr.mxu0 0.0
      %326 = vmatpush1.msra.mxu0 0.0
      %327 = vmatprep.subr.mxu0 0.0
      %328 = vmatpush1.msra.mxu0 0.0
      %329 = vmatprep.subr.mxu0 0.0
      %330 = vmatpush1.msra.mxu0 0.0
      %331 = vmatprep.subr.mxu0 0.0
      %332 = vmatpush1.msra.mxu0 0.0
      %333 = vmatprep.subr.mxu0 0.0
      %334 = vmatpush1.msra.mxu0 0.0
      %335 = vmatprep.subr.mxu0 0.0
      %336 = vmatpush1.msra.mxu0 0.0
      %337 = vmatprep.subr.mxu0 0.0
      %338 = vmatpush1.msra.mxu0 0.0
      %339 = vmatprep.subr.mxu0 0.0
      %340 = vmatpush1.msra.mxu0 0.0
      %341 = vmatprep.subr.mxu0 0.0
      %342 = vmatpush1.msra.mxu0 0.0
      %343 = vmatprep.subr.mxu0 0.0
      %344 = vmatpush1.msra.mxu0 0.0
      %345 = vmatprep.subr.mxu0 0.0
      %346 = vmatpush1.msra.mxu0 0.0
      %347 = vmatprep.subr.mxu0 0.0
      %348 = vmatpush1.msra.mxu0 0.0
      %349 = vmatprep.subr.mxu0 0.0
      %350 = vmatpush1.msra.mxu0 0.0
      %351 = vmatprep.subr.mxu0 0.0
      %352 = vmatpush1.msra.mxu0 0.0
      %353 = vmatprep.subr.mxu0 0.0
      %354 = vmatpush1.msra.mxu0 0.0
      %355 = vmatprep.subr.mxu0 0.0
      %356 = vmatpush1.msra.mxu0 0.0
      %357 = vmatprep.subr.mxu0 0.0
      %358 = vmatpush1.msra.mxu0 0.0
      %359 = vmatprep.mubr.f32.mxu0 0.0
      %360 = vmatmul.mubr.f32.gmra.mrb[0].mxu0 %v293
      %v361 = vpop.f32.mrb[0].mxu0
      %v362 = vadd.f32 0.0, %v361
      %v363 = vpop.f32.mrb[0].mxu0
      %364 = vdwg.mxu0
      %365 = vrot.lane.b32.xlu0 %v201, 120
      %v366 = vpop.permute.xlu0 %365
      %367 = vrot.lane.b32.xlu0 %v202, 120
      %v368 = vpop.permute.xlu0 %367
      %v369 = vsel %vm204, %v366, 0
      %v371 = vsel %vm204, %v368, 0
      %373 = vmatprep.subr.mxu0 0.0
      %374 = vmatpush1.xpose.msra.mxu0 %v371
      %375 = vmatprep.subr.mxu0 0.0
      %376 = vmatpush1.xpose.msra.mxu0 0.0
      %377 = vmatprep.subr.mxu0 0.0
      %378 = vmatpush1.xpose.msra.mxu0 0.0
      %379 = vmatprep.subr.mxu0 0.0
      %380 = vmatpush1.xpose.msra.mxu0 0.0
      %381 = vmatprep.subr.mxu0 0.0
      %382 = vmatpush1.xpose.msra.mxu0 0.0
      %383 = vmatprep.subr.mxu0 0.0
      %384 = vmatpush1.xpose.msra.mxu0 0.0
      %385 = vmatprep.subr.mxu0 0.0
      %386 = vmatpush1.xpose.msra.mxu0 0.0
      %387 = vmatprep.subr.mxu0 0.0
      %388 = vmatpush1.xpose.msra.mxu0 0.0
      %389 = vmatprep.subr.mxu0 0.0
      %390 = vmatpush1.xpose.msra.mxu0 0.0
      %391 = vmatprep.subr.mxu0 0.0
      %392 = vmatpush1.xpose.msra.mxu0 0.0
      %393 = vmatprep.subr.mxu0 0.0
      %394 = vmatpush1.xpose.msra.mxu0 0.0
      %395 = vmatprep.subr.mxu0 0.0
      %396 = vmatpush1.xpose.msra.mxu0 0.0
      %397 = vmatprep.subr.mxu0 0.0
      %398 = vmatpush1.xpose.msra.mxu0 0.0
      %399 = vmatprep.subr.mxu0 0.0
      %400 = vmatpush1.xpose.msra.mxu0 0.0
      %401 = vmatprep.subr.mxu0 0.0
      %402 = vmatpush1.xpose.msra.mxu0 0.0
      %403 = vmatprep.subr.mxu0 0.0
      %404 = vmatpush1.xpose.msra.mxu0 0.0
      %405 = vmatprep.subr.mxu0 0.0
      %406 = vmatpush1.xpose.msra.mxu0 0.0
      %407 = vmatprep.subr.mxu0 0.0
      %408 = vmatpush1.xpose.msra.mxu0 0.0
      %409 = vmatprep.subr.mxu0 0.0
      %410 = vmatpush1.xpose.msra.mxu0 0.0
      %411 = vmatprep.subr.mxu0 0.0
      %412 = vmatpush1.xpose.msra.mxu0 0.0
      %413 = vmatprep.subr.mxu0 0.0
      %414 = vmatpush1.xpose.msra.mxu0 0.0
      %415 = vmatprep.subr.mxu0 0.0
      %416 = vmatpush1.xpose.msra.mxu0 0.0
      %417 = vmatprep.subr.mxu0 0.0
      %418 = vmatpush1.xpose.msra.mxu0 0.0
      %419 = vmatprep.subr.mxu0 0.0
      %420 = vmatpush1.xpose.msra.mxu0 0.0
      %421 = vmatprep.subr.mxu0 0.0
      %422 = vmatpush1.xpose.msra.mxu0 0.0
      %423 = vmatprep.subr.mxu0 0.0
      %424 = vmatpush1.xpose.msra.mxu0 0.0
      %425 = vmatprep.subr.mxu0 0.0
      %426 = vmatpush1.xpose.msra.mxu0 0.0
      %427 = vmatprep.subr.mxu0 0.0
      %428 = vmatpush1.xpose.msra.mxu0 0.0
      %429 = vmatprep.subr.mxu0 0.0
      %430 = vmatpush1.xpose.msra.mxu0 0.0
      %431 = vmatprep.subr.mxu0 0.0
      %432 = vmatpush1.xpose.msra.mxu0 0.0
      %433 = vmatprep.subr.mxu0 0.0
      %434 = vmatpush1.xpose.msra.mxu0 0.0
      %435 = vmatprep.subr.mxu0 0.0
      %436 = vmatpush1.xpose.msra.mxu0 0.0
      %437 = vmatprep.mubr.f32.mxu0 0.0
      %438 = vmatmul.mubr.f32.gmra.mrb[0].mxu0 %v369
      %v439 = vpop.f32.mrb[0].mxu0
      %v440 = vadd.f32 0.0, %v439
      %v441 = vpop.f32.mrb[0].mxu0
      %442 = vdwg.mxu0
      %v443 = vsel %vm204, %v440, -inf
      %444 = vmax.xlane.f32.xlu0 %v443
      %v445 = vpop.xlane.xlu0 %444
      %v446 = vsub.f32 %v440, %v445
      %v447 = vmul.f32 %v446, 1.442695
      %v448 = vpow.pop %v447
      %v449 = vsel %vm204, %v448, 0.0
      %450 = vadd.xlane.f32.xlu0 %v449
      %v451 = vpop.xlane.xlu0 %450
      %v452 = vrcp.pop %v451
      %v453 = vmul.f32 %v448, %v452
      %455 = vrot.lane.b32.xlu0 %v203, 120
      %v456 = vpop.permute.xlu0 %455
      %v459 = vsel %vm204, %v453, 0
      %461 = vmatprep.subr.mxu0 0.0
      %462 = vmatpush1.msra.mxu0 %v456
      %463 = vmatprep.subr.mxu0 0.0
      %464 = vmatpush1.msra.mxu0 0.0
      %465 = vmatprep.subr.mxu0 0.0
      %466 = vmatpush1.msra.mxu0 0.0
      %467 = vmatprep.subr.mxu0 0.0
      %468 = vmatpush1.msra.mxu0 0.0
      %469 = vmatprep.subr.mxu0 0.0
      %470 = vmatpush1.msra.mxu0 0.0
      %471 = vmatprep.subr.mxu0 0.0
      %472 = vmatpush1.msra.mxu0 0.0
      %473 = vmatprep.subr.mxu0 0.0
      %474 = vmatpush1.msra.mxu0 0.0
      %475 = vmatprep.subr.mxu0 0.0
      %476 = vmatpush1.msra.mxu0 0.0
      %477 = vmatprep.subr.mxu0 0.0
      %478 = vmatpush1.msra.mxu0 0.0
      %479 = vmatprep.subr.mxu0 0.0
      %480 = vmatpush1.msra.mxu0 0.0
      %481 = vmatprep.subr.mxu0 0.0
      %482 = vmatpush1.msra.mxu0 0.0
      %483 = vmatprep.subr.mxu0 0.0
      %484 = vmatpush1.msra.mxu0 0.0
      %485 = vmatprep.subr.mxu0 0.0
      %486 = vmatpush1.msra.mxu0 0.0
      %487 = vmatprep.subr.mxu0 0.0
      %488 = vmatpush1.msra.mxu0 0.0
      %489 = vmatprep.subr.mxu0 0.0
      %490 = vmatpush1.msra.mxu0 0.0
      %491 = vmatprep.subr.mxu0 0.0
      %492 = vmatpush1.msra.mxu0 0.0
      %493 = vmatprep.subr.mxu0 0.0
      %494 = vmatpush1.msra.mxu0 0.0
      %495 = vmatprep.subr.mxu0 0.0
      %496 = vmatpush1.msra.mxu0 0.0
      %497 = vmatprep.subr.mxu0 0.0
      %498 = vmatpush1.msra.mxu0 0.0
      %499 = vmatprep.subr.mxu0 0.0
      %500 = vmatpush1.msra.mxu0 0.0
      %501 = vmatprep.subr.mxu0 0.0
      %502 = vmatpush1.msra.mxu0 0.0
      %503 = vmatprep.subr.mxu0 0.0
      %504 = vmatpush1.msra.mxu0 0.0
      %505 = vmatprep.subr.mxu0 0.0
      %506 = vmatpush1.msra.mxu0 0.0
      %507 = vmatprep.subr.mxu0 0.0
      %508 = vmatpush1.msra.mxu0 0.0
      %509 = vmatprep.subr.mxu0 0.0
      %510 = vmatpush1.msra.mxu0 0.0
      %511 = vmatprep.subr.mxu0 0.0
      %512 = vmatpush1.msra.mxu0 0.0
      %513 = vmatprep.subr.mxu0 0.0
      %514 = vmatpush1.msra.mxu0 0.0
      %515 = vmatprep.subr.mxu0 0.0
      %516 = vmatpush1.msra.mxu0 0.0
      %517 = vmatprep.subr.mxu0 0.0
      %518 = vmatpush1.msra.mxu0 0.0
      %519 = vmatprep.subr.mxu0 0.0
      %520 = vmatpush1.msra.mxu0 0.0
      %521 = vmatprep.subr.mxu0 0.0
      %522 = vmatpush1.msra.mxu0 0.0
      %523 = vmatprep.subr.mxu0 0.0
      %524 = vmatpush1.msra.mxu0 0.0
      %525 = vmatprep.mubr.f32.mxu0 0.0
      %526 = vmatmul.mubr.f32.gmra.mrb[0].mxu0 %v459
      %v527 = vpop.f32.mrb[0].mxu0
      %v528 = vadd.f32 0.0, %v527
      %v529 = vpop.f32.mrb[0].mxu0
      %530 = vdwg.mxu0
      %531 = vrot.lane.b32.xlu0 %v201, 112
      %v532 = vpop.permute.xlu0 %531
      %533 = vrot.lane.b32.xlu0 %v202, 112
      %v534 = vpop.permute.xlu0 %533
      %v535 = vsel %vm204, %v532, 0
      %v537 = vsel %vm204, %v534, 0
      %539 = vmatprep.subr.mxu0 0.0
      %540 = vmatpush1.xpose.msra.mxu0 %v537
      %541 = vmatprep.subr.mxu0 0.0
      %542 = vmatpush1.xpose.msra.mxu0 0.0
      %543 = vmatprep.subr.mxu0 0.0
      %544 = vmatpush1.xpose.msra.mxu0 0.0
      %545 = vmatprep.subr.mxu0 0.0
      %546 = vmatpush1.xpose.msra.mxu0 0.0
      %547 = vmatprep.subr.mxu0 0.0
      %548 = vmatpush1.xpose.msra.mxu0 0.0
      %549 = vmatprep.subr.mxu0 0.0
      %550 = vmatpush1.xpose.msra.mxu0 0.0
      %551 = vmatprep.subr.mxu0 0.0
      %552 = vmatpush1.xpose.msra.mxu0 0.0
      %553 = vmatprep.subr.mxu0 0.0
      %554 = vmatpush1.xpose.msra.mxu0 0.0
      %555 = vmatprep.subr.mxu0 0.0
      %556 = vmatpush1.xpose.msra.mxu0 0.0
      %557 = vmatprep.subr.mxu0 0.0
      %558 = vmatpush1.xpose.msra.mxu0 0.0
      %559 = vmatprep.subr.mxu0 0.0
      %560 = vmatpush1.xpose.msra.mxu0 0.0
      %561 = vmatprep.subr.mxu0 0.0
      %562 = vmatpush1.xpose.msra.mxu0 0.0
      %563 = vmatprep.subr.mxu0 0.0
      %564 = vmatpush1.xpose.msra.mxu0 0.0
      %565 = vmatprep.subr.mxu0 0.0
      %566 = vmatpush1.xpose.msra.mxu0 0.0
      %567 = vmatprep.subr.mxu0 0.0
      %568 = vmatpush1.xpose.msra.mxu0 0.0
      %569 = vmatprep.subr.mxu0 0.0
      %570 = vmatpush1.xpose.msra.mxu0 0.0
      %571 = vmatprep.subr.mxu0 0.0
      %572 = vmatpush1.xpose.msra.mxu0 0.0
      %573 = vmatprep.subr.mxu0 0.0
      %574 = vmatpush1.xpose.msra.mxu0 0.0
      %575 = vmatprep.subr.mxu0 0.0
      %576 = vmatpush1.xpose.msra.mxu0 0.0
      %577 = vmatprep.subr.mxu0 0.0
      %578 = vmatpush1.xpose.msra.mxu0 0.0
      %579 = vmatprep.subr.mxu0 0.0
      %580 = vmatpush1.xpose.msra.mxu0 0.0
      %581 = vmatprep.subr.mxu0 0.0
      %582 = vmatpush1.xpose.msra.mxu0 0.0
      %583 = vmatprep.subr.mxu0 0.0
      %584 = vmatpush1.xpose.msra.mxu0 0.0
      %585 = vmatprep.subr.mxu0 0.0
      %586 = vmatpush1.xpose.msra.mxu0 0.0
      %587 = vmatprep.subr.mxu0 0.0
      %588 = vmatpush1.xpose.msra.mxu0 0.0
      %589 = vmatprep.subr.mxu0 0.0
      %590 = vmatpush1.xpose.msra.mxu0 0.0
      %591 = vmatprep.subr.mxu0 0.0
      %592 = vmatpush1.xpose.msra.mxu0 0.0
      %593 = vmatprep.subr.mxu0 0.0
      %594 = vmatpush1.xpose.msra.mxu0 0.0
      %595 = vmatprep.subr.mxu0 0.0
      %596 = vmatpush1.xpose.msra.mxu0 0.0
      %597 = vmatprep.subr.mxu0 0.0
      %598 = vmatpush1.xpose.msra.mxu0 0.0
      %599 = vmatprep.subr.mxu0 0.0
      %600 = vmatpush1.xpose.msra.mxu0 0.0
      %601 = vmatprep.subr.mxu0 0.0
      %602 = vmatpush1.xpose.msra.mxu0 0.0
      %603 = vmatprep.mubr.f32.mxu0 0.0
      %604 = vmatmul.mubr.f32.gmra.mrb[0].mxu0 %v535
      %v605 = vpop.f32.mrb[0].mxu0
      %v606 = vadd.f32 0.0, %v605
      %v607 = vpop.f32.mrb[0].mxu0
      %608 = vdwg.mxu0
      %v609 = vsel %vm204, %v606, -inf
      %610 = vmax.xlane.f32.xlu0 %v609
      %v611 = vpop.xlane.xlu0 %610
      %v612 = vsub.f32 %v606, %v611
      %v613 = vmul.f32 %v612, 1.442695
      %v614 = vpow.pop %v613
      %v615 = vsel %vm204, %v614, 0.0
      %616 = vadd.xlane.f32.xlu0 %v615
      %v617 = vpop.xlane.xlu0 %616
      %v618 = vrcp.pop %v617
      %v619 = vmul.f32 %v614, %v618
      %620 = vrot.lane.b32.xlu0 %v203, 112
      %v621 = vpop.permute.xlu0 %620
      %v624 = vsel %vm204, %v619, 0
      %626 = vmatprep.subr.mxu0 0.0
      %627 = vmatpush1.msra.mxu0 %v621
      %628 = vmatprep.subr.mxu0 0.0
      %629 = vmatpush1.msra.mxu0 0.0
      %630 = vmatprep.subr.mxu0 0.0
      %631 = vmatpush1.msra.mxu0 0.0
      %632 = vmatprep.subr.mxu0 0.0
      %633 = vmatpush1.msra.mxu0 0.0
      %634 = vmatprep.subr.mxu0 0.0
      %635 = vmatpush1.msra.mxu0 0.0
      %636 = vmatprep.subr.mxu0 0.0
      %637 = vmatpush1.msra.mxu0 0.0
      %638 = vmatprep.subr.mxu0 0.0
      %639 = vmatpush1.msra.mxu0 0.0
      %640 = vmatprep.subr.mxu0 0.0
      %641 = vmatpush1.msra.mxu0 0.0
      %642 = vmatprep.subr.mxu0 0.0
      %643 = vmatpush1.msra.mxu0 0.0
      %644 = vmatprep.subr.mxu0 0.0
      %645 = vmatpush1.msra.mxu0 0.0
      %646 = vmatprep.subr.mxu0 0.0
      %647 = vmatpush1.msra.mxu0 0.0
      %648 = vmatprep.subr.mxu0 0.0
      %649 = vmatpush1.msra.mxu0 0.0
      %650 = vmatprep.subr.mxu0 0.0
      %651 = vmatpush1.msra.mxu0 0.0
      %652 = vmatprep.subr.mxu0 0.0
      %653 = vmatpush1.msra.mxu0 0.0
      %654 = vmatprep.subr.mxu0 0.0
      %655 = vmatpush1.msra.mxu0 0.0
      %656 = vmatprep.subr.mxu0 0.0
      %657 = vmatpush1.msra.mxu0 0.0
      %658 = vmatprep.subr.mxu0 0.0
      %659 = vmatpush1.msra.mxu0 0.0
      %660 = vmatprep.subr.mxu0 0.0
      %661 = vmatpush1.msra.mxu0 0.0
      %662 = vmatprep.subr.mxu0 0.0
      %663 = vmatpush1.msra.mxu0 0.0
      %664 = vmatprep.subr.mxu0 0.0
      %665 = vmatpush1.msra.mxu0 0.0
      %666 = vmatprep.subr.mxu0 0.0
      %667 = vmatpush1.msra.mxu0 0.0
      %668 = vmatprep.subr.mxu0 0.0
      %669 = vmatpush1.msra.mxu0 0.0
      %670 = vmatprep.subr.mxu0 0.0
      %671 = vmatpush1.msra.mxu0 0.0
      %672 = vmatprep.subr.mxu0 0.0
      %673 = vmatpush1.msra.mxu0 0.0
      %674 = vmatprep.subr.mxu0 0.0
      %675 = vmatpush1.msra.mxu0 0.0
      %676 = vmatprep.subr.mxu0 0.0
      %677 = vmatpush1.msra.mxu0 0.0
      %678 = vmatprep.subr.mxu0 0.0
      %679 = vmatpush1.msra.mxu0 0.0
      %680 = vmatprep.subr.mxu0 0.0
      %681 = vmatpush1.msra.mxu0 0.0
      %682 = vmatprep.subr.mxu0 0.0
      %683 = vmatpush1.msra.mxu0 0.0
      %684 = vmatprep.subr.mxu0 0.0
      %685 = vmatpush1.msra.mxu0 0.0
      %686 = vmatprep.subr.mxu0 0.0
      %687 = vmatpush1.msra.mxu0 0.0
      %688 = vmatprep.subr.mxu0 0.0
      %689 = vmatpush1.msra.mxu0 0.0
      %690 = vmatprep.mubr.f32.mxu0 0.0
      %691 = vmatmul.mubr.f32.gmra.mrb[0].mxu0 %v624
      %v692 = vpop.f32.mrb[0].mxu0
      %v693 = vadd.f32 0.0, %v692
      %v694 = vpop.f32.mrb[0].mxu0
      %695 = vdwg.mxu0
      %696 = vrot.lane.b32.xlu0 %v201, 104
      %v697 = vpop.permute.xlu0 %696
      %698 = vrot.lane.b32.xlu0 %v202, 104
      %v699 = vpop.permute.xlu0 %698
      %v700 = vsel %vm204, %v697, 0
      %v702 = vsel %vm204, %v699, 0
      %704 = vmatprep.subr.mxu0 0.0
      %705 = vmatpush1.xpose.msra.mxu0 %v702
      %706 = vmatprep.subr.mxu0 0.0
      %707 = vmatpush1.xpose.msra.mxu0 0.0
      %708 = vmatprep.subr.mxu0 0.0
      %709 = vmatpush1.xpose.msra.mxu0 0.0
      %710 = vmatprep.subr.mxu0 0.0
      %711 = vmatpush1.xpose.msra.mxu0 0.0
      %712 = vmatprep.subr.mxu0 0.0
      %713 = vmatpush1.xpose.msra.mxu0 0.0
      %714 = vmatprep.subr.mxu0 0.0
      %715 = vmatpush1.xpose.msra.mxu0 0.0
      %716 = vmatprep.subr.mxu0 0.0
      %717 = vmatpush1.xpose.msra.mxu0 0.0
      %718 = vmatprep.subr.mxu0 0.0
      %719 = vmatpush1.xpose.msra.mxu0 0.0
      %720 = vmatprep.subr.mxu0 0.0
      %721 = vmatpush1.xpose.msra.mxu0 0.0
      %722 = vmatprep.subr.mxu0 0.0
      %723 = vmatpush1.xpose.msra.mxu0 0.0
      %724 = vmatprep.subr.mxu0 0.0
      %725 = vmatpush1.xpose.msra.mxu0 0.0
      %726 = vmatprep.subr.mxu0 0.0
      %727 = vmatpush1.xpose.msra.mxu0 0.0
      %728 = vmatprep.subr.mxu0 0.0
      %729 = vmatpush1.xpose.msra.mxu0 0.0
      %730 = vmatprep.subr.mxu0 0.0
      %731 = vmatpush1.xpose.msra.mxu0 0.0
      %732 = vmatprep.subr.mxu0 0.0
      %733 = vmatpush1.xpose.msra.mxu0 0.0
      %734 = vmatprep.subr.mxu0 0.0
      %735 = vmatpush1.xpose.msra.mxu0 0.0
      %736 = vmatprep.subr.mxu0 0.0
      %737 = vmatpush1.xpose.msra.mxu0 0.0
      %738 = vmatprep.subr.mxu0 0.0
      %739 = vmatpush1.xpose.msra.mxu0 0.0
      %740 = vmatprep.subr.mxu0 0.0
      %741 = vmatpush1.xpose.msra.mxu0 0.0
      %742 = vmatprep.subr.mxu0 0.0
      %743 = vmatpush1.xpose.msra.mxu0 0.0
      %744 = vmatprep.subr.mxu0 0.0
      %745 = vmatpush1.xpose.msra.mxu0 0.0
      %746 = vmatprep.subr.mxu0 0.0
      %747 = vmatpush1.xpose.msra.mxu0 0.0
      %748 = vmatprep.subr.mxu0 0.0
      %749 = vmatpush1.xpose.msra.mxu0 0.0
      %750 = vmatprep.subr.mxu0 0.0
      %751 = vmatpush1.xpose.msra.mxu0 0.0
      %752 = vmatprep.subr.mxu0 0.0
      %753 = vmatpush1.xpose.msra.mxu0 0.0
      %754 = vmatprep.subr.mxu0 0.0
      %755 = vmatpush1.xpose.msra.mxu0 0.0
      %756 = vmatprep.subr.mxu0 0.0
      %757 = vmatpush1.xpose.msra.mxu0 0.0
      %758 = vmatprep.subr.mxu0 0.0
      %759 = vmatpush1.xpose.msra.mxu0 0.0
      %760 = vmatprep.subr.mxu0 0.0
      %761 = vmatpush1.xpose.msra.mxu0 0.0
      %762 = vmatprep.subr.mxu0 0.0
      %763 = vmatpush1.xpose.msra.mxu0 0.0
      %764 = vmatprep.subr.mxu0 0.0
      %765 = vmatpush1.xpose.msra.mxu0 0.0
      %766 = vmatprep.subr.mxu0 0.0
      %767 = vmatpush1.xpose.msra.mxu0 0.0
      %768 = vmatprep.mubr.f32.mxu0 0.0
      %769 = vmatmul.mubr.f32.gmra.mrb[0].mxu0 %v700
      %v770 = vpop.f32.mrb[0].mxu0
      %v771 = vadd.f32 0.0, %v770
      %v772 = vpop.f32.mrb[0].mxu0
      %773 = vdwg.mxu0
      %v774 = vsel %vm204, %v771, -inf
      %775 = vmax.xlane.f32.xlu0 %v774
      %v776 = vpop.xlane.xlu0 %775
      %v777 = vsub.f32 %v771, %v776
      %v778 = vmul.f32 %v777, 1.442695
      %v779 = vpow.pop %v778
      %v780 = vsel %vm204, %v779, 0.0
      %781 = vadd.xlane.f32.xlu0 %v780
      %v782 = vpop.xlane.xlu0 %781
      %v783 = vrcp.pop %v782
      %v784 = vmul.f32 %v779, %v783
      %785 = vrot.lane.b32.xlu0 %v203, 104
      %v786 = vpop.permute.xlu0 %785
      %v789 = vsel %vm204, %v784, 0
      %791 = vmatprep.subr.mxu0 0.0
      %792 = vmatpush1.msra.mxu0 %v786
      %793 = vmatprep.subr.mxu0 0.0
      %794 = vmatpush1.msra.mxu0 0.0
      %795 = vmatprep.subr.mxu0 0.0
      %796 = vmatpush1.msra.mxu0 0.0
      %797 = vmatprep.subr.mxu0 0.0
      %798 = vmatpush1.msra.mxu0 0.0
      %799 = vmatprep.subr.mxu0 0.0
      %800 = vmatpush1.msra.mxu0 0.0
      %801 = vmatprep.subr.mxu0 0.0
      %802 = vmatpush1.msra.mxu0 0.0
      %803 = vmatprep.subr.mxu0 0.0
      %804 = vmatpush1.msra.mxu0 0.0
      %805 = vmatprep.subr.mxu0 0.0
      %806 = vmatpush1.msra.mxu0 0.0
      %807 = vmatprep.subr.mxu0 0.0
      %808 = vmatpush1.msra.mxu0 0.0
      %809 = vmatprep.subr.mxu0 0.0
      %810 = vmatpush1.msra.mxu0 0.0
      %811 = vmatprep.subr.mxu0 0.0
      %812 = vmatpush1.msra.mxu0 0.0
      %813 = vmatprep.subr.mxu0 0.0
      %814 = vmatpush1.msra.mxu0 0.0
      %815 = vmatprep.subr.mxu0 0.0
      %816 = vmatpush1.msra.mxu0 0.0
      %817 = vmatprep.subr.mxu0 0.0
      %818 = vmatpush1.msra.mxu0 0.0
      %819 = vmatprep.subr.mxu0 0.0
      %820 = vmatpush1.msra.mxu0 0.0
      %821 = vmatprep.subr.mxu0 0.0
      %822 = vmatpush1.msra.mxu0 0.0
      %823 = vmatprep.subr.mxu0 0.0
      %824 = vmatpush1.msra.mxu0 0.0
      %825 = vmatprep.subr.mxu0 0.0
      %826 = vmatpush1.msra.mxu0 0.0
      %827 = vmatprep.subr.mxu0 0.0
      %828 = vmatpush1.msra.mxu0 0.0
      %829 = vmatprep.subr.mxu0 0.0
      %830 = vmatpush1.msra.mxu0 0.0
      %831 = vmatprep.subr.mxu0 0.0
      %832 = vmatpush1.msra.mxu0 0.0
      %833 = vmatprep.subr.mxu0 0.0
      %834 = vmatpush1.msra.mxu0 0.0
      %835 = vmatprep.subr.mxu0 0.0
      %836 = vmatpush1.msra.mxu0 0.0
      %837 = vmatprep.subr.mxu0 0.0
      %838 = vmatpush1.msra.mxu0 0.0
      %839 = vmatprep.subr.mxu0 0.0
      %840 = vmatpush1.msra.mxu0 0.0
      %841 = vmatprep.subr.mxu0 0.0
      %842 = vmatpush1.msra.mxu0 0.0
      %843 = vmatprep.subr.mxu0 0.0
      %844 = vmatpush1.msra.mxu0 0.0
      %845 = vmatprep.subr.mxu0 0.0
      %846 = vmatpush1.msra.mxu0 0.0
      %847 = vmatprep.subr.mxu0 0.0
      %848 = vmatpush1.msra.mxu0 0.0
      %849 = vmatprep.subr.mxu0 0.0
      %850 = vmatpush1.msra.mxu0 0.0
      %851 = vmatprep.subr.mxu0 0.0
      %852 = vmatpush1.msra.mxu0 0.0
      %853 = vmatprep.subr.mxu0 0.0
      %854 = vmatpush1.msra.mxu0 0.0
      %855 = vmatprep.mubr.f32.mxu0 0.0
      %856 = vmatmul.mubr.f32.gmra.mrb[0].mxu0 %v789
      %v857 = vpop.f32.mrb[0].mxu0
      %v858 = vadd.f32 0.0, %v857
      %v859 = vpop.f32.mrb[0].mxu0
      %860 = vdwg.mxu0
      %862 = vrot.lane.b32.xlu0 %v528, 8
      %v863 = vpop.permute.xlu0 %862
      %866 = vrot.lane.b32.xlu0 %v693, 16
      %v867 = vpop.permute.xlu0 %866
      %870 = vrot.lane.b32.xlu0 %v858, 24
      %v871 = vpop.permute.xlu0 %870
      %v873 = vsel %vm204, %v362, %v863
      %vm874 = vcmask 130048
      %v875 = vsel %vm874, %v873, %v867
      %vm876 = vcmask 195584
      %v877 = vsel %vm876, %v875, %v871
      %vm878 = vcmask 261120
      %879 = vst.msk [vmem:[%s199] sm:$0xff] %vm878, %v877
      %p880 = scmp.lt.s32.totalorder %s14, 1
      %s881 = scalar_select %p880, %s14, 1
      %s882 = smul.addr %s881, 8
      %s883 = scalar_lea.vmem %s3, %s882
      // Predicated region
      $region33: #{transformer_forward.14} parent=31 // pred_check
        %p884 = pneg %p110
      $region34: #{transformer_forward.14} parent=31 // pred_check_branch
        %886 = sbr.rel (%p884) target = $region36
      $region35: #{transformer_forward.14} parent=31 // pred_region
        _
      $region36: #{transformer_forward.14} parent=31 // pred_fallthru
        _
    $region32: #{transformer_forward.14} parent=5 // pred_fallthru
      _
    %p887 = scmp.le.s32.totalorder 2, %s9
    // Predicated region
    $region37: #{transformer_forward.14} parent=5 // pred_check
      %p888 = pneg %p887
    $region38: #{transformer_forward.14} parent=5 // pred_check_branch
      %890 = sbr.rel (%p888) target = $region40
    $region39: #{transformer_forward.14} parent=5 // pred_region
      %s891 = ssub.s32 %s9, 2
      // Predicated region
      $region41: #{transformer_forward.14} parent=39 // pred_check
        %p892 = pneg %p116
      $region42: #{transformer_forward.14} parent=39 // pred_check_branch
        %894 = sbr.rel (%p892) target = $region44
      $region43: #{transformer_forward.14} parent=39 // pred_region
        %p895 = scmp.lt.s32.totalorder %s15, 1
        %s896 = scalar_select %p895, %s15, 1
        %s897 = smul.addr %s896, 8
        %s898 = scalar_lea.vmem %s3, %s897
      $region44: #{transformer_forward.14} parent=39 // pred_fallthru
        _
    $region40: #{transformer_forward.14} parent=5 // pred_fallthru
      _
  $region6: #{transformer_forward.14} parent=0 // loop_footer
    %s13 = sadd.s32 1, %s9
  $region7: #{transformer_forward.14} parent=0 // loop_footer_branch
    %8 = sbr.rel target = $region3
  $region8: #{transformer_forward.14} parent=0 // loop_exit
    _

// kernel: transformer_forward.15
$region0: #{transformer_forward.15}
  #allocation0 [shape = 'u32[]', space=smem, size = 0x4, offset = 0x4, fixed_abs, tag = 'smem constant byte address 0x4 - core index']
  #allocation1 [shape = 'u32[144,128]{1,0:T(1,128)}', space=vmem, size = 0x12000, scoped, tag = 'internal scratch']
  %s0 = inlined_call_operand.vmem [shape: f32[16,32], index: 0, kind: input, shape index: {}]
  %s1 = inlined_call_operand.vmem [shape: f32[16,32], index: 1, kind: input, shape index: {}]
  %s2 = inlined_call_operand.vmem [shape: bf16[32,32], index: 2, kind: input, shape index: {}]
  %s3 = inlined_call_operand.vmem [shape: f32[1,32], index: 3, kind: input, shape index: {}]
  %s4 = inlined_call_operand.vmem [shape: f32[1,32], index: 4, kind: input, shape index: {}]
  %s5 = inlined_call_operand.vmem [shape: f32[1,32], index: 5, kind: input, shape index: {}]
  %s6 = inlined_call_operand.vmem [shape: f32[16,32], index: 6, kind: output, shape index: {}]
  %s7 = sld [smem:[#allocation0]]
  $region34: #{transformer_forward.15} parent=0
    _
  %s9 = ssub.s32 1, %s7
  %s10 = scalar_select 0, %s9, %s7
  // Predicated region
  $region2: #{transformer_forward.15} parent=0 // pred_check
    _
  $region3: #{transformer_forward.15} parent=0 // pred_check_branch
    %12 = sbr.rel (0) target = $region5
  $region4: #{transformer_forward.15} parent=0 // pred_region
    _
  $region5: #{transformer_forward.15} parent=0 // pred_fallthru
    _
  // Predicated region
  $region6: #{transformer_forward.15} parent=0 // pred_check
    _
  $region7: #{transformer_forward.15} parent=0 // pred_check_branch
    %14 = sbr.rel (0) target = $region9
  $region8: #{transformer_forward.15} parent=0 // pred_region
    _
  $region9: #{transformer_forward.15} parent=0 // pred_fallthru
    _
  // Predicated region
  $region10: #{transformer_forward.15} parent=0 // pred_check
    _
  $region11: #{transformer_forward.15} parent=0 // pred_check_branch
    %16 = sbr.rel (0) target = $region13
  $region12: #{transformer_forward.15} parent=0 // pred_region
    _
  $region13: #{transformer_forward.15} parent=0 // pred_fallthru
    _
  // Predicated region
  $region14: #{transformer_forward.15} parent=0 // pred_check
    _
  $region15: #{transformer_forward.15} parent=0 // pred_check_branch
    %18 = sbr.rel (0) target = $region17
  $region16: #{transformer_forward.15} parent=0 // pred_region
    _
  $region17: #{transformer_forward.15} parent=0 // pred_fallthru
    _
  // Predicated region
  $region18: #{transformer_forward.15} parent=0 // pred_check
    _
  $region19: #{transformer_forward.15} parent=0 // pred_check_branch
    %20 = sbr.rel (0) target = $region21
  $region20: #{transformer_forward.15} parent=0 // pred_region
    _
  $region21: #{transformer_forward.15} parent=0 // pred_fallthru
    _
  // Predicated region
  $region22: #{transformer_forward.15} parent=0 // pred_check
    _
  $region23: #{transformer_forward.15} parent=0 // pred_check_branch
    %22 = sbr.rel (0) target = $region25
  $region24: #{transformer_forward.15} parent=0 // pred_region
    _
  $region25: #{transformer_forward.15} parent=0 // pred_fallthru
    _
  %v24 = vld [vmem:[%s0] sm:$0xff]
  %v25 = vld [vmem:[%s0 + $0x8] sm:$0xff]
  %v26 = vpack.c.bf16 %v25, %v24
  %v27 = vld [vmem:[%s2] sm:$0xf]
  %v28 = vld [vmem:[%s2 + $0x4] sm:$0xf]
  %v29 = vld [vmem:[%s2 + $0x8] sm:$0xf]
  %v30 = vld [vmem:[%s2 + $0xc] sm:$0xf]
  %v31 = vld [vmem:[%s3] sm:$0x1]
  %v33 = vlaneseq
  %v34 = vshrl.u32 %v33, 7
  %v35 = vsub.s32 0, %v34
  %v36 = vrot.slane %v31, %v35
  %v42 = vunpack.c.l.b16 %v27
  %v43 = vunpack.c.l.b16 %v28
  %v44 = vunpack.c.l.b16 %v29
  %v45 = vunpack.c.l.b16 %v30
  %v46 = vpack.c.b16 %v43, %v42
  %v47 = vpack.c.b16 %v45, %v44
  %vm50 = vcmask 261120
  %v52 = vsel %vm50, %v26, 0
  %54 = vmatprep.subr.bf16.mxu0 0
  %55 = vmatpush1.bf16.msra.mxu0 %v46
  %56 = vmatprep.subr.bf16.mxu0 0
  %57 = vmatpush1.bf16.msra.mxu0 %v47
  %58 = vmatprep.subr.bf16.mxu0 0
  %59 = vmatpush1.bf16.msra.mxu0 0
  %60 = vmatprep.subr.bf16.mxu0 0
  %61 = vmatpush1.bf16.msra.mxu0 0
  %62 = vmatprep.subr.bf16.mxu0 0
  %63 = vmatpush1.bf16.msra.mxu0 0
  %64 = vmatprep.subr.bf16.mxu0 0
  %65 = vmatpush1.bf16.msra.mxu0 0
  %66 = vmatprep.subr.bf16.mxu0 0
  %67 = vmatpush1.bf16.msra.mxu0 0
  %68 = vmatprep.subr.bf16.mxu0 0
  %69 = vmatpush1.bf16.msra.mxu0 0
  %70 = vmatprep.subr.bf16.mxu0 0
  %71 = vmatpush1.bf16.msra.mxu0 0
  %72 = vmatprep.subr.bf16.mxu0 0
  %73 = vmatpush1.bf16.msra.mxu0 0
  %74 = vmatprep.subr.bf16.mxu0 0
  %75 = vmatpush1.bf16.msra.mxu0 0
  %76 = vmatprep.subr.bf16.mxu0 0
  %77 = vmatpush1.bf16.msra.mxu0 0
  %78 = vmatprep.subr.bf16.mxu0 0
  %79 = vmatpush1.bf16.msra.mxu0 0
  %80 = vmatprep.subr.bf16.mxu0 0
  %81 = vmatpush1.bf16.msra.mxu0 0
  %82 = vmatprep.subr.bf16.mxu0 0
  %83 = vmatpush1.bf16.msra.mxu0 0
  %84 = vmatprep.subr.bf16.mxu0 0
  %85 = vmatpush1.bf16.msra.mxu0 0
  %86 = vmatprep.mubr.bf16.mxu0 0
  %87 = vmatmul.mubr.bf16.gmra.mrb[0].mxu0 %v52
  %v88 = vpop.f32.mrb[0].mxu0
  %v89 = vadd.f32 %v36, %v88
  %v90 = vpop.f32.mrb[0].mxu0
  %v91 = vpop.f32.mrb[0].mxu0
  %v92 = vadd.f32 %v36, %v91
  %v93 = vpop.f32.mrb[0].mxu0
  %94 = vdwg.mxu0
  %v95 = vld [vmem:[%s1] sm:$0xff]
  %v96 = vld [vmem:[%s1 + $0x8] sm:$0xff]
  %v97 = vadd.f32 %v89, %v95
  %v98 = vadd.f32 %v92, %v96
  %v99 = vsel %vm50, %v97, 0.0
  %100 = vadd.xlane.f32.xlu0 %v99
  %v101 = vpop.xlane.xlu0 %100
  %v102 = vsel %vm50, %v98, 0.0
  %103 = vadd.xlane.f32.xlu0 %v102
  %v104 = vpop.xlane.xlu0 %103
  %v105 = vrcp.pop 32.0
  %v106 = vmul.f32 %v101, %v105
  %v107 = vmul.f32 %v104, %v105
  %v108 = vsub.f32 %v97, %v106
  %v109 = vsub.f32 %v98, %v107
  %v110 = vmul.f32 %v108, %v108
  %v111 = vmul.f32 %v109, %v109
  %v112 = vsel %vm50, %v110, 0.0
  %113 = vadd.xlane.f32.xlu0 %v112
  %v114 = vpop.xlane.xlu0 %113
  %v115 = vsel %vm50, %v111, 0.0
  %116 = vadd.xlane.f32.xlu0 %v115
  %v117 = vpop.xlane.xlu0 %116
  %v118 = vmul.f32 %v114, %v105
  %v119 = vmul.f32 %v117, %v105
  %v120 = vadd.f32 %v118, 1e-05
  %v121 = vadd.f32 %v119, 1e-05
  %v122 = vrsqrt.pop %v120
  %v123 = vrsqrt.pop %v121
  %v124 = vmul.f32 %v108, %v122
  %v125 = vmul.f32 %v109, %v123
  %v126 = vld [vmem:[%s4] sm:$0x1]
  %v128 = vlaneseq
  %v129 = vshrl.u32 %v128, 7
  %v130 = vsub.s32 0, %v129
  %v131 = vrot.slane %v126, %v130
  %v133 = vmul.f32 %v124, %v131
  %v134 = vmul.f32 %v125, %v131
  %v135 = vld [vmem:[%s5] sm:$0x1]
  %v137 = vlaneseq
  %v138 = vshrl.u32 %v137, 7
  %v139 = vsub.s32 0, %v138
  %v140 = vrot.slane %v135, %v139
  %v142 = vadd.f32 %v133, %v140
  %v143 = vadd.f32 %v134, %v140
  %144 = vst.msk [vmem:[%s6] sm:$0xff] %vm50, %v142
  %145 = vst.msk [vmem:[%s6 + $0x8] sm:$0xff] %vm50, %v143
  // Predicated region
  $region26: #{transformer_forward.15} parent=0 // pred_check
    _
  $region27: #{transformer_forward.15} parent=0 // pred_check_branch
    %147 = sbr.rel (0) target = $region29
  $region28: #{transformer_forward.15} parent=0 // pred_region
    _
  $region29: #{transformer_forward.15} parent=0 // pred_fallthru
    _
  // Predicated region
  $region30: #{transformer_forward.15} parent=0 // pred_check
    _
  $region31: #{transformer_forward.15} parent=0 // pred_check_branch
    %149 = sbr.rel (0) target = $region33
  $region32: #{transformer_forward.15} parent=0 // pred_region
    _
  $region33: #{transformer_forward.15} parent=0 // pred_fallthru
    _

// kernel: transformer_forward.21
$region0: #{transformer_forward.21}
  #allocation0 [shape = 'u32[]', space=smem, size = 0x4, offset = 0x4, fixed_abs, tag = 'smem constant byte address 0x4 - core index']
  #allocation1 [shape = 'u32[144,128]{1,0:T(1,128)}', space=vmem, size = 0x12000, scoped, tag = 'internal scratch']
  %s0 = inlined_call_operand.vmem [shape: f32[16,32], index: 0, kind: input, shape index: {}]
  %s1 = inlined_call_operand.vmem [shape: f32[1,32], index: 1, kind: input, shape index: {}]
  %s2 = inlined_call_operand.vmem [shape: f32[1,32], index: 2, kind: input, shape index: {}]
  %s3 = inlined_call_operand.vmem [shape: f32[16,32], index: 3, kind: output, shape index: {}]
  %s4 = sld [smem:[#allocation0]]
  $region22: #{transformer_forward.21} parent=0
    _
  %s6 = ssub.s32 1, %s4
  %s7 = scalar_select 0, %s6, %s4
  // Predicated region
  $region2: #{transformer_forward.21} parent=0 // pred_check
    _
  $region3: #{transformer_forward.21} parent=0 // pred_check_branch
    %9 = sbr.rel (0) target = $region5
  $region4: #{transformer_forward.21} parent=0 // pred_region
    _
  $region5: #{transformer_forward.21} parent=0 // pred_fallthru
    _
  // Predicated region
  $region6: #{transformer_forward.21} parent=0 // pred_check
    _
  $region7: #{transformer_forward.21} parent=0 // pred_check_branch
    %11 = sbr.rel (0) target = $region9
  $region8: #{transformer_forward.21} parent=0 // pred_region
    _
  $region9: #{transformer_forward.21} parent=0 // pred_fallthru
    _
  // Predicated region
  $region10: #{transformer_forward.21} parent=0 // pred_check
    _
  $region11: #{transformer_forward.21} parent=0 // pred_check_branch
    %13 = sbr.rel (0) target = $region13
  $region12: #{transformer_forward.21} parent=0 // pred_region
    _
  $region13: #{transformer_forward.21} parent=0 // pred_fallthru
    _
  %v14 = vld [vmem:[%s0] sm:$0xff]
  %v15 = vld [vmem:[%s0 + $0x8] sm:$0xff]
  %vm16 = vcmask 261120
  %v17 = vsel %vm16, %v14, 0.0
  %18 = vadd.xlane.f32.xlu0 %v17
  %v19 = vpop.xlane.xlu0 %18
  %v20 = vsel %vm16, %v15, 0.0
  %21 = vadd.xlane.f32.xlu0 %v20
  %v22 = vpop.xlane.xlu0 %21
  %v23 = vrcp.pop 32.0
  %v24 = vmul.f32 %v19, %v23
  %v25 = vmul.f32 %v22, %v23
  %v26 = vsub.f32 %v14, %v24
  %v27 = vsub.f32 %v15, %v25
  %v28 = vmul.f32 %v26, %v26
  %v29 = vmul.f32 %v27, %v27
  %v30 = vsel %vm16, %v28, 0.0
  %31 = vadd.xlane.f32.xlu0 %v30
  %v32 = vpop.xlane.xlu0 %31
  %v33 = vsel %vm16, %v29, 0.0
  %34 = vadd.xlane.f32.xlu0 %v33
  %v35 = vpop.xlane.xlu0 %34
  %v36 = vmul.f32 %v32, %v23
  %v37 = vmul.f32 %v35, %v23
  %v38 = vadd.f32 %v36, 1e-05
  %v39 = vadd.f32 %v37, 1e-05
  %v40 = vrsqrt.pop %v38
  %v41 = vrsqrt.pop %v39
  %v42 = vmul.f32 %v26, %v40
  %v43 = vmul.f32 %v27, %v41
  %v44 = vld [vmem:[%s1] sm:$0x1]
  %v46 = vlaneseq
  %v47 = vshrl.u32 %v46, 7
  %v48 = vsub.s32 0, %v47
  %v49 = vrot.slane %v44, %v48
  %v51 = vmul.f32 %v42, %v49
  %v52 = vmul.f32 %v43, %v49
  %v53 = vld [vmem:[%s2] sm:$0x1]
  %v55 = vlaneseq
  %v56 = vshrl.u32 %v55, 7
  %v57 = vsub.s32 0, %v56
  %v58 = vrot.slane %v53, %v57
  %v60 = vadd.f32 %v51, %v58
  %v61 = vadd.f32 %v52, %v58
  %62 = vst.msk [vmem:[%s3] sm:$0xff] %vm16, %v60
  %63 = vst.msk [vmem:[%s3 + $0x8] sm:$0xff] %vm16, %v61
  // Predicated region
  $region14: #{transformer_forward.21} parent=0 // pred_check
    _
  $region15: #{transformer_forward.21} parent=0 // pred_check_branch
    %65 = sbr.rel (0) target = $region17
  $region16: #{transformer_forward.21} parent=0 // pred_region
    _
  $region17: #{transformer_forward.21} parent=0 // pred_fallthru
    _
  // Predicated region
  $region18: #{transformer_forward.21} parent=0 // pred_check
    _
  $region19: #{transformer_forward.21} parent=0 // pred_check_branch
    %67 = sbr.rel (0) target = $region21
  $region20: #{transformer_forward.21} parent=0 // pred_region
    _
  $region21: #{transformer_forward.21} parent=0 // pred_fallthru
    _

// kernel: transformer_forward.16
$region0: #{transformer_forward.16}
  #allocation0 [shape = 'u32[]', space=smem, size = 0x4, offset = 0x4, fixed_abs, tag = 'smem constant byte address 0x4 - core index']
  #allocation1 [shape = 'u32[144,128]{1,0:T(1,128)}', space=vmem, size = 0x12000, scoped, tag = 'internal scratch']
  %s0 = inlined_call_operand.vmem [shape: f32[16,32], index: 0, kind: input, shape index: {}]
  %s1 = inlined_call_operand.vmem [shape: bf16[32,64], index: 1, kind: input, shape index: {}]
  %s2 = inlined_call_operand.vmem [shape: f32[1,64], index: 2, kind: input, shape index: {}]
  %s3 = inlined_call_operand.vmem [shape: bf16[64,32], index: 3, kind: input, shape index: {}]
  %s4 = inlined_call_operand.vmem [shape: f32[1,32], index: 4, kind: input, shape index: {}]
  %s5 = inlined_call_operand.vmem [shape: f32[1,32], index: 5, kind: input, shape index: {}]
  %s6 = inlined_call_operand.vmem [shape: f32[1,32], index: 6, kind: input, shape index: {}]
  %s7 = inlined_call_operand.vmem [shape: f32[16,32], index: 7, kind: output, shape index: {}]
  %s8 = sld [smem:[#allocation0]]
  $region38: #{transformer_forward.16} parent=0
    _
  %s10 = ssub.s32 1, %s8
  %s11 = scalar_select 0, %s10, %s8
  // Predicated region
  $region2: #{transformer_forward.16} parent=0 // pred_check
    _
  $region3: #{transformer_forward.16} parent=0 // pred_check_branch
    %13 = sbr.rel (0) target = $region5
  $region4: #{transformer_forward.16} parent=0 // pred_region
    _
  $region5: #{transformer_forward.16} parent=0 // pred_fallthru
    _
  // Predicated region
  $region6: #{transformer_forward.16} parent=0 // pred_check
    _
  $region7: #{transformer_forward.16} parent=0 // pred_check_branch
    %15 = sbr.rel (0) target = $region9
  $region8: #{transformer_forward.16} parent=0 // pred_region
    _
  $region9: #{transformer_forward.16} parent=0 // pred_fallthru
    _
  // Predicated region
  $region10: #{transformer_forward.16} parent=0 // pred_check
    _
  $region11: #{transformer_forward.16} parent=0 // pred_check_branch
    %17 = sbr.rel (0) target = $region13
  $region12: #{transformer_forward.16} parent=0 // pred_region
    _
  $region13: #{transformer_forward.16} parent=0 // pred_fallthru
    _
  // Predicated region
  $region14: #{transformer_forward.16} parent=0 // pred_check
    _
  $region15: #{transformer_forward.16} parent=0 // pred_check_branch
    %19 = sbr.rel (0) target = $region17
  $region16: #{transformer_forward.16} parent=0 // pred_region
    _
  $region17: #{transformer_forward.16} parent=0 // pred_fallthru
    _
  // Predicated region
  $region18: #{transformer_forward.16} parent=0 // pred_check
    _
  $region19: #{transformer_forward.16} parent=0 // pred_check_branch
    %21 = sbr.rel (0) target = $region21
  $region20: #{transformer_forward.16} parent=0 // pred_region
    _
  $region21: #{transformer_forward.16} parent=0 // pred_fallthru
    _
  // Predicated region
  $region22: #{transformer_forward.16} parent=0 // pred_check
    _
  $region23: #{transformer_forward.16} parent=0 // pred_check_branch
    %23 = sbr.rel (0) target = $region25
  $region24: #{transformer_forward.16} parent=0 // pred_region
    _
  $region25: #{transformer_forward.16} parent=0 // pred_fallthru
    _
  // Predicated region
  $region26: #{transformer_forward.16} parent=0 // pred_check
    _
  $region27: #{transformer_forward.16} parent=0 // pred_check_branch
    %25 = sbr.rel (0) target = $region29
  $region28: #{transformer_forward.16} parent=0 // pred_region
    _
  $region29: #{transformer_forward.16} parent=0 // pred_fallthru
    _
  %v27 = vld [vmem:[%s0] sm:$0xff]
  %v28 = vld [vmem:[%s0 + $0x8] sm:$0xff]
  %v29 = vpack.c.bf16 %v28, %v27
  %v30 = vld [vmem:[%s1] sm:$0xf]
  %v31 = vld [vmem:[%s1 + $0x4] sm:$0xf]
  %v32 = vld [vmem:[%s1 + $0x8] sm:$0xf]
  %v33 = vld [vmem:[%s1 + $0xc] sm:$0xf]
  %v34 = vld [vmem:[%s2] sm:$0x1]
  %v36 = vlaneseq
  %v37 = vshrl.u32 %v36, 7
  %v38 = vsub.s32 0, %v37
  %v39 = vrot.slane %v34, %v38
  %v45 = vunpack.c.l.b16 %v30
  %v46 = vunpack.c.l.b16 %v31
  %v47 = vunpack.c.l.b16 %v32
  %v48 = vunpack.c.l.b16 %v33
  %v49 = vpack.c.b16 %v46, %v45
  %v50 = vpack.c.b16 %v48, %v47
  %vm53 = vcmask 261120
  %v55 = vsel %vm53, %v29, 0
  %57 = vmatprep.subr.bf16.mxu0 0
  %58 = vmatpush1.bf16.msra.mxu0 %v49
  %59 = vmatprep.subr.bf16.mxu0 0
  %60 = vmatpush1.bf16.msra.mxu0 %v50
  %61 = vmatprep.subr.bf16.mxu0 0
  %62 = vmatpush1.bf16.msra.mxu0 0
  %63 = vmatprep.subr.bf16.mxu0 0
  %64 = vmatpush1.bf16.msra.mxu0 0
  %65 = vmatprep.subr.bf16.mxu0 0
  %66 = vmatpush1.bf16.msra.mxu0 0
  %67 = vmatprep.subr.bf16.mxu0 0
  %68 = vmatpush1.bf16.msra.mxu0 0
  %69 = vmatprep.subr.bf16.mxu0 0
  %70 = vmatpush1.bf16.msra.mxu0 0
  %71 = vmatprep.subr.bf16.mxu0 0
  %72 = vmatpush1.bf16.msra.mxu0 0
  %73 = vmatprep.subr.bf16.mxu0 0
  %74 = vmatpush1.bf16.msra.mxu0 0
  %75 = vmatprep.subr.bf16.mxu0 0
  %76 = vmatpush1.bf16.msra.mxu0 0
  %77 = vmatprep.subr.bf16.mxu0 0
  %78 = vmatpush1.bf16.msra.mxu0 0
  %79 = vmatprep.subr.bf16.mxu0 0
  %80 = vmatpush1.bf16.msra.mxu0 0
  %81 = vmatprep.subr.bf16.mxu0 0
  %82 = vmatpush1.bf16.msra.mxu0 0
  %83 = vmatprep.subr.bf16.mxu0 0
  %84 = vmatpush1.bf16.msra.mxu0 0
  %85 = vmatprep.subr.bf16.mxu0 0
  %86 = vmatpush1.bf16.msra.mxu0 0
  %87 = vmatprep.subr.bf16.mxu0 0
  %88 = vmatpush1.bf16.msra.mxu0 0
  %89 = vmatprep.mubr.bf16.mxu0 0
  %90 = vmatmul.mubr.bf16.gmra.mrb[0].mxu0 %v55
  %v91 = vpop.f32.mrb[0].mxu0
  %v92 = vadd.f32 %v39, %v91
  %v93 = vpop.f32.mrb[0].mxu0
  %v94 = vpop.f32.mrb[0].mxu0
  %v95 = vadd.f32 %v39, %v94
  %v96 = vpop.f32.mrb[0].mxu0
  %97 = vdwg.mxu0
  %v98 = vmax.f32 %v92, 0.0
  %v99 = vmax.f32 %v95, 0.0
  %v100 = vpack.c.bf16 %v99, %v98
  %v101 = vld [vmem:[%s3] sm:$0xf]
  %v102 = vld [vmem:[%s3 + $0x4] sm:$0xf]
  %v103 = vld [vmem:[%s3 + $0x8] sm:$0xf]
  %v104 = vld [vmem:[%s3 + $0xc] sm:$0xf]
  %v105 = vld [vmem:[%s3 + $0x10] sm:$0xf]
  %v106 = vld [vmem:[%s3 + $0x14] sm:$0xf]
  %v107 = vld [vmem:[%s3 + $0x18] sm:$0xf]
  %v108 = vld [vmem:[%s3 + $0x1c] sm:$0xf]
  %v109 = vld [vmem:[%s4] sm:$0x1]
  %v111 = vlaneseq
  %v112 = vshrl.u32 %v111, 7
  %v113 = vsub.s32 0, %v112
  %v114 = vrot.slane %v109, %v113
  %v124 = vunpack.c.l.b16 %v101
  %v125 = vunpack.c.l.b16 %v102
  %v126 = vunpack.c.l.b16 %v103
  %v127 = vunpack.c.l.b16 %v104
  %v128 = vunpack.c.l.b16 %v105
  %v129 = vunpack.c.l.b16 %v106
  %v130 = vunpack.c.l.b16 %v107
  %v131 = vunpack.c.l.b16 %v108
  %v132 = vpack.c.b16 %v125, %v124
  %v133 = vpack.c.b16 %v127, %v126
  %v134 = vpack.c.b16 %v129, %v128
  %v135 = vpack.c.b16 %v131, %v130
  %vm140 = vcmask 523264
  %v142 = vsel %vm140, %v100, 0
  %144 = vmatprep.subr.bf16.mxu0 0
  %145 = vmatpush1.bf16.msra.mxu0 %v132
  %146 = vmatprep.subr.bf16.mxu0 0
  %147 = vmatpush1.bf16.msra.mxu0 %v133
  %148 = vmatprep.subr.bf16.mxu0 0
  %149 = vmatpush1.bf16.msra.mxu0 %v134
  %150 = vmatprep.subr.bf16.mxu0 0
  %151 = vmatpush1.bf16.msra.mxu0 %v135
  %152 = vmatprep.subr.bf16.mxu0 0
  %153 = vmatpush1.bf16.msra.mxu0 0
  %154 = vmatprep.subr.bf16.mxu0 0
  %155 = vmatpush1.bf16.msra.mxu0 0
  %156 = vmatprep.subr.bf16.mxu0 0
  %157 = vmatpush1.bf16.msra.mxu0 0
  %158 = vmatprep.subr.bf16.mxu0 0
  %159 = vmatpush1.bf16.msra.mxu0 0
  %160 = vmatprep.subr.bf16.mxu0 0
  %161 = vmatpush1.bf16.msra.mxu0 0
  %162 = vmatprep.subr.bf16.mxu0 0
  %163 = vmatpush1.bf16.msra.mxu0 0
  %164 = vmatprep.subr.bf16.mxu0 0
  %165 = vmatpush1.bf16.msra.mxu0 0
  %166 = vmatprep.subr.bf16.mxu0 0
  %167 = vmatpush1.bf16.msra.mxu0 0
  %168 = vmatprep.subr.bf16.mxu0 0
  %169 = vmatpush1.bf16.msra.mxu0 0
  %170 = vmatprep.subr.bf16.mxu0 0
  %171 = vmatpush1.bf16.msra.mxu0 0
  %172 = vmatprep.subr.bf16.mxu0 0
  %173 = vmatpush1.bf16.msra.mxu0 0
  %174 = vmatprep.subr.bf16.mxu0 0
  %175 = vmatpush1.bf16.msra.mxu0 0
  %176 = vmatprep.mubr.bf16.mxu0 0
  %177 = vmatmul.mubr.bf16.gmra.mrb[0].mxu0 %v142
  %v178 = vpop.f32.mrb[0].mxu0
  %v179 = vadd.f32 %v114, %v178
  %v180 = vpop.f32.mrb[0].mxu0
  %v181 = vpop.f32.mrb[0].mxu0
  %v182 = vadd.f32 %v114, %v181
  %v183 = vpop.f32.mrb[0].mxu0
  %184 = vdwg.mxu0
  %v185 = vadd.f32 %v179, %v27
  %v186 = vadd.f32 %v182, %v28
  %v187 = vsel %vm53, %v185, 0.0
  %188 = vadd.xlane.f32.xlu0 %v187
  %v189 = vpop.xlane.xlu0 %188
  %v190 = vsel %vm53, %v186, 0.0
  %191 = vadd.xlane.f32.xlu0 %v190
  %v192 = vpop.xlane.xlu0 %191
  %v193 = vrcp.pop 32.0
  %v194 = vmul.f32 %v189, %v193
  %v195 = vmul.f32 %v192, %v193
  %v196 = vsub.f32 %v185, %v194
  %v197 = vsub.f32 %v186, %v195
  %v198 = vmul.f32 %v196, %v196
  %v199 = vmul.f32 %v197, %v197
  %v200 = vsel %vm53, %v198, 0.0
  %201 = vadd.xlane.f32.xlu0 %v200
  %v202 = vpop.xlane.xlu0 %201
  %v203 = vsel %vm53, %v199, 0.0
  %204 = vadd.xlane.f32.xlu0 %v203
  %v205 = vpop.xlane.xlu0 %204
  %v206 = vmul.f32 %v202, %v193
  %v207 = vmul.f32 %v205, %v193
  %v208 = vadd.f32 %v206, 1e-05
  %v209 = vadd.f32 %v207, 1e-05
  %v210 = vrsqrt.pop %v208
  %v211 = vrsqrt.pop %v209
  %v212 = vmul.f32 %v196, %v210
  %v213 = vmul.f32 %v197, %v211
  %v214 = vld [vmem:[%s5] sm:$0x1]
  %v216 = vlaneseq
  %v217 = vshrl.u32 %v216, 7
  %v218 = vsub.s32 0, %v217
  %v219 = vrot.slane %v214, %v218
  %v221 = vmul.f32 %v212, %v219
  %v222 = vmul.f32 %v213, %v219
  %v223 = vld [vmem:[%s6] sm:$0x1]
  %v225 = vlaneseq
  %v226 = vshrl.u32 %v225, 7
  %v227 = vsub.s32 0, %v226
  %v228 = vrot.slane %v223, %v227
  %v230 = vadd.f32 %v221, %v228
  %v231 = vadd.f32 %v222, %v228
  %232 = vst.msk [vmem:[%s7] sm:$0xff] %vm53, %v230
  %233 = vst.msk [vmem:[%s7 + $0x8] sm:$0xff] %vm53, %v231
  // Predicated region
  $region30: #{transformer_forward.16} parent=0 // pred_check
    _
  $region31: #{transformer_forward.16} parent=0 // pred_check_branch
    %235 = sbr.rel (0) target = $region33
  $region32: #{transformer_forward.16} parent=0 // pred_region
    _
  $region33: #{transformer_forward.16} parent=0 // pred_fallthru
    _
  // Predicated region
  $region34: #{transformer_forward.16} parent=0 // pred_check
    _
  $region35: #{transformer_forward.16} parent=0 // pred_check_branch
    %237 = sbr.rel (0) target = $region37
  $region36: #{transformer_forward.16} parent=0 // pred_region
    _
  $region37: #{transformer_forward.16} parent=0 // pred_fallthru
    _

// kernel: transformer_forward.22
$region0: #{transformer_forward.22}
  #allocation0 [shape = 'u32[]', space=smem, size = 0x4, offset = 0x4, fixed_abs, tag = 'smem constant byte address 0x4 - core index']
  #allocation1 [shape = 'u32[144,128]{1,0:T(1,128)}', space=vmem, size = 0x12000, scoped, tag = 'internal scratch']
  #allocation2 [shape = 'f32[2,64]{1,0:T(2,128)}', space=vmem, size = 0x400, scoped, tag = 'scratch operand']
  %s0 = inlined_call_operand.vmem [shape: f32[2,256], index: 0, kind: input, shape index: {}]
  %s1 = inlined_call_operand.vmem [shape: bf16[256,64], index: 1, kind: input, shape index: {}]
  %s2 = inlined_call_operand.vmem [shape: f32[1,64], index: 2, kind: input, shape index: {}]
  %s3 = inlined_call_operand.vmem [shape: f32[2,64], index: 3, kind: output, shape index: {}]
  %s4 = sld [smem:[#allocation0]]
  $region30: #{transformer_forward.22} parent=0
    _
  %s6 = ssub.s32 1, %s4
  %s7 = scalar_select 0, %s6, %s4
  // Predicated region
  $region2: #{transformer_forward.22} parent=0 // pred_check
    _
  $region3: #{transformer_forward.22} parent=0 // pred_check_branch
    %9 = sbr.rel (0) target = $region5
  $region4: #{transformer_forward.22} parent=0 // pred_region
    _
  $region5: #{transformer_forward.22} parent=0 // pred_fallthru
    _
  // Predicated region
  $region6: #{transformer_forward.22} parent=0 // pred_check
    _
  $region7: #{transformer_forward.22} parent=0 // pred_check_branch
    %11 = sbr.rel (0) target = $region9
  $region8: #{transformer_forward.22} parent=0 // pred_region
    _
  $region9: #{transformer_forward.22} parent=0 // pred_fallthru
    _
  // Predicated region
  $region10: #{transformer_forward.22} parent=0 // pred_check
    _
  $region11: #{transformer_forward.22} parent=0 // pred_check_branch
    %13 = sbr.rel (0) target = $region13
  $region12: #{transformer_forward.22} parent=0 // pred_region
    _
  $region13: #{transformer_forward.22} parent=0 // pred_fallthru
    _
  %p15 = scmp.eq.s32.totalorder 0, 0
  // Predicated region
  $region14: #{transformer_forward.22} parent=0 // pred_check
    %p16 = pneg %p15
  $region15: #{transformer_forward.22} parent=0 // pred_check_branch
    %18 = sbr.rel (%p16) target = $region17
  $region16: #{transformer_forward.22} parent=0 // pred_region
    %vm19 = vcmask 517120
    %20 = vst.msk [vmem:[#allocation2] sm:$0x3] %vm19, 0.0
  $region17: #{transformer_forward.22} parent=0 // pred_fallthru
    _
  %v21 = vld [vmem:[#allocation2] sm:$0x3]
  %v22 = vld [vmem:[%s0] sm:$0xf]
  %v25 = vunpack.c.l.s4 1983009808
  %v26 = vunpack.c.0.s8 %v25
  %v27 = vlaneseq
  %v28 = vshrl.u32 %v27, 7
  %v29 = vsub.s32 %v26, %v28
  %v30 = vrot.slane %v22, %v29
  %v31 = vcombine.high %v30, %v30
  %v34 = vpack.c.bf16 %v30, %v30
  %v35 = vpack.c.bf16 %v31, %v31
  %v36 = vld [vmem:[%s1] sm:$0xf]
  %v37 = vld [vmem:[%s1 + $0x4] sm:$0xf]
  %v38 = vld [vmem:[%s1 + $0x8] sm:$0xf]
  %v39 = vld [vmem:[%s1 + $0xc] sm:$0xf]
  %v40 = vld [vmem:[%s1 + $0x10] sm:$0xf]
  %v41 = vld [vmem:[%s1 + $0x14] sm:$0xf]
  %v42 = vld [vmem:[%s1 + $0x18] sm:$0xf]
  %v43 = vld [vmem:[%s1 + $0x1c] sm:$0xf]
  %v44 = vld [vmem:[%s1 + $0x20] sm:$0xf]
  %v45 = vld [vmem:[%s1 + $0x24] sm:$0xf]
  %v46 = vld [vmem:[%s1 + $0x28] sm:$0xf]
  %v47 = vld [vmem:[%s1 + $0x2c] sm:$0xf]
  %v48 = vld [vmem:[%s1 + $0x30] sm:$0xf]
  %v49 = vld [vmem:[%s1 + $0x34] sm:$0xf]
  %v50 = vld [vmem:[%s1 + $0x38] sm:$0xf]
  %v51 = vld [vmem:[%s1 + $0x3c] sm:$0xf]
  %v52 = vld [vmem:[%s1 + $0x40] sm:$0xf]
  %v53 = vld [vmem:[%s1 + $0x44] sm:$0xf]
  %v54 = vld [vmem:[%s1 + $0x48] sm:$0xf]
  %v55 = vld [vmem:[%s1 + $0x4c] sm:$0xf]
  %v56 = vld [vmem:[%s1 + $0x50] sm:$0xf]
  %v57 = vld [vmem:[%s1 + $0x54] sm:$0xf]
  %v58 = vld [vmem:[%s1 + $0x58] sm:$0xf]
  %v59 = vld [vmem:[%s1 + $0x5c] sm:$0xf]
  %v60 = vld [vmem:[%s1 + $0x60] sm:$0xf]
  %v61 = vld [vmem:[%s1 + $0x64] sm:$0xf]
  %v62 = vld [vmem:[%s1 + $0x68] sm:$0xf]
  %v63 = vld [vmem:[%s1 + $0x6c] sm:$0xf]
  %v64 = vld [vmem:[%s1 + $0x70] sm:$0xf]
  %v65 = vld [vmem:[%s1 + $0x74] sm:$0xf]
  %v66 = vld [vmem:[%s1 + $0x78] sm:$0xf]
  %v67 = vld [vmem:[%s1 + $0x7c] sm:$0xf]
  %v100 = vunpack.c.l.b16 %v36
  %v101 = vunpack.c.l.b16 %v37
  %v102 = vunpack.c.l.b16 %v38
  %v103 = vunpack.c.l.b16 %v39
  %v104 = vunpack.c.l.b16 %v40
  %v105 = vunpack.c.l.b16 %v41
  %v106 = vunpack.c.l.b16 %v42
  %v107 = vunpack.c.l.b16 %v43
  %v108 = vunpack.c.l.b16 %v44
  %v109 = vunpack.c.l.b16 %v45
  %v110 = vunpack.c.l.b16 %v46
  %v111 = vunpack.c.l.b16 %v47
  %v112 = vunpack.c.l.b16 %v48
  %v113 = vunpack.c.l.b16 %v49
  %v114 = vunpack.c.l.b16 %v50
  %v115 = vunpack.c.l.b16 %v51
  %v116 = vunpack.c.l.b16 %v52
  %v117 = vunpack.c.l.b16 %v53
  %v118 = vunpack.c.l.b16 %v54
  %v119 = vunpack.c.l.b16 %v55
  %v120 = vunpack.c.l.b16 %v56
  %v121 = vunpack.c.l.b16 %v57
  %v122 = vunpack.c.l.b16 %v58
  %v123 = vunpack.c.l.b16 %v59
  %v124 = vunpack.c.l.b16 %v60
  %v125 = vunpack.c.l.b16 %v61
  %v126 = vunpack.c.l.b16 %v62
  %v127 = vunpack.c.l.b16 %v63
  %v128 = vunpack.c.l.b16 %v64
  %v129 = vunpack.c.l.b16 %v65
  %v130 = vunpack.c.l.b16 %v66
  %v131 = vunpack.c.l.b16 %v67
  %v132 = vpack.c.b16 %v101, %v100
  %v133 = vpack.c.b16 %v103, %v102
  %v134 = vpack.c.b16 %v105, %v104
  %v135 = vpack.c.b16 %v107, %v106
  %v136 = vpack.c.b16 %v109, %v108
  %v137 = vpack.c.b16 %v111, %v110
  %v138 = vpack.c.b16 %v113, %v112
  %v139 = vpack.c.b16 %v115, %v114
  %v140 = vpack.c.b16 %v117, %v116
  %v141 = vpack.c.b16 %v119, %v118
  %v142 = vpack.c.b16 %v121, %v120
  %v143 = vpack.c.b16 %v123, %v122
  %v144 = vpack.c.b16 %v125, %v124
  %v145 = vpack.c.b16 %v127, %v126
  %v146 = vpack.c.b16 %v129, %v128
  %v147 = vpack.c.b16 %v131, %v130
  %164 = vmatprep.subr.bf16.mxu0 0
  %165 = vmatpush1.bf16.msra.mxu0 %v132
  %166 = vmatprep.subr.bf16.mxu0 0
  %167 = vmatpush1.bf16.msra.mxu0 %v133
  %168 = vmatprep.subr.bf16.mxu0 0
  %169 = vmatpush1.bf16.msra.mxu0 %v134
  %170 = vmatprep.subr.bf16.mxu0 0
  %171 = vmatpush1.bf16.msra.mxu0 %v135
  %172 = vmatprep.subr.bf16.mxu0 0
  %173 = vmatpush1.bf16.msra.mxu0 %v136
  %174 = vmatprep.subr.bf16.mxu0 0
  %175 = vmatpush1.bf16.msra.mxu0 %v137
  %176 = vmatprep.subr.bf16.mxu0 0
  %177 = vmatpush1.bf16.msra.mxu0 %v138
  %178 = vmatprep.subr.bf16.mxu0 0
  %179 = vmatpush1.bf16.msra.mxu0 %v139
  %180 = vmatprep.subr.bf16.mxu0 0
  %181 = vmatpush1.bf16.msra.mxu0 %v140
  %182 = vmatprep.subr.bf16.mxu0 0
  %183 = vmatpush1.bf16.msra.mxu0 %v141
  %184 = vmatprep.subr.bf16.mxu0 0
  %185 = vmatpush1.bf16.msra.mxu0 %v142
  %186 = vmatprep.subr.bf16.mxu0 0
  %187 = vmatpush1.bf16.msra.mxu0 %v143
  %188 = vmatprep.subr.bf16.mxu0 0
  %189 = vmatpush1.bf16.msra.mxu0 %v144
  %190 = vmatprep.subr.bf16.mxu0 0
  %191 = vmatpush1.bf16.msra.mxu0 %v145
  %192 = vmatprep.subr.bf16.mxu0 0
  %193 = vmatpush1.bf16.msra.mxu0 %v146
  %194 = vmatprep.subr.bf16.mxu0 0
  %195 = vmatpush1.bf16.msra.mxu0 %v147
  %196 = vmatprep.mubr.bf16.mxu0 %v35
  %197 = vmatmul.mubr.bf16.gmra.mrb[0].mxu0 %v34
  %v198 = vpop.f32.mrb[0].mxu0
  %v199 = vadd.f32 0.0, %v198
  %v200 = vpop.f32.mrb[0].mxu0
  %v201 = vpop.f32.mrb[0].mxu0
  %v202 = vpop.f32.mrb[0].mxu0
  %203 = vdwg.mxu0
  %v204 = vadd.f32 %v21, %v199
  %vm205 = vcmask 517120
  %206 = vst.msk [vmem:[#allocation2] sm:$0x3] %vm205, %v204
  // Predicated region
  $region18: #{transformer_forward.22} parent=0 // pred_check
    %p207 = pneg %p15
  $region19: #{transformer_forward.22} parent=0 // pred_check_branch
    %209 = sbr.rel (%p207) target = $region21
  $region20: #{transformer_forward.22} parent=0 // pred_region
    %v210 = vld [vmem:[#allocation2] sm:$0x3]
    %v211 = vld [vmem:[%s2] sm:$0x1]
    %v213 = vlaneseq
    %v214 = vshrl.u32 %v213, 7
    %v215 = vsub.s32 0, %v214
    %v216 = vrot.slane %v211, %v215
    %v218 = vadd.f32 %v210, %v216
    %v219 = vmax.f32 %v218, 0.0
    %220 = vst.msk [vmem:[%s3] sm:$0x3] %vm205, %v219
  $region21: #{transformer_forward.22} parent=0 // pred_fallthru
    _
  // Predicated region
  $region22: #{transformer_forward.22} parent=0 // pred_check
    _
  $region23: #{transformer_forward.22} parent=0 // pred_check_branch
    %222 = sbr.rel (0) target = $region25
  $region24: #{transformer_forward.22} parent=0 // pred_region
    _
  $region25: #{transformer_forward.22} parent=0 // pred_fallthru
    _
  // Predicated region
  $region26: #{transformer_forward.22} parent=0 // pred_check
    _
  $region27: #{transformer_forward.22} parent=0 // pred_check_branch
    %224 = sbr.rel (0) target = $region29
  $region28: #{transformer_forward.22} parent=0 // pred_region
    _
  $region29: #{transformer_forward.22} parent=0 // pred_fallthru
    _

// kernel: transformer_forward.23
$region0: #{transformer_forward.23}
  #allocation0 [shape = 'u32[]', space=smem, size = 0x4, offset = 0x4, fixed_abs, tag = 'smem constant byte address 0x4 - core index']
  #allocation1 [shape = 'u32[144,128]{1,0:T(1,128)}', space=vmem, size = 0x12000, scoped, tag = 'internal scratch']
  #allocation2 [shape = 'f32[2,2]{1,0:T(2,128)}', space=vmem, size = 0x400, scoped, tag = 'scratch operand']
  %s0 = inlined_call_operand.vmem [shape: f32[2,64], index: 0, kind: input, shape index: {}]
  %s1 = inlined_call_operand.vmem [shape: bf16[64,2], index: 1, kind: input, shape index: {}]
  %s2 = inlined_call_operand.vmem [shape: f32[1,2], index: 2, kind: input, shape index: {}]
  %s3 = inlined_call_operand.hbm [shape: f32[2,2], index: 3, kind: output, shape index: {}]
  %s4 = sld [smem:[#allocation0]]
  $region30: #{transformer_forward.23} parent=0
    _
  %s6 = ssub.s32 1, %s4
  %s7 = scalar_select 0, %s6, %s4
  $region1: #{transformer_forward.23} parent=0
    #allocation3 [shape = 'u8[1024]{0}', space=vmem, size = 0x400, scoped, tag = 'output window, operand 0, single buffered']
    #allocation4 [shape = 's32[1]{0}', space=sflag, size = 0x4, scoped, tag = 'scoped memory for transformer_forward.23']
    %8 = vsyncpa [#allocation4], 0
    // Predicated region
    $region2: #{transformer_forward.23} parent=1 // pred_check
      _
    $region3: #{transformer_forward.23} parent=1 // pred_check_branch
      %10 = sbr.rel (0) target = $region5
    $region4: #{transformer_forward.23} parent=1 // pred_region
      _
    $region5: #{transformer_forward.23} parent=1 // pred_fallthru
      _
    // Predicated region
    $region6: #{transformer_forward.23} parent=1 // pred_check
      _
    $region7: #{transformer_forward.23} parent=1 // pred_check_branch
      %12 = sbr.rel (0) target = $region9
    $region8: #{transformer_forward.23} parent=1 // pred_region
      _
    $region9: #{transformer_forward.23} parent=1 // pred_fallthru
      _
    // Predicated region
    $region10: #{transformer_forward.23} parent=1 // pred_check
      _
    $region11: #{transformer_forward.23} parent=1 // pred_check_branch
      %14 = sbr.rel (0) target = $region13
    $region12: #{transformer_forward.23} parent=1 // pred_region
      _
    $region13: #{transformer_forward.23} parent=1 // pred_fallthru
      _
    %p16 = scmp.eq.s32.totalorder 0, 0
    // Predicated region
    $region14: #{transformer_forward.23} parent=1 // pred_check
      %p17 = pneg %p16
    $region15: #{transformer_forward.23} parent=1 // pred_check_branch
      %19 = sbr.rel (%p17) target = $region17
    $region16: #{transformer_forward.23} parent=1 // pred_region
      %vm20 = vcmask 9216
      %21 = vst.msk [vmem:[#allocation2] sm:$0x3] %vm20, 0.0
    $region17: #{transformer_forward.23} parent=1 // pred_fallthru
      _
    %v22 = vld [vmem:[#allocation2] sm:$0x3]
    %v23 = vld [vmem:[%s0] sm:$0x3]
    %v24 = vpack.c.bf16 %v23, %v23
    %v25 = vld [vmem:[%s1] sm:$0xf]
    %v26 = vld [vmem:[%s1 + $0x4] sm:$0xf]
    %v27 = vld [vmem:[%s1 + $0x8] sm:$0xf]
    %v28 = vld [vmem:[%s1 + $0xc] sm:$0xf]
    %v29 = vld [vmem:[%s1 + $0x10] sm:$0xf]
    %v30 = vld [vmem:[%s1 + $0x14] sm:$0xf]
    %v31 = vld [vmem:[%s1 + $0x18] sm:$0xf]
    %v32 = vld [vmem:[%s1 + $0x1c] sm:$0xf]
    %v41 = vunpack.c.l.b16 %v25
    %v42 = vunpack.c.l.b16 %v26
    %v43 = vunpack.c.l.b16 %v27
    %v44 = vunpack.c.l.b16 %v28
    %v45 = vunpack.c.l.b16 %v29
    %v46 = vunpack.c.l.b16 %v30
    %v47 = vunpack.c.l.b16 %v31
    %v48 = vunpack.c.l.b16 %v32
    %v49 = vpack.c.b16 %v42, %v41
    %v50 = vpack.c.b16 %v44, %v43
    %v51 = vpack.c.b16 %v46, %v45
    %v52 = vpack.c.b16 %v48, %v47
    %vm57 = vcmask 523264
    %v59 = vsel %vm57, %v24, 0
    %61 = vmatprep.subr.bf16.mxu0 0
    %62 = vmatpush1.bf16.msra.mxu0 %v49
    %63 = vmatprep.subr.bf16.mxu0 0
    %64 = vmatpush1.bf16.msra.mxu0 %v50
    %65 = vmatprep.subr.bf16.mxu0 0
    %66 = vmatpush1.bf16.msra.mxu0 %v51
    %67 = vmatprep.subr.bf16.mxu0 0
    %68 = vmatpush1.bf16.msra.mxu0 %v52
    %69 = vmatprep.subr.bf16.mxu0 0
    %70 = vmatpush1.bf16.msra.mxu0 0
    %71 = vmatprep.subr.bf16.mxu0 0
    %72 = vmatpush1.bf16.msra.mxu0 0
    %73 = vmatprep.subr.bf16.mxu0 0
    %74 = vmatpush1.bf16.msra.mxu0 0
    %75 = vmatprep.subr.bf16.mxu0 0
    %76 = vmatpush1.bf16.msra.mxu0 0
    %77 = vmatprep.subr.bf16.mxu0 0
    %78 = vmatpush1.bf16.msra.mxu0 0
    %79 = vmatprep.subr.bf16.mxu0 0
    %80 = vmatpush1.bf16.msra.mxu0 0
    %81 = vmatprep.subr.bf16.mxu0 0
    %82 = vmatpush1.bf16.msra.mxu0 0
    %83 = vmatprep.subr.bf16.mxu0 0
    %84 = vmatpush1.bf16.msra.mxu0 0
    %85 = vmatprep.subr.bf16.mxu0 0
    %86 = vmatpush1.bf16.msra.mxu0 0
    %87 = vmatprep.subr.bf16.mxu0 0
    %88 = vmatpush1.bf16.msra.mxu0 0
    %89 = vmatprep.subr.bf16.mxu0 0
    %90 = vmatpush1.bf16.msra.mxu0 0
    %91 = vmatprep.subr.bf16.mxu0 0
    %92 = vmatpush1.bf16.msra.mxu0 0
    %93 = vmatprep.mubr.bf16.mxu0 0
    %94 = vmatmul.mubr.bf16.gmra.mrb[0].mxu0 %v59
    %v95 = vpop.f32.mrb[0].mxu0
    %v96 = vadd.f32 0.0, %v95
    %v97 = vpop.f32.mrb[0].mxu0
    %v98 = vpop.f32.mrb[0].mxu0
    %v99 = vpop.f32.mrb[0].mxu0
    %100 = vdwg.mxu0
    %v101 = vadd.f32 %v22, %v96
    %vm102 = vcmask 9216
    %103 = vst.msk [vmem:[#allocation2] sm:$0x3] %vm102, %v101
    // Predicated region
    $region18: #{transformer_forward.23} parent=1 // pred_check
      %p104 = pneg %p16
    $region19: #{transformer_forward.23} parent=1 // pred_check_branch
      %106 = sbr.rel (%p104) target = $region21
    $region20: #{transformer_forward.23} parent=1 // pred_region
      %v107 = vld [vmem:[#allocation2] sm:$0x3]
      %v108 = vld [vmem:[%s2] sm:$0x1]
      %v110 = vlaneseq
      %v111 = vshrl.u32 %v110, 7
      %v112 = vsub.s32 0, %v111
      %v113 = vrot.slane %v108, %v112
      %v115 = vadd.f32 %v107, %v113
      %116 = vst.msk [vmem:[#allocation3] sm:$0x3] %vm102, %v115
    $region21: #{transformer_forward.23} parent=1 // pred_fallthru
      _
    // Predicated region
    $region22: #{transformer_forward.23} parent=1 // pred_check
      _
    $region23: #{transformer_forward.23} parent=1 // pred_check_branch
      %118 = sbr.rel (0) target = $region25
    $region24: #{transformer_forward.23} parent=1 // pred_region
      %s120 = ssub.s32 32, 32
      %121 = vsyncadd [#allocation4], %s120
      %s123 = sshll.u32 [#allocation3], 4
      %s124 = int_to_ptr.vmem [resolvable:$true] %s123
      %126 = dma.vmem_to_hbm [thread:$0]  %s124, 32, %s3, [#allocation4]
    $region25: #{transformer_forward.23} parent=1 // pred_fallthru
      _
    // Predicated region
    $region26: #{transformer_forward.23} parent=1 // pred_check
      _
    $region27: #{transformer_forward.23} parent=1 // pred_check_branch
      %128 = sbr.rel (0) target = $region29
    $region28: #{transformer_forward.23} parent=1 // pred_region
      %129 = dma.done [#allocation4], 32
    $region29: #{transformer_forward.23} parent=1 // pred_fallthru
      _
    %130 = vsyncpa [#allocation4], 1

</llo_original>
